<compile_context>
chip_gen: v7x
topology: tpu7x:2x2x1
jax: 0.10.0
libtpu: 0.0.40
codegen_flags: <defaults>
</compile_context>

<pallas_src>
import math

import jax
import jax.numpy as jnp
from jax import lax
from jax.experimental import pallas as pl
from jax.experimental.pallas import tpu as pltpu


# ----------------------------------------------------------------------------
# Tiling helpers
# ----------------------------------------------------------------------------
def _tile(dim, target, align):
    """Largest block <= target that divides dim and is a multiple of `align`;
    falls back to the full dim (which always satisfies the (8,128) rule)."""
    if dim <= target:
        return dim
    t = (target // align) * align
    while t >= align:
        if dim % t == 0:
            return t
        t -= align
    return dim


def _pick_head_group(H, T, D, budget_bytes=8 * 1024 * 1024):
    """Heads processed per attention grid step.  Must divide H and keep the
    block shapes (8,128)-legal: hg == H, or hg % 8 == 0 and (hg*D) % 128 == 0."""
    valid = [d for d in range(1, H + 1)
             if H % d == 0 and (d == H or (d % 8 == 0 and (d * D) % 128 == 0))]
    fitting = [d for d in valid if d * T * T * 4 <= budget_bytes]
    return max(fitting) if fitting else min(valid)


# ----------------------------------------------------------------------------
# Tiled linear: y = x @ W^T  with W in PyTorch (out, in) layout
# ----------------------------------------------------------------------------
def _linear_kernel(x_ref, w_ref, o_ref, acc_ref):
    @pl.when(pl.program_id(2) == 0)
    def _():
        acc_ref[...] = jnp.zeros_like(acc_ref)

    # Contract K of x (axis 1) with K of w (axis 1): x @ w.T, no transpose op.
    acc_ref[...] += lax.dot_general(
        x_ref[...], w_ref[...],
        dimension_numbers=(((1,), (1,)), ((), ())),
        preferred_element_type=jnp.float32,
    )

    @pl.when(pl.program_id(2) == pl.num_programs(2) - 1)
    def _():
        o_ref[...] = acc_ref[...].astype(o_ref.dtype)


def pallas_linear(x, w, *, tm=256, tn=256, tk=512):
    """x: (M, K), w: (N, K)  ->  (M, N) == x @ w.T"""
    M, K = x.shape
    N, K2 = w.shape
    assert K == K2

    tm = _tile(M, tm, 8)      # second-minor dims: 8-aligned
    tn = _tile(N, tn, 128)    # output lane dim: 128-aligned when tiled
    tk = _tile(K, tk, 128)    # contraction lane dim: 128-aligned when tiled

    grid = (M // tm, N // tn, K // tk)

    in_bytes = x.dtype.itemsize
    # double-buffered inputs + double-buffered output + f32 accumulator
    vmem_need = (2 * (tm * tk + tn * tk) * in_bytes
                 + 2 * tm * tn * in_bytes + tm * tn * 4)
    vmem_limit = int(min(max(2 * vmem_need, 16 * 1024 * 1024), 48 * 1024 * 1024))

    cost = pl.CostEstimate(
        flops=2 * M * N * K,
        transcendentals=0,
        bytes_accessed=(M * K + N * K + M * N) * in_bytes,
    )

    return pl.pallas_call(
        _linear_kernel,
        out_shape=jax.ShapeDtypeStruct((M, N), x.dtype),
        grid=grid,
        in_specs=[
            pl.BlockSpec((tm, tk), lambda i, j, k: (i, k)),
            pl.BlockSpec((tn, tk), lambda i, j, k: (j, k)),
        ],
        out_specs=pl.BlockSpec((tm, tn), lambda i, j, k: (i, j)),
        scratch_shapes=[pltpu.VMEM((tm, tn), jnp.float32)],
        compiler_params=pltpu.CompilerParams(
            dimension_semantics=("parallel", "parallel", "arbitrary"),
            vmem_limit_bytes=vmem_limit,
        ),
        cost_estimate=cost,
    )(x, w)


# ----------------------------------------------------------------------------
# Attention with fused rotary.  One grid step = (batch, head-group).
# qkv: (B, T, 3, H, D) packed;  output: (B, T, H*D)  (== x.view(B, T, -1))
# ----------------------------------------------------------------------------
def _attn_kernel(qkv_ref, cos_ref, sin_ref, o_ref):
    # qkv_ref block: (1, T, 3, hg, D); cos/sin: (T, D//2); o_ref: (1, T, hg*D)
    _, T, _, hg, D = qkv_ref.shape
    d2 = D // 2
    scale = 1.0 / math.sqrt(D)

    cos = cos_ref[...]          # (T, D//2) f32
    sin = sin_ref[...]

    def rotate_half(x):         # GPT-NeoX rotate-half on a (T, D) tile
        x1, x2 = x[:, :d2], x[:, d2:]
        return jnp.concatenate([x1 * cos - x2 * sin, x2 * cos + x1 * sin], axis=-1)

    outs = []
    # Static unroll over the heads of this group: all heads share one grid
    # step (amortizes per-step overhead) and one lane-dense output store.
    for h in range(hg):
        q = rotate_half(qkv_ref[0, :, 0, h, :].astype(jnp.float32)) * scale
        k = rotate_half(qkv_ref[0, :, 1, h, :].astype(jnp.float32))
        v = qkv_ref[0, :, 2, h, :].astype(jnp.float32)

        # scores: contract D of q with D of k (no explicit k.T)
        s = lax.dot_general(q, k, (((1,), (1,)), ((), ())),
                            preferred_element_type=jnp.float32)        # (T, T)
        m = jnp.max(s, axis=-1, keepdims=True)
        p = jnp.exp(s - m)                                             # f32 softmax
        l = jnp.sum(p, axis=-1, keepdims=True)
        o = jnp.dot(p, v, preferred_element_type=jnp.float32)          # (T, D)
        outs.append(o * pl.reciprocal(l, approx=True))

    # (T, hg*D): head-concatenated, lane-dense single store.
    o_ref[0] = jnp.concatenate(outs, axis=-1).astype(o_ref.dtype)


def pallas_attention(qkv, cos, sin):
    B, T, _, H, D = qkv.shape
    C = H * D
    hg = _pick_head_group(H, T, D)
    grid = (B, H // hg)

    cost = pl.CostEstimate(
        flops=4 * B * H * T * T * D,
        transcendentals=B * H * T * T,
        bytes_accessed=(qkv.size + B * T * C) * qkv.dtype.itemsize
        + 2 * cos.size * cos.dtype.itemsize,
    )

    return pl.pallas_call(
        _attn_kernel,
        out_shape=jax.ShapeDtypeStruct((B, T, C), qkv.dtype),
        grid=grid,
        in_specs=[
            pl.BlockSpec((1, T, 3, hg, D), lambda b, h: (b, 0, 0, h, 0)),
            pl.BlockSpec((T, D // 2), lambda b, h: (0, 0)),
            pl.BlockSpec((T, D // 2), lambda b, h: (0, 0)),
        ],
        out_specs=pl.BlockSpec((1, T, hg * D), lambda b, h: (b, 0, h)),
        compiler_params=pltpu.CompilerParams(
            dimension_semantics=("parallel", "parallel"),
        ),
        cost_estimate=cost,
    )(qkv, cos, sin)


# ----------------------------------------------------------------------------
# Rotary tables (GPT-NeoX / flash-attn convention: base 10000, rotate-half)
# ----------------------------------------------------------------------------
def rotary_cos_sin(T, D, base=10000.0):
    inv_freq = 1.0 / (base ** (jnp.arange(0, D, 2, dtype=jnp.float32) / D))
    t = jnp.arange(T, dtype=jnp.float32)
    freqs = jnp.outer(t, inv_freq)                     # (T, D//2)
    return jnp.cos(freqs), jnp.sin(freqs)


# ----------------------------------------------------------------------------
# MHA forward
# ----------------------------------------------------------------------------
def mha_forward(x, xmel, w_qkv, w_out, nheads):
    # xmel is unused in the reference forward.
    del xmel
    B, T, C = x.shape
    D = C // nheads

    # qkv projection (weight stays (out, in); no .T copy)
    qkv = pallas_linear(x.reshape(B * T, C), w_qkv)            # (B*T, 3C)
    qkv = qkv.reshape(B, T, 3, nheads, D)                      # packed view

    # rotary is fused into the attention kernel; attention output is already
    # (B, T, C) in head-concatenated order -> no transposes in the wrapper.
    cos, sin = rotary_cos_sin(T, D)
    o = pallas_attention(qkv, cos, sin)                        # (B, T, C)

    # output projection (resid dropout is identity at eval)
    out = pallas_linear(o.reshape(B * T, C), w_out)            # (B*T, C)
    return out.reshape(B, T, C)


if __name__ == "__main__":
    # Small shapes consistent with the module: dim divisible by nheads.
    B, T, DIM, NHEADS = 2, 16, 32, 4
    HEAD_DIM = DIM // NHEADS

    key = jax.random.PRNGKey(0)
    k_x, k_mel, k_qkv, k_out = jax.random.split(key, 4)

    x = jax.random.normal(k_x, (B, T, DIM), dtype=jnp.float32)
    xmel = jax.random.normal(k_mel, (B, T, DIM), dtype=jnp.float32)  # unused

    # PyTorch Linear weight shapes: (out, in)
    w_qkv = jax.random.normal(k_qkv, (3 * DIM, DIM), dtype=jnp.float32) * 0.02
    w_out = jax.random.normal(k_out, (DIM, DIM), dtype=jnp.float32) * 0.02

    fwd = jax.jit(mha_forward, static_argnums=(4,))
    y = jax.block_until_ready(fwd(x, xmel, w_qkv, w_out, NHEADS))
    assert y.shape == (B, T, DIM)

    # quick sanity check against a pure-JAX reference
    def ref_forward(x):
        qkv = (x.reshape(B * T, DIM) @ w_qkv.T).reshape(B, T, 3, NHEADS, HEAD_DIM)
        cos, sin = rotary_cos_sin(T, HEAD_DIM)

        def rot(a):
            d2 = HEAD_DIM // 2
            a1, a2 = a[..., :d2], a[..., d2:]
            c = cos[None, :, None, :]
            s = sin[None, :, None, :]
            return jnp.concatenate([a1 * c - a2 * s, a2 * c + a1 * s], axis=-1)

        q, k, v = rot(qkv[:, :, 0]), rot(qkv[:, :, 1]), qkv[:, :, 2]
        q, k, v = (jnp.transpose(a, (0, 2, 1, 3)) for a in (q, k, v))
        s = jnp.einsum("bhqd,bhkd->bhqk", q, k) / math.sqrt(HEAD_DIM)
        p = jax.nn.softmax(s, axis=-1)
        o = jnp.einsum("bhqk,bhkd->bhqd", p, v)
        o = jnp.transpose(o, (0, 2, 1, 3)).reshape(B * T, DIM)
        return (o @ w_out.T).reshape(B, T, DIM)

    y_ref = ref_forward(x)
    err = float(jnp.max(jnp.abs(y - y_ref)))
    assert jnp.allclose(y, y_ref, atol=2e-3, rtol=2e-2), err

    print("KERNEL_OK")
</pallas_src>

<mosaic_0001>
module attributes {stable_mosaic.version = 11 : i64} {
  func.func @_linear_kernel(%arg0: i32, %arg1: i32, %arg2: i32, %arg3: memref<32x32xf32, #tpu.memory_space<vmem>>, %arg4: memref<96x32xf32, #tpu.memory_space<vmem>>, %arg5: memref<32x96xf32, #tpu.memory_space<vmem>>, %arg6: memref<32x96xf32, #tpu.memory_space<vmem>>) attributes {dimension_semantics = [#tpu.dimension_semantics<parallel>, #tpu.dimension_semantics<parallel>, #tpu.dimension_semantics<arbitrary>], iteration_bounds = array<i64: 1, 1, 1>, scalar_prefetch = 0 : i64, scratch_operands = 1 : i64, tpu.core_type = #tpu.core_type<tc>, window_params = [{transform_indices = @transform_0, window_bounds = array<i64: 32, 32>}, {transform_indices = @transform_1, window_bounds = array<i64: 96, 32>}, {transform_indices = @transform_2, window_bounds = array<i64: 32, 96>}]} {
    %c0_i32 = arith.constant 0 : i32
    %0 = arith.cmpi eq, %arg2, %c0_i32 : i32
    %1 = arith.extui %0 : i1 to i32
    %c0_i32_0 = arith.constant 0 : i32
    %2 = arith.cmpi ne, %1, %c0_i32_0 : i32
    scf.if %2 {
      %cst_10 = arith.constant 0.000000e+00 : f32
      %12 = vector.broadcast %cst_10 : f32 to vector<32x96xf32>
      %c0_11 = arith.constant 0 : index
      %c0_12 = arith.constant 0 : index
      %13 = vector.load %arg6[%c0_11, %c0_12] : memref<32x96xf32, #tpu.memory_space<vmem>>, vector<32x96xf32>
      tpu.vector_store %arg6[%c0_11, %c0_12], %12 {strides = array<i32>} : memref<32x96xf32, #tpu.memory_space<vmem>>, vector<32x96xf32>,
    } else {
    }
    %c0 = arith.constant 0 : index
    %c0_1 = arith.constant 0 : index
    %3 = vector.load %arg6[%c0, %c0_1] : memref<32x96xf32, #tpu.memory_space<vmem>>, vector<32x96xf32>
    %c0_2 = arith.constant 0 : index
    %c0_3 = arith.constant 0 : index
    %4 = vector.load %arg3[%c0_2, %c0_3] : memref<32x32xf32, #tpu.memory_space<vmem>>, vector<32x32xf32>
    %c0_4 = arith.constant 0 : index
    %c0_5 = arith.constant 0 : index
    %5 = vector.load %arg4[%c0_4, %c0_5] : memref<96x32xf32, #tpu.memory_space<vmem>>, vector<96x32xf32>
    %cst = arith.constant dense<0.000000e+00> : vector<32x96xf32>
    %6 = tpu.matmul %4, %5, %cst {dimension_numbers = #tpu.dot_dimension_numbers<[1], [1], [0], [0], [0, 0, 1, 0], [], []>} : vector<32x32xf32>, vector<96x32xf32>, vector<32x96xf32> -> vector<32x96xf32>
    %7 = arith.addf %3, %6 : vector<32x96xf32>
    %c0_6 = arith.constant 0 : index
    %c0_7 = arith.constant 0 : index
    %8 = vector.load %arg6[%c0_6, %c0_7] : memref<32x96xf32, #tpu.memory_space<vmem>>, vector<32x96xf32>
    tpu.vector_store %arg6[%c0_6, %c0_7], %7 {strides = array<i32>} : memref<32x96xf32, #tpu.memory_space<vmem>>, vector<32x96xf32>,
    %c0_i32_8 = arith.constant 0 : i32
    %9 = arith.cmpi eq, %arg2, %c0_i32_8 : i32
    %10 = arith.extui %9 : i1 to i32
    %c0_i32_9 = arith.constant 0 : i32
    %11 = arith.cmpi ne, %10, %c0_i32_9 : i32
    scf.if %11 {
      %c0_10 = arith.constant 0 : index
      %c0_11 = arith.constant 0 : index
      %12 = vector.load %arg6[%c0_10, %c0_11] : memref<32x96xf32, #tpu.memory_space<vmem>>, vector<32x96xf32>
      %c0_12 = arith.constant 0 : index
      %c0_13 = arith.constant 0 : index
      %13 = vector.load %arg5[%c0_12, %c0_13] : memref<32x96xf32, #tpu.memory_space<vmem>>, vector<32x96xf32>
      tpu.vector_store %arg5[%c0_12, %c0_13], %12 {strides = array<i32>} : memref<32x96xf32, #tpu.memory_space<vmem>>, vector<32x96xf32>,
    } else {
    }
    return
  }
  func.func @transform_0(%arg0: i32, %arg1: i32, %arg2: i32) -> (i32, i32) {
    %c0_i32 = arith.constant 0 : i32
    return %arg0, %arg2 : i32, i32
  }
  func.func @transform_1(%arg0: i32, %arg1: i32, %arg2: i32) -> (i32, i32) {
    %c0_i32 = arith.constant 0 : i32
    return %arg1, %arg2 : i32, i32
  }
  func.func @transform_2(%arg0: i32, %arg1: i32, %arg2: i32) -> (i32, i32) {
    %c0_i32 = arith.constant 0 : i32
    return %arg0, %arg1 : i32, i32
  }
}

module attributes {stable_mosaic.version = 11 : i64} {
  func.func @_linear_kernel(%arg0: i32, %arg1: i32, %arg2: i32, %arg3: memref<32x32xf32, #tpu.memory_space<vmem>>, %arg4: memref<32x32xf32, #tpu.memory_space<vmem>>, %arg5: memref<32x32xf32, #tpu.memory_space<vmem>>, %arg6: memref<32x32xf32, #tpu.memory_space<vmem>>) attributes {dimension_semantics = [#tpu.dimension_semantics<parallel>, #tpu.dimension_semantics<parallel>, #tpu.dimension_semantics<arbitrary>], iteration_bounds = array<i64: 1, 1, 1>, scalar_prefetch = 0 : i64, scratch_operands = 1 : i64, tpu.core_type = #tpu.core_type<tc>, window_params = [{transform_indices = @transform_0, window_bounds = array<i64: 32, 32>}, {transform_indices = @transform_1, window_bounds = array<i64: 32, 32>}, {transform_indices = @transform_2, window_bounds = array<i64: 32, 32>}]} {
    %c0_i32 = arith.constant 0 : i32
    %0 = arith.cmpi eq, %arg2, %c0_i32 : i32
    %1 = arith.extui %0 : i1 to i32
    %c0_i32_0 = arith.constant 0 : i32
    %2 = arith.cmpi ne, %1, %c0_i32_0 : i32
    scf.if %2 {
      %cst_10 = arith.constant 0.000000e+00 : f32
      %12 = vector.broadcast %cst_10 : f32 to vector<32x32xf32>
      %c0_11 = arith.constant 0 : index
      %c0_12 = arith.constant 0 : index
      %13 = vector.load %arg6[%c0_11, %c0_12] : memref<32x32xf32, #tpu.memory_space<vmem>>, vector<32x32xf32>
      tpu.vector_store %arg6[%c0_11, %c0_12], %12 {strides = array<i32>} : memref<32x32xf32, #tpu.memory_space<vmem>>, vector<32x32xf32>,
    } else {
    }
    %c0 = arith.constant 0 : index
    %c0_1 = arith.constant 0 : index
    %3 = vector.load %arg6[%c0, %c0_1] : memref<32x32xf32, #tpu.memory_space<vmem>>, vector<32x32xf32>
    %c0_2 = arith.constant 0 : index
    %c0_3 = arith.constant 0 : index
    %4 = vector.load %arg3[%c0_2, %c0_3] : memref<32x32xf32, #tpu.memory_space<vmem>>, vector<32x32xf32>
    %c0_4 = arith.constant 0 : index
    %c0_5 = arith.constant 0 : index
    %5 = vector.load %arg4[%c0_4, %c0_5] : memref<32x32xf32, #tpu.memory_space<vmem>>, vector<32x32xf32>
    %cst = arith.constant dense<0.000000e+00> : vector<32x32xf32>
    %6 = tpu.matmul %4, %5, %cst {dimension_numbers = #tpu.dot_dimension_numbers<[1], [1], [0], [0], [0, 0, 1, 0], [], []>} : vector<32x32xf32>, vector<32x32xf32>, vector<32x32xf32> -> vector<32x32xf32>
    %7 = arith.addf %3, %6 : vector<32x32xf32>
    %c0_6 = arith.constant 0 : index
    %c0_7 = arith.constant 0 : index
    %8 = vector.load %arg6[%c0_6, %c0_7] : memref<32x32xf32, #tpu.memory_space<vmem>>, vector<32x32xf32>
    tpu.vector_store %arg6[%c0_6, %c0_7], %7 {strides = array<i32>} : memref<32x32xf32, #tpu.memory_space<vmem>>, vector<32x32xf32>,
    %c0_i32_8 = arith.constant 0 : i32
    %9 = arith.cmpi eq, %arg2, %c0_i32_8 : i32
    %10 = arith.extui %9 : i1 to i32
    %c0_i32_9 = arith.constant 0 : i32
    %11 = arith.cmpi ne, %10, %c0_i32_9 : i32
    scf.if %11 {
      %c0_10 = arith.constant 0 : index
      %c0_11 = arith.constant 0 : index
      %12 = vector.load %arg6[%c0_10, %c0_11] : memref<32x32xf32, #tpu.memory_space<vmem>>, vector<32x32xf32>
      %c0_12 = arith.constant 0 : index
      %c0_13 = arith.constant 0 : index
      %13 = vector.load %arg5[%c0_12, %c0_13] : memref<32x32xf32, #tpu.memory_space<vmem>>, vector<32x32xf32>
      tpu.vector_store %arg5[%c0_12, %c0_13], %12 {strides = array<i32>} : memref<32x32xf32, #tpu.memory_space<vmem>>, vector<32x32xf32>,
    } else {
    }
    return
  }
  func.func @transform_0(%arg0: i32, %arg1: i32, %arg2: i32) -> (i32, i32) {
    %c0_i32 = arith.constant 0 : i32
    return %arg0, %arg2 : i32, i32
  }
  func.func @transform_1(%arg0: i32, %arg1: i32, %arg2: i32) -> (i32, i32) {
    %c0_i32 = arith.constant 0 : i32
    return %arg1, %arg2 : i32, i32
  }
  func.func @transform_2(%arg0: i32, %arg1: i32, %arg2: i32) -> (i32, i32) {
    %c0_i32 = arith.constant 0 : i32
    return %arg0, %arg1 : i32, i32
  }
}

module attributes {stable_mosaic.version = 11 : i64} {
  func.func @_attn_kernel(%arg0: i32, %arg1: i32, %arg2: memref<1x16x3x4x8xf32, #tpu.memory_space<vmem>>, %arg3: memref<16x4xf32, #tpu.memory_space<vmem>>, %arg4: memref<16x4xf32, #tpu.memory_space<vmem>>, %arg5: memref<1x16x32xf32, #tpu.memory_space<vmem>>) attributes {dimension_semantics = [#tpu.dimension_semantics<parallel>, #tpu.dimension_semantics<parallel>], iteration_bounds = array<i64: 2, 1>, scalar_prefetch = 0 : i64, scratch_operands = 0 : i64, tpu.core_type = #tpu.core_type<tc>, window_params = [{transform_indices = @transform_0, window_bounds = array<i64: 1, 16, 3, 4, 8>}, {pipeline_mode = #tpu.pipeline_mode<synchronous>, transform_indices = @transform_1, window_bounds = array<i64: 16, 4>}, {pipeline_mode = #tpu.pipeline_mode<synchronous>, transform_indices = @transform_2, window_bounds = array<i64: 16, 4>}, {transform_indices = @transform_3, window_bounds = array<i64: 1, 16, 32>}]} {
    %c0 = arith.constant 0 : index
    %c0_0 = arith.constant 0 : index
    %0 = vector.load %arg3[%c0, %c0_0] : memref<16x4xf32, #tpu.memory_space<vmem>>, vector<16x4xf32>
    %c0_1 = arith.constant 0 : index
    %c0_2 = arith.constant 0 : index
    %1 = vector.load %arg4[%c0_1, %c0_2] : memref<16x4xf32, #tpu.memory_space<vmem>>, vector<16x4xf32>
    %c0_3 = arith.constant 0 : index
    %c0_4 = arith.constant 0 : index
    %c0_5 = arith.constant 0 : index
    %c0_6 = arith.constant 0 : index
    %c0_7 = arith.constant 0 : index
    %2 = vector.load %arg2[%c0_3, %c0_4, %c0_5, %c0_6, %c0_7] : memref<1x16x3x4x8xf32, #tpu.memory_space<vmem>>, vector<1x16x1x1x8xf32>
    %3 = vector.shape_cast %2 : vector<1x16x1x1x8xf32> to vector<16x8xf32>
    %4 = vector.extract_strided_slice %3 {offsets = [0, 0], sizes = [16, 4], strides = [1, 1]} : vector<16x8xf32> to vector<16x4xf32>
    %5 = vector.extract_strided_slice %3 {offsets = [0, 4], sizes = [16, 4], strides = [1, 1]} : vector<16x8xf32> to vector<16x4xf32>
    %6 = arith.mulf %4, %0 : vector<16x4xf32>
    %7 = arith.mulf %5, %1 : vector<16x4xf32>
    %8 = arith.subf %6, %7 : vector<16x4xf32>
    %9 = arith.mulf %5, %0 : vector<16x4xf32>
    %10 = arith.mulf %4, %1 : vector<16x4xf32>
    %11 = arith.addf %9, %10 : vector<16x4xf32>
    %12 = tpu.concatenate %8, %11 in 1 : vector<16x4xf32>, vector<16x4xf32> -> vector<16x8xf32>
    %cst = arith.constant 0.353553385 : f32
    %13 = vector.broadcast %cst : f32 to vector<16x8xf32>
    %14 = arith.mulf %12, %13 : vector<16x8xf32>
    %c0_8 = arith.constant 0 : index
    %c0_9 = arith.constant 0 : index
    %c1 = arith.constant 1 : index
    %c0_10 = arith.constant 0 : index
    %c0_11 = arith.constant 0 : index
    %15 = vector.load %arg2[%c0_8, %c0_9, %c1, %c0_10, %c0_11] : memref<1x16x3x4x8xf32, #tpu.memory_space<vmem>>, vector<1x16x1x1x8xf32>
    %16 = vector.shape_cast %15 : vector<1x16x1x1x8xf32> to vector<16x8xf32>
    %17 = vector.extract_strided_slice %16 {offsets = [0, 0], sizes = [16, 4], strides = [1, 1]} : vector<16x8xf32> to vector<16x4xf32>
    %18 = vector.extract_strided_slice %16 {offsets = [0, 4], sizes = [16, 4], strides = [1, 1]} : vector<16x8xf32> to vector<16x4xf32>
    %19 = arith.mulf %17, %0 : vector<16x4xf32>
    %20 = arith.mulf %18, %1 : vector<16x4xf32>
    %21 = arith.subf %19, %20 : vector<16x4xf32>
    %22 = arith.mulf %18, %0 : vector<16x4xf32>
    %23 = arith.mulf %17, %1 : vector<16x4xf32>
    %24 = arith.addf %22, %23 : vector<16x4xf32>
    %25 = tpu.concatenate %21, %24 in 1 : vector<16x4xf32>, vector<16x4xf32> -> vector<16x8xf32>
    %c0_12 = arith.constant 0 : index
    %c0_13 = arith.constant 0 : index
    %c2 = arith.constant 2 : index
    %c0_14 = arith.constant 0 : index
    %c0_15 = arith.constant 0 : index
    %26 = vector.load %arg2[%c0_12, %c0_13, %c2, %c0_14, %c0_15] : memref<1x16x3x4x8xf32, #tpu.memory_space<vmem>>, vector<1x16x1x1x8xf32>
    %27 = vector.shape_cast %26 : vector<1x16x1x1x8xf32> to vector<16x8xf32>
    %cst_16 = arith.constant dense<0.000000e+00> : vector<16x16xf32>
    %28 = tpu.matmul %14, %25, %cst_16 {dimension_numbers = #tpu.dot_dimension_numbers<[1], [1], [0], [0], [0, 0, 1, 0], [], []>} : vector<16x8xf32>, vector<16x8xf32>, vector<16x16xf32> -> vector<16x16xf32>
    %cst_17 = arith.constant dense<0xFF800000> : vector<16xf32>
    %29 = vector.multi_reduction <maximumf>, %28, %cst_17 [1] : vector<16x16xf32> to vector<16xf32>
    %30 = vector.shape_cast %29 : vector<16xf32> to vector<16x1xf32>
    %31 = vector.broadcast %30 : vector<16x1xf32> to vector<16x16xf32>
    %32 = arith.subf %28, %31 : vector<16x16xf32>
    %33 = math.exp %32 : vector<16x16xf32>
    %cst_18 = arith.constant dense<0.000000e+00> : vector<16xf32>
    %34 = vector.multi_reduction <add>, %33, %cst_18 [1] : vector<16x16xf32> to vector<16xf32>
    %35 = vector.shape_cast %34 : vector<16xf32> to vector<16x1xf32>
    %cst_19 = arith.constant dense<0.000000e+00> : vector<16x8xf32>
    %36 = tpu.matmul %33, %27, %cst_19 {dimension_numbers = #tpu.dot_dimension_numbers<[1], [0], [0], [1], [0, 0, 1, 1], [], []>} : vector<16x16xf32>, vector<16x8xf32>, vector<16x8xf32> -> vector<16x8xf32>
    %37 = tpu.reciprocal %35 {approx = true} : vector<16x1xf32> -> vector<16x1xf32>
    %38 = vector.broadcast %37 : vector<16x1xf32> to vector<16x8xf32>
    %39 = arith.mulf %36, %38 : vector<16x8xf32>
    %c0_20 = arith.constant 0 : index
    %c0_21 = arith.constant 0 : index
    %c0_22 = arith.constant 0 : index
    %c1_23 = arith.constant 1 : index
    %c0_24 = arith.constant 0 : index
    %40 = vector.load %arg2[%c0_20, %c0_21, %c0_22, %c1_23, %c0_24] : memref<1x16x3x4x8xf32, #tpu.memory_space<vmem>>, vector<1x16x1x1x8xf32>
    %41 = vector.shape_cast %40 : vector<1x16x1x1x8xf32> to vector<16x8xf32>
    %42 = vector.extract_strided_slice %41 {offsets = [0, 0], sizes = [16, 4], strides = [1, 1]} : vector<16x8xf32> to vector<16x4xf32>
    %43 = vector.extract_strided_slice %41 {offsets = [0, 4], sizes = [16, 4], strides = [1, 1]} : vector<16x8xf32> to vector<16x4xf32>
    %44 = arith.mulf %42, %0 : vector<16x4xf32>
    %45 = arith.mulf %43, %1 : vector<16x4xf32>
    %46 = arith.subf %44, %45 : vector<16x4xf32>
    %47 = arith.mulf %43, %0 : vector<16x4xf32>
    %48 = arith.mulf %42, %1 : vector<16x4xf32>
    %49 = arith.addf %47, %48 : vector<16x4xf32>
    %50 = tpu.concatenate %46, %49 in 1 : vector<16x4xf32>, vector<16x4xf32> -> vector<16x8xf32>
    %cst_25 = arith.constant 0.353553385 : f32
    %51 = vector.broadcast %cst_25 : f32 to vector<16x8xf32>
    %52 = arith.mulf %50, %51 : vector<16x8xf32>
    %c0_26 = arith.constant 0 : index
    %c0_27 = arith.constant 0 : index
    %c1_28 = arith.constant 1 : index
    %c1_29 = arith.constant 1 : index
    %c0_30 = arith.constant 0 : index
    %53 = vector.load %arg2[%c0_26, %c0_27, %c1_28, %c1_29, %c0_30] : memref<1x16x3x4x8xf32, #tpu.memory_space<vmem>>, vector<1x16x1x1x8xf32>
    %54 = vector.shape_cast %53 : vector<1x16x1x1x8xf32> to vector<16x8xf32>
    %55 = vector.extract_strided_slice %54 {offsets = [0, 0], sizes = [16, 4], strides = [1, 1]} : vector<16x8xf32> to vector<16x4xf32>
    %56 = vector.extract_strided_slice %54 {offsets = [0, 4], sizes = [16, 4], strides = [1, 1]} : vector<16x8xf32> to vector<16x4xf32>
    %57 = arith.mulf %55, %0 : vector<16x4xf32>
    %58 = arith.mulf %56, %1 : vector<16x4xf32>
    %59 = arith.subf %57, %58 : vector<16x4xf32>
    %60 = arith.mulf %56, %0 : vector<16x4xf32>
    %61 = arith.mulf %55, %1 : vector<16x4xf32>
    %62 = arith.addf %60, %61 : vector<16x4xf32>
    %63 = tpu.concatenate %59, %62 in 1 : vector<16x4xf32>, vector<16x4xf32> -> vector<16x8xf32>
    %c0_31 = arith.constant 0 : index
    %c0_32 = arith.constant 0 : index
    %c2_33 = arith.constant 2 : index
    %c1_34 = arith.constant 1 : index
    %c0_35 = arith.constant 0 : index
    %64 = vector.load %arg2[%c0_31, %c0_32, %c2_33, %c1_34, %c0_35] : memref<1x16x3x4x8xf32, #tpu.memory_space<vmem>>, vector<1x16x1x1x8xf32>
    %65 = vector.shape_cast %64 : vector<1x16x1x1x8xf32> to vector<16x8xf32>
    %cst_36 = arith.constant dense<0.000000e+00> : vector<16x16xf32>
    %66 = tpu.matmul %52, %63, %cst_36 {dimension_numbers = #tpu.dot_dimension_numbers<[1], [1], [0], [0], [0, 0, 1, 0], [], []>} : vector<16x8xf32>, vector<16x8xf32>, vector<16x16xf32> -> vector<16x16xf32>
    %cst_37 = arith.constant dense<0xFF800000> : vector<16xf32>
    %67 = vector.multi_reduction <maximumf>, %66, %cst_37 [1] : vector<16x16xf32> to vector<16xf32>
    %68 = vector.shape_cast %67 : vector<16xf32> to vector<16x1xf32>
    %69 = vector.broadcast %68 : vector<16x1xf32> to vector<16x16xf32>
    %70 = arith.subf %66, %69 : vector<16x16xf32>
    %71 = math.exp %70 : vector<16x16xf32>
    %cst_38 = arith.constant dense<0.000000e+00> : vector<16xf32>
    %72 = vector.multi_reduction <add>, %71, %cst_38 [1] : vector<16x16xf32> to vector<16xf32>
    %73 = vector.shape_cast %72 : vector<16xf32> to vector<16x1xf32>
    %cst_39 = arith.constant dense<0.000000e+00> : vector<16x8xf32>
    %74 = tpu.matmul %71, %65, %cst_39 {dimension_numbers = #tpu.dot_dimension_numbers<[1], [0], [0], [1], [0, 0, 1, 1], [], []>} : vector<16x16xf32>, vector<16x8xf32>, vector<16x8xf32> -> vector<16x8xf32>
    %75 = tpu.reciprocal %73 {approx = true} : vector<16x1xf32> -> vector<16x1xf32>
    %76 = vector.broadcast %75 : vector<16x1xf32> to vector<16x8xf32>
    %77 = arith.mulf %74, %76 : vector<16x8xf32>
    %c0_40 = arith.constant 0 : index
    %c0_41 = arith.constant 0 : index
    %c0_42 = arith.constant 0 : index
    %c2_43 = arith.constant 2 : index
    %c0_44 = arith.constant 0 : index
    %78 = vector.load %arg2[%c0_40, %c0_41, %c0_42, %c2_43, %c0_44] : memref<1x16x3x4x8xf32, #tpu.memory_space<vmem>>, vector<1x16x1x1x8xf32>
    %79 = vector.shape_cast %78 : vector<1x16x1x1x8xf32> to vector<16x8xf32>
    %80 = vector.extract_strided_slice %79 {offsets = [0, 0], sizes = [16, 4], strides = [1, 1]} : vector<16x8xf32> to vector<16x4xf32>
    %81 = vector.extract_strided_slice %79 {offsets = [0, 4], sizes = [16, 4], strides = [1, 1]} : vector<16x8xf32> to vector<16x4xf32>
    %82 = arith.mulf %80, %0 : vector<16x4xf32>
    %83 = arith.mulf %81, %1 : vector<16x4xf32>
    %84 = arith.subf %82, %83 : vector<16x4xf32>
    %85 = arith.mulf %81, %0 : vector<16x4xf32>
    %86 = arith.mulf %80, %1 : vector<16x4xf32>
    %87 = arith.addf %85, %86 : vector<16x4xf32>
    %88 = tpu.concatenate %84, %87 in 1 : vector<16x4xf32>, vector<16x4xf32> -> vector<16x8xf32>
    %cst_45 = arith.constant 0.353553385 : f32
    %89 = vector.broadcast %cst_45 : f32 to vector<16x8xf32>
    %90 = arith.mulf %88, %89 : vector<16x8xf32>
    %c0_46 = arith.constant 0 : index
    %c0_47 = arith.constant 0 : index
    %c1_48 = arith.constant 1 : index
    %c2_49 = arith.constant 2 : index
    %c0_50 = arith.constant 0 : index
    %91 = vector.load %arg2[%c0_46, %c0_47, %c1_48, %c2_49, %c0_50] : memref<1x16x3x4x8xf32, #tpu.memory_space<vmem>>, vector<1x16x1x1x8xf32>
    %92 = vector.shape_cast %91 : vector<1x16x1x1x8xf32> to vector<16x8xf32>
    %93 = vector.extract_strided_slice %92 {offsets = [0, 0], sizes = [16, 4], strides = [1, 1]} : vector<16x8xf32> to vector<16x4xf32>
    %94 = vector.extract_strided_slice %92 {offsets = [0, 4], sizes = [16, 4], strides = [1, 1]} : vector<16x8xf32> to vector<16x4xf32>
    %95 = arith.mulf %93, %0 : vector<16x4xf32>
    %96 = arith.mulf %94, %1 : vector<16x4xf32>
    %97 = arith.subf %95, %96 : vector<16x4xf32>
    %98 = arith.mulf %94, %0 : vector<16x4xf32>
    %99 = arith.mulf %93, %1 : vector<16x4xf32>
    %100 = arith.addf %98, %99 : vector<16x4xf32>
    %101 = tpu.concatenate %97, %100 in 1 : vector<16x4xf32>, vector<16x4xf32> -> vector<16x8xf32>
    %c0_51 = arith.constant 0 : index
    %c0_52 = arith.constant 0 : index
    %c2_53 = arith.constant 2 : index
    %c2_54 = arith.constant 2 : index
    %c0_55 = arith.constant 0 : index
    %102 = vector.load %arg2[%c0_51, %c0_52, %c2_53, %c2_54, %c0_55] : memref<1x16x3x4x8xf32, #tpu.memory_space<vmem>>, vector<1x16x1x1x8xf32>
    %103 = vector.shape_cast %102 : vector<1x16x1x1x8xf32> to vector<16x8xf32>
    %cst_56 = arith.constant dense<0.000000e+00> : vector<16x16xf32>
    %104 = tpu.matmul %90, %101, %cst_56 {dimension_numbers = #tpu.dot_dimension_numbers<[1], [1], [0], [0], [0, 0, 1, 0], [], []>} : vector<16x8xf32>, vector<16x8xf32>, vector<16x16xf32> -> vector<16x16xf32>
    %cst_57 = arith.constant dense<0xFF800000> : vector<16xf32>
    %105 = vector.multi_reduction <maximumf>, %104, %cst_57 [1] : vector<16x16xf32> to vector<16xf32>
    %106 = vector.shape_cast %105 : vector<16xf32> to vector<16x1xf32>
    %107 = vector.broadcast %106 : vector<16x1xf32> to vector<16x16xf32>
    %108 = arith.subf %104, %107 : vector<16x16xf32>
    %109 = math.exp %108 : vector<16x16xf32>
    %cst_58 = arith.constant dense<0.000000e+00> : vector<16xf32>
    %110 = vector.multi_reduction <add>, %109, %cst_58 [1] : vector<16x16xf32> to vector<16xf32>
    %111 = vector.shape_cast %110 : vector<16xf32> to vector<16x1xf32>
    %cst_59 = arith.constant dense<0.000000e+00> : vector<16x8xf32>
    %112 = tpu.matmul %109, %103, %cst_59 {dimension_numbers = #tpu.dot_dimension_numbers<[1], [0], [0], [1], [0, 0, 1, 1], [], []>} : vector<16x16xf32>, vector<16x8xf32>, vector<16x8xf32> -> vector<16x8xf32>
    %113 = tpu.reciprocal %111 {approx = true} : vector<16x1xf32> -> vector<16x1xf32>
    %114 = vector.broadcast %113 : vector<16x1xf32> to vector<16x8xf32>
    %115 = arith.mulf %112, %114 : vector<16x8xf32>
    %c0_60 = arith.constant 0 : index
    %c0_61 = arith.constant 0 : index
    %c0_62 = arith.constant 0 : index
    %c3 = arith.constant 3 : index
    %c0_63 = arith.constant 0 : index
    %116 = vector.load %arg2[%c0_60, %c0_61, %c0_62, %c3, %c0_63] : memref<1x16x3x4x8xf32, #tpu.memory_space<vmem>>, vector<1x16x1x1x8xf32>
    %117 = vector.shape_cast %116 : vector<1x16x1x1x8xf32> to vector<16x8xf32>
    %118 = vector.extract_strided_slice %117 {offsets = [0, 0], sizes = [16, 4], strides = [1, 1]} : vector<16x8xf32> to vector<16x4xf32>
    %119 = vector.extract_strided_slice %117 {offsets = [0, 4], sizes = [16, 4], strides = [1, 1]} : vector<16x8xf32> to vector<16x4xf32>
    %120 = arith.mulf %118, %0 : vector<16x4xf32>
    %121 = arith.mulf %119, %1 : vector<16x4xf32>
    %122 = arith.subf %120, %121 : vector<16x4xf32>
    %123 = arith.mulf %119, %0 : vector<16x4xf32>
    %124 = arith.mulf %118, %1 : vector<16x4xf32>
    %125 = arith.addf %123, %124 : vector<16x4xf32>
    %126 = tpu.concatenate %122, %125 in 1 : vector<16x4xf32>, vector<16x4xf32> -> vector<16x8xf32>
    %cst_64 = arith.constant 0.353553385 : f32
    %127 = vector.broadcast %cst_64 : f32 to vector<16x8xf32>
    %128 = arith.mulf %126, %127 : vector<16x8xf32>
    %c0_65 = arith.constant 0 : index
    %c0_66 = arith.constant 0 : index
    %c1_67 = arith.constant 1 : index
    %c3_68 = arith.constant 3 : index
    %c0_69 = arith.constant 0 : index
    %129 = vector.load %arg2[%c0_65, %c0_66, %c1_67, %c3_68, %c0_69] : memref<1x16x3x4x8xf32, #tpu.memory_space<vmem>>, vector<1x16x1x1x8xf32>
    %130 = vector.shape_cast %129 : vector<1x16x1x1x8xf32> to vector<16x8xf32>
    %131 = vector.extract_strided_slice %130 {offsets = [0, 0], sizes = [16, 4], strides = [1, 1]} : vector<16x8xf32> to vector<16x4xf32>
    %132 = vector.extract_strided_slice %130 {offsets = [0, 4], sizes = [16, 4], strides = [1, 1]} : vector<16x8xf32> to vector<16x4xf32>
    %133 = arith.mulf %131, %0 : vector<16x4xf32>
    %134 = arith.mulf %132, %1 : vector<16x4xf32>
    %135 = arith.subf %133, %134 : vector<16x4xf32>
    %136 = arith.mulf %132, %0 : vector<16x4xf32>
    %137 = arith.mulf %131, %1 : vector<16x4xf32>
    %138 = arith.addf %136, %137 : vector<16x4xf32>
    %139 = tpu.concatenate %135, %138 in 1 : vector<16x4xf32>, vector<16x4xf32> -> vector<16x8xf32>
    %c0_70 = arith.constant 0 : index
    %c0_71 = arith.constant 0 : index
    %c2_72 = arith.constant 2 : index
    %c3_73 = arith.constant 3 : index
    %c0_74 = arith.constant 0 : index
    %140 = vector.load %arg2[%c0_70, %c0_71, %c2_72, %c3_73, %c0_74] : memref<1x16x3x4x8xf32, #tpu.memory_space<vmem>>, vector<1x16x1x1x8xf32>
    %141 = vector.shape_cast %140 : vector<1x16x1x1x8xf32> to vector<16x8xf32>
    %cst_75 = arith.constant dense<0.000000e+00> : vector<16x16xf32>
    %142 = tpu.matmul %128, %139, %cst_75 {dimension_numbers = #tpu.dot_dimension_numbers<[1], [1], [0], [0], [0, 0, 1, 0], [], []>} : vector<16x8xf32>, vector<16x8xf32>, vector<16x16xf32> -> vector<16x16xf32>
    %cst_76 = arith.constant dense<0xFF800000> : vector<16xf32>
    %143 = vector.multi_reduction <maximumf>, %142, %cst_76 [1] : vector<16x16xf32> to vector<16xf32>
    %144 = vector.shape_cast %143 : vector<16xf32> to vector<16x1xf32>
    %145 = vector.broadcast %144 : vector<16x1xf32> to vector<16x16xf32>
    %146 = arith.subf %142, %145 : vector<16x16xf32>
    %147 = math.exp %146 : vector<16x16xf32>
    %cst_77 = arith.constant dense<0.000000e+00> : vector<16xf32>
    %148 = vector.multi_reduction <add>, %147, %cst_77 [1] : vector<16x16xf32> to vector<16xf32>
    %149 = vector.shape_cast %148 : vector<16xf32> to vector<16x1xf32>
    %cst_78 = arith.constant dense<0.000000e+00> : vector<16x8xf32>
    %150 = tpu.matmul %147, %141, %cst_78 {dimension_numbers = #tpu.dot_dimension_numbers<[1], [0], [0], [1], [0, 0, 1, 1], [], []>} : vector<16x16xf32>, vector<16x8xf32>, vector<16x8xf32> -> vector<16x8xf32>
    %151 = tpu.reciprocal %149 {approx = true} : vector<16x1xf32> -> vector<16x1xf32>
    %152 = vector.broadcast %151 : vector<16x1xf32> to vector<16x8xf32>
    %153 = arith.mulf %150, %152 : vector<16x8xf32>
    %154 = tpu.concatenate %39, %77, %115, %153 in 1 : vector<16x8xf32>, vector<16x8xf32>, vector<16x8xf32>, vector<16x8xf32> -> vector<16x32xf32>
    %c0_79 = arith.constant 0 : index
    %c0_80 = arith.constant 0 : index
    %c0_81 = arith.constant 0 : index
    %155 = vector.load %arg5[%c0_79, %c0_80, %c0_81] : memref<1x16x32xf32, #tpu.memory_space<vmem>>, vector<1x16x32xf32>
    %156 = vector.shape_cast %155 : vector<1x16x32xf32> to vector<16x32xf32>
    %157 = vector.shape_cast %154 : vector<16x32xf32> to vector<1x16x32xf32>
    tpu.vector_store %arg5[%c0_79, %c0_80, %c0_81], %157 {strides = array<i32>} : memref<1x16x32xf32, #tpu.memory_space<vmem>>, vector<1x16x32xf32>,
    return
  }
  func.func @transform_0(%arg0: i32, %arg1: i32) -> (i32, i32, i32, i32, i32) {
    %c0_i32 = arith.constant 0 : i32
    %c0_i32_0 = arith.constant 0 : i32
    %c0_i32_1 = arith.constant 0 : i32
    %c0_i32_2 = arith.constant 0 : i32
    return %arg0, %c0_i32, %c0_i32_0, %arg1, %c0_i32_1 : i32, i32, i32, i32, i32
  }
  func.func @transform_1(%arg0: i32, %arg1: i32) -> (i32, i32) {
    %c0_i32 = arith.constant 0 : i32
    %c0_i32_0 = arith.constant 0 : i32
    %c0_i32_1 = arith.constant 0 : i32
    return %c0_i32, %c0_i32_0 : i32, i32
  }
  func.func @transform_2(%arg0: i32, %arg1: i32) -> (i32, i32) {
    %c0_i32 = arith.constant 0 : i32
    %c0_i32_0 = arith.constant 0 : i32
    %c0_i32_1 = arith.constant 0 : i32
    return %c0_i32, %c0_i32_0 : i32, i32
  }
  func.func @transform_3(%arg0: i32, %arg1: i32) -> (i32, i32, i32) {
    %c0_i32 = arith.constant 0 : i32
    %c0_i32_0 = arith.constant 0 : i32
    return %arg0, %c0_i32, %arg1 : i32, i32, i32
  }
}

</mosaic_0001>

<llo_original>
// kernel: mha_forward.3
$region0: #{mha_forward.3}
  #allocation0 [shape = 'u32[]', space=smem, size = 0x4, offset = 0x4, fixed_abs, tag = 'smem constant byte address 0x4 - core index']
  #allocation1 [shape = 'u32[144,128]{1,0:T(1,128)}', space=vmem, size = 0x12000, scoped, tag = 'internal scratch']
  #allocation2 [shape = 'f32[32,96]{1,0:T(8,128)}', space=vmem, size = 0x4000, scoped, tag = 'scratch operand']
  %s0 = inlined_call_operand.vmem [shape: f32[32,32], index: 0, kind: input, shape index: {}]
  %s1 = inlined_call_operand.vmem [shape: f32[96,32], index: 1, kind: input, shape index: {}]
  %s2 = inlined_call_operand.vmem [shape: f32[32,96], index: 2, kind: output, shape index: {}]
  %s3 = sld [smem:[#allocation0]]
  $region26: #{mha_forward.3} parent=0
    _
  %s5 = ssub.s32 1, %s3
  %s6 = scalar_select 0, %s5, %s3
  // Predicated region
  $region2: #{mha_forward.3} parent=0 // pred_check
    _
  $region3: #{mha_forward.3} parent=0 // pred_check_branch
    %8 = sbr.rel (0) target = $region5
  $region4: #{mha_forward.3} parent=0 // pred_region
    _
  $region5: #{mha_forward.3} parent=0 // pred_fallthru
    _
  // Predicated region
  $region6: #{mha_forward.3} parent=0 // pred_check
    _
  $region7: #{mha_forward.3} parent=0 // pred_check_branch
    %10 = sbr.rel (0) target = $region9
  $region8: #{mha_forward.3} parent=0 // pred_region
    _
  $region9: #{mha_forward.3} parent=0 // pred_fallthru
    _
  %p11 = scmp.eq.s32.totalorder 0, 0
  // Predicated region
  $region10: #{mha_forward.3} parent=0 // pred_check
    %p12 = pneg %p11
  $region11: #{mha_forward.3} parent=0 // pred_check_branch
    %14 = sbr.rel (%p12) target = $region13
  $region12: #{mha_forward.3} parent=0 // pred_region
    %vm15 = vcmask 785408
    %16 = vst.msk [vmem:[#allocation2] sm:$0xff] %vm15, 0.0
    %17 = vst.msk [vmem:[#allocation2 + $0x8] sm:$0xff] %vm15, 0.0
    %18 = vst.msk [vmem:[#allocation2 + $0x10] sm:$0xff] %vm15, 0.0
    %19 = vst.msk [vmem:[#allocation2 + $0x18] sm:$0xff] %vm15, 0.0
  $region13: #{mha_forward.3} parent=0 // pred_fallthru
    _
  %v20 = vld [vmem:[#allocation2] sm:$0xff]
  %v21 = vld [vmem:[#allocation2 + $0x8] sm:$0xff]
  %v22 = vld [vmem:[#allocation2 + $0x10] sm:$0xff]
  %v23 = vld [vmem:[#allocation2 + $0x18] sm:$0xff]
  %v24 = vld [vmem:[%s0] sm:$0xff]
  %v25 = vld [vmem:[%s0 + $0x8] sm:$0xff]
  %v26 = vld [vmem:[%s0 + $0x10] sm:$0xff]
  %v27 = vld [vmem:[%s0 + $0x18] sm:$0xff]
  %v28 = vld [vmem:[%s1] sm:$0xff]
  %v29 = vld [vmem:[%s1 + $0x8] sm:$0xff]
  %v30 = vld [vmem:[%s1 + $0x10] sm:$0xff]
  %v31 = vld [vmem:[%s1 + $0x18] sm:$0xff]
  %v32 = vld [vmem:[%s1 + $0x20] sm:$0xff]
  %v33 = vld [vmem:[%s1 + $0x28] sm:$0xff]
  %v34 = vld [vmem:[%s1 + $0x30] sm:$0xff]
  %v35 = vld [vmem:[%s1 + $0x38] sm:$0xff]
  %v36 = vld [vmem:[%s1 + $0x40] sm:$0xff]
  %v37 = vld [vmem:[%s1 + $0x48] sm:$0xff]
  %v38 = vld [vmem:[%s1 + $0x50] sm:$0xff]
  %v39 = vld [vmem:[%s1 + $0x58] sm:$0xff]
  %vm40 = vcmask 261120
  %v42 = vsel %vm40, %v24, 0
  %v45 = vsel %vm40, %v25, 0
  %v48 = vsel %vm40, %v26, 0
  %v51 = vsel %vm40, %v27, 0
  %v54 = vsel %vm40, %v28, 0
  %v57 = vsel %vm40, %v29, 0
  %v60 = vsel %vm40, %v30, 0
  %v63 = vsel %vm40, %v31, 0
  %v66 = vsel %vm40, %v32, 0
  %v69 = vsel %vm40, %v33, 0
  %v72 = vsel %vm40, %v34, 0
  %v75 = vsel %vm40, %v35, 0
  %v78 = vsel %vm40, %v36, 0
  %v81 = vsel %vm40, %v37, 0
  %v84 = vsel %vm40, %v38, 0
  %v87 = vsel %vm40, %v39, 0
  %89 = vmatprep.subr.mxu0 0.0
  %90 = vmatpush1.xpose.msra.mxu0 %v54
  %91 = vmatprep.subr.mxu0 0.0
  %92 = vmatpush1.xpose.msra.mxu0 %v57
  %93 = vmatprep.subr.mxu0 0.0
  %94 = vmatpush1.xpose.msra.mxu0 %v60
  %95 = vmatprep.subr.mxu0 0.0
  %96 = vmatpush1.xpose.msra.mxu0 %v63
  %97 = vmatprep.subr.mxu0 0.0
  %98 = vmatpush1.xpose.msra.mxu0 %v66
  %99 = vmatprep.subr.mxu0 0.0
  %100 = vmatpush1.xpose.msra.mxu0 %v69
  %101 = vmatprep.subr.mxu0 0.0
  %102 = vmatpush1.xpose.msra.mxu0 %v72
  %103 = vmatprep.subr.mxu0 0.0
  %104 = vmatpush1.xpose.msra.mxu0 %v75
  %105 = vmatprep.subr.mxu0 0.0
  %106 = vmatpush1.xpose.msra.mxu0 %v78
  %107 = vmatprep.subr.mxu0 0.0
  %108 = vmatpush1.xpose.msra.mxu0 %v81
  %109 = vmatprep.subr.mxu0 0.0
  %110 = vmatpush1.xpose.msra.mxu0 %v84
  %111 = vmatprep.subr.mxu0 0.0
  %112 = vmatpush1.xpose.msra.mxu0 %v87
  %113 = vmatprep.subr.mxu0 0.0
  %114 = vmatpush1.xpose.msra.mxu0 0.0
  %115 = vmatprep.subr.mxu0 0.0
  %116 = vmatpush1.xpose.msra.mxu0 0.0
  %117 = vmatprep.subr.mxu0 0.0
  %118 = vmatpush1.xpose.msra.mxu0 0.0
  %119 = vmatprep.subr.mxu0 0.0
  %120 = vmatpush1.xpose.msra.mxu0 0.0
  %121 = vmatprep.subr.mxu0 0.0
  %122 = vmatpush1.xpose.msra.mxu0 0.0
  %123 = vmatprep.subr.mxu0 0.0
  %124 = vmatpush1.xpose.msra.mxu0 0.0
  %125 = vmatprep.subr.mxu0 0.0
  %126 = vmatpush1.xpose.msra.mxu0 0.0
  %127 = vmatprep.subr.mxu0 0.0
  %128 = vmatpush1.xpose.msra.mxu0 0.0
  %129 = vmatprep.subr.mxu0 0.0
  %130 = vmatpush1.xpose.msra.mxu0 0.0
  %131 = vmatprep.subr.mxu0 0.0
  %132 = vmatpush1.xpose.msra.mxu0 0.0
  %133 = vmatprep.subr.mxu0 0.0
  %134 = vmatpush1.xpose.msra.mxu0 0.0
  %135 = vmatprep.subr.mxu0 0.0
  %136 = vmatpush1.xpose.msra.mxu0 0.0
  %137 = vmatprep.subr.mxu0 0.0
  %138 = vmatpush1.xpose.msra.mxu0 0.0
  %139 = vmatprep.subr.mxu0 0.0
  %140 = vmatpush1.xpose.msra.mxu0 0.0
  %141 = vmatprep.subr.mxu0 0.0
  %142 = vmatpush1.xpose.msra.mxu0 0.0
  %143 = vmatprep.subr.mxu0 0.0
  %144 = vmatpush1.xpose.msra.mxu0 0.0
  %145 = vmatprep.subr.mxu0 0.0
  %146 = vmatpush1.xpose.msra.mxu0 0.0
  %147 = vmatprep.subr.mxu0 0.0
  %148 = vmatpush1.xpose.msra.mxu0 0.0
  %149 = vmatprep.subr.mxu0 0.0
  %150 = vmatpush1.xpose.msra.mxu0 0.0
  %151 = vmatprep.subr.mxu0 0.0
  %152 = vmatpush1.xpose.msra.mxu0 0.0
  %153 = vmatprep.mubr.f32.mxu0 0.0
  %154 = vmatmul.mubr.f32.gmra.mrb[0].mxu0 %v42
  %v155 = vpop.f32.mrb[0].mxu0
  %v156 = vadd.f32 0.0, %v155
  %v157 = vpop.f32.mrb[0].mxu0
  %158 = vmatprep.mubr.f32.mxu0 0.0
  %159 = vmatmul.mubr.f32.gmra.mrb[0].mxu0 %v45
  %v160 = vpop.f32.mrb[0].mxu0
  %v161 = vadd.f32 0.0, %v160
  %v162 = vpop.f32.mrb[0].mxu0
  %163 = vmatprep.mubr.f32.mxu0 0.0
  %164 = vmatmul.mubr.f32.gmra.mrb[0].mxu0 %v48
  %v165 = vpop.f32.mrb[0].mxu0
  %v166 = vadd.f32 0.0, %v165
  %v167 = vpop.f32.mrb[0].mxu0
  %168 = vmatprep.mubr.f32.mxu0 0.0
  %169 = vmatmul.mubr.f32.gmra.mrb[0].mxu0 %v51
  %v170 = vpop.f32.mrb[0].mxu0
  %v171 = vadd.f32 0.0, %v170
  %v172 = vpop.f32.mrb[0].mxu0
  %173 = vdwg.mxu0
  %v174 = vadd.f32 %v20, %v156
  %v175 = vadd.f32 %v21, %v161
  %v176 = vadd.f32 %v22, %v166
  %v177 = vadd.f32 %v23, %v171
  %vm178 = vcmask 785408
  %179 = vst.msk [vmem:[#allocation2] sm:$0xff] %vm178, %v174
  %180 = vst.msk [vmem:[#allocation2 + $0x8] sm:$0xff] %vm178, %v175
  %181 = vst.msk [vmem:[#allocation2 + $0x10] sm:$0xff] %vm178, %v176
  %182 = vst.msk [vmem:[#allocation2 + $0x18] sm:$0xff] %vm178, %v177
  // Predicated region
  $region14: #{mha_forward.3} parent=0 // pred_check
    %p183 = pneg %p11
  $region15: #{mha_forward.3} parent=0 // pred_check_branch
    %185 = sbr.rel (%p183) target = $region17
  $region16: #{mha_forward.3} parent=0 // pred_region
    %v186 = vld [vmem:[#allocation2] sm:$0xff]
    %v187 = vld [vmem:[#allocation2 + $0x8] sm:$0xff]
    %v188 = vld [vmem:[#allocation2 + $0x10] sm:$0xff]
    %v189 = vld [vmem:[#allocation2 + $0x18] sm:$0xff]
    %190 = vst.msk [vmem:[%s2] sm:$0xff] %vm178, %v186
    %191 = vst.msk [vmem:[%s2 + $0x8] sm:$0xff] %vm178, %v187
    %192 = vst.msk [vmem:[%s2 + $0x10] sm:$0xff] %vm178, %v188
    %193 = vst.msk [vmem:[%s2 + $0x18] sm:$0xff] %vm178, %v189
  $region17: #{mha_forward.3} parent=0 // pred_fallthru
    _
  // Predicated region
  $region18: #{mha_forward.3} parent=0 // pred_check
    _
  $region19: #{mha_forward.3} parent=0 // pred_check_branch
    %195 = sbr.rel (0) target = $region21
  $region20: #{mha_forward.3} parent=0 // pred_region
    _
  $region21: #{mha_forward.3} parent=0 // pred_fallthru
    _
  // Predicated region
  $region22: #{mha_forward.3} parent=0 // pred_check
    _
  $region23: #{mha_forward.3} parent=0 // pred_check_branch
    %197 = sbr.rel (0) target = $region25
  $region24: #{mha_forward.3} parent=0 // pred_region
    _
  $region25: #{mha_forward.3} parent=0 // pred_fallthru
    _

// kernel: mha_forward.5
$region0: #{mha_forward.5}
  #allocation0 [shape = 'u32[]', space=smem, size = 0x4, offset = 0x4, fixed_abs, tag = 'smem constant byte address 0x4 - core index']
  #allocation1 [shape = 'u32[144,128]{1,0:T(1,128)}', space=vmem, size = 0x12000, scoped, tag = 'internal scratch']
  #allocation2 [shape = 'f32[32,32]{1,0:T(8,128)}', space=vmem, size = 0x4000, scoped, tag = 'scratch operand']
  %s0 = inlined_call_operand.vmem [shape: f32[32,32], index: 0, kind: input, shape index: {}]
  %s1 = inlined_call_operand.vmem [shape: f32[32,32], index: 1, kind: input, shape index: {}]
  %s2 = inlined_call_operand.hbm [shape: f32[32,32], index: 2, kind: output, shape index: {}]
  %s3 = sld [smem:[#allocation0]]
  $region26: #{mha_forward.5} parent=0
    _
  %s5 = ssub.s32 1, %s3
  %s6 = scalar_select 0, %s5, %s3
  $region1: #{mha_forward.5} parent=0
    #allocation3 [shape = 'u8[16384]{0}', space=vmem, size = 0x4000, scoped, tag = 'output window, operand 0, single buffered']
    #allocation4 [shape = 's32[1]{0}', space=sflag, size = 0x4, scoped, tag = 'scoped memory for mha_forward.5']
    %7 = vsyncpa [#allocation4], 0
    // Predicated region
    $region2: #{mha_forward.5} parent=1 // pred_check
      _
    $region3: #{mha_forward.5} parent=1 // pred_check_branch
      %9 = sbr.rel (0) target = $region5
    $region4: #{mha_forward.5} parent=1 // pred_region
      _
    $region5: #{mha_forward.5} parent=1 // pred_fallthru
      _
    // Predicated region
    $region6: #{mha_forward.5} parent=1 // pred_check
      _
    $region7: #{mha_forward.5} parent=1 // pred_check_branch
      %11 = sbr.rel (0) target = $region9
    $region8: #{mha_forward.5} parent=1 // pred_region
      _
    $region9: #{mha_forward.5} parent=1 // pred_fallthru
      _
    %p12 = scmp.eq.s32.totalorder 0, 0
    // Predicated region
    $region10: #{mha_forward.5} parent=1 // pred_check
      %p13 = pneg %p12
    $region11: #{mha_forward.5} parent=1 // pred_check_branch
      %15 = sbr.rel (%p13) target = $region13
    $region12: #{mha_forward.5} parent=1 // pred_region
      %vm16 = vcmask 261120
      %17 = vst.msk [vmem:[#allocation2] sm:$0xff] %vm16, 0.0
      %18 = vst.msk [vmem:[#allocation2 + $0x8] sm:$0xff] %vm16, 0.0
      %19 = vst.msk [vmem:[#allocation2 + $0x10] sm:$0xff] %vm16, 0.0
      %20 = vst.msk [vmem:[#allocation2 + $0x18] sm:$0xff] %vm16, 0.0
    $region13: #{mha_forward.5} parent=1 // pred_fallthru
      _
    %v21 = vld [vmem:[#allocation2] sm:$0xff]
    %v22 = vld [vmem:[#allocation2 + $0x8] sm:$0xff]
    %v23 = vld [vmem:[#allocation2 + $0x10] sm:$0xff]
    %v24 = vld [vmem:[#allocation2 + $0x18] sm:$0xff]
    %v25 = vld [vmem:[%s0] sm:$0xff]
    %v26 = vld [vmem:[%s0 + $0x8] sm:$0xff]
    %v27 = vld [vmem:[%s0 + $0x10] sm:$0xff]
    %v28 = vld [vmem:[%s0 + $0x18] sm:$0xff]
    %v29 = vld [vmem:[%s1] sm:$0xff]
    %v30 = vld [vmem:[%s1 + $0x8] sm:$0xff]
    %v31 = vld [vmem:[%s1 + $0x10] sm:$0xff]
    %v32 = vld [vmem:[%s1 + $0x18] sm:$0xff]
    %vm33 = vcmask 261120
    %v35 = vsel %vm33, %v25, 0
    %v38 = vsel %vm33, %v26, 0
    %v41 = vsel %vm33, %v27, 0
    %v44 = vsel %vm33, %v28, 0
    %v47 = vsel %vm33, %v29, 0
    %v50 = vsel %vm33, %v30, 0
    %v53 = vsel %vm33, %v31, 0
    %v56 = vsel %vm33, %v32, 0
    %58 = vmatprep.subr.mxu0 0.0
    %59 = vmatpush1.xpose.msra.mxu0 %v47
    %60 = vmatprep.subr.mxu0 0.0
    %61 = vmatpush1.xpose.msra.mxu0 %v50
    %62 = vmatprep.subr.mxu0 0.0
    %63 = vmatpush1.xpose.msra.mxu0 %v53
    %64 = vmatprep.subr.mxu0 0.0
    %65 = vmatpush1.xpose.msra.mxu0 %v56
    %66 = vmatprep.subr.mxu0 0.0
    %67 = vmatpush1.xpose.msra.mxu0 0.0
    %68 = vmatprep.subr.mxu0 0.0
    %69 = vmatpush1.xpose.msra.mxu0 0.0
    %70 = vmatprep.subr.mxu0 0.0
    %71 = vmatpush1.xpose.msra.mxu0 0.0
    %72 = vmatprep.subr.mxu0 0.0
    %73 = vmatpush1.xpose.msra.mxu0 0.0
    %74 = vmatprep.subr.mxu0 0.0
    %75 = vmatpush1.xpose.msra.mxu0 0.0
    %76 = vmatprep.subr.mxu0 0.0
    %77 = vmatpush1.xpose.msra.mxu0 0.0
    %78 = vmatprep.subr.mxu0 0.0
    %79 = vmatpush1.xpose.msra.mxu0 0.0
    %80 = vmatprep.subr.mxu0 0.0
    %81 = vmatpush1.xpose.msra.mxu0 0.0
    %82 = vmatprep.subr.mxu0 0.0
    %83 = vmatpush1.xpose.msra.mxu0 0.0
    %84 = vmatprep.subr.mxu0 0.0
    %85 = vmatpush1.xpose.msra.mxu0 0.0
    %86 = vmatprep.subr.mxu0 0.0
    %87 = vmatpush1.xpose.msra.mxu0 0.0
    %88 = vmatprep.subr.mxu0 0.0
    %89 = vmatpush1.xpose.msra.mxu0 0.0
    %90 = vmatprep.subr.mxu0 0.0
    %91 = vmatpush1.xpose.msra.mxu0 0.0
    %92 = vmatprep.subr.mxu0 0.0
    %93 = vmatpush1.xpose.msra.mxu0 0.0
    %94 = vmatprep.subr.mxu0 0.0
    %95 = vmatpush1.xpose.msra.mxu0 0.0
    %96 = vmatprep.subr.mxu0 0.0
    %97 = vmatpush1.xpose.msra.mxu0 0.0
    %98 = vmatprep.subr.mxu0 0.0
    %99 = vmatpush1.xpose.msra.mxu0 0.0
    %100 = vmatprep.subr.mxu0 0.0
    %101 = vmatpush1.xpose.msra.mxu0 0.0
    %102 = vmatprep.subr.mxu0 0.0
    %103 = vmatpush1.xpose.msra.mxu0 0.0
    %104 = vmatprep.subr.mxu0 0.0
    %105 = vmatpush1.xpose.msra.mxu0 0.0
    %106 = vmatprep.subr.mxu0 0.0
    %107 = vmatpush1.xpose.msra.mxu0 0.0
    %108 = vmatprep.subr.mxu0 0.0
    %109 = vmatpush1.xpose.msra.mxu0 0.0
    %110 = vmatprep.subr.mxu0 0.0
    %111 = vmatpush1.xpose.msra.mxu0 0.0
    %112 = vmatprep.subr.mxu0 0.0
    %113 = vmatpush1.xpose.msra.mxu0 0.0
    %114 = vmatprep.subr.mxu0 0.0
    %115 = vmatpush1.xpose.msra.mxu0 0.0
    %116 = vmatprep.subr.mxu0 0.0
    %117 = vmatpush1.xpose.msra.mxu0 0.0
    %118 = vmatprep.subr.mxu0 0.0
    %119 = vmatpush1.xpose.msra.mxu0 0.0
    %120 = vmatprep.subr.mxu0 0.0
    %121 = vmatpush1.xpose.msra.mxu0 0.0
    %122 = vmatprep.mubr.f32.mxu0 0.0
    %123 = vmatmul.mubr.f32.gmra.mrb[0].mxu0 %v35
    %v124 = vpop.f32.mrb[0].mxu0
    %v125 = vadd.f32 0.0, %v124
    %v126 = vpop.f32.mrb[0].mxu0
    %127 = vmatprep.mubr.f32.mxu0 0.0
    %128 = vmatmul.mubr.f32.gmra.mrb[0].mxu0 %v38
    %v129 = vpop.f32.mrb[0].mxu0
    %v130 = vadd.f32 0.0, %v129
    %v131 = vpop.f32.mrb[0].mxu0
    %132 = vmatprep.mubr.f32.mxu0 0.0
    %133 = vmatmul.mubr.f32.gmra.mrb[0].mxu0 %v41
    %v134 = vpop.f32.mrb[0].mxu0
    %v135 = vadd.f32 0.0, %v134
    %v136 = vpop.f32.mrb[0].mxu0
    %137 = vmatprep.mubr.f32.mxu0 0.0
    %138 = vmatmul.mubr.f32.gmra.mrb[0].mxu0 %v44
    %v139 = vpop.f32.mrb[0].mxu0
    %v140 = vadd.f32 0.0, %v139
    %v141 = vpop.f32.mrb[0].mxu0
    %142 = vdwg.mxu0
    %v143 = vadd.f32 %v21, %v125
    %v144 = vadd.f32 %v22, %v130
    %v145 = vadd.f32 %v23, %v135
    %v146 = vadd.f32 %v24, %v140
    %147 = vst.msk [vmem:[#allocation2] sm:$0xff] %vm33, %v143
    %148 = vst.msk [vmem:[#allocation2 + $0x8] sm:$0xff] %vm33, %v144
    %149 = vst.msk [vmem:[#allocation2 + $0x10] sm:$0xff] %vm33, %v145
    %150 = vst.msk [vmem:[#allocation2 + $0x18] sm:$0xff] %vm33, %v146
    // Predicated region
    $region14: #{mha_forward.5} parent=1 // pred_check
      %p151 = pneg %p12
    $region15: #{mha_forward.5} parent=1 // pred_check_branch
      %153 = sbr.rel (%p151) target = $region17
    $region16: #{mha_forward.5} parent=1 // pred_region
      %v154 = vld [vmem:[#allocation2] sm:$0xff]
      %v155 = vld [vmem:[#allocation2 + $0x8] sm:$0xff]
      %v156 = vld [vmem:[#allocation2 + $0x10] sm:$0xff]
      %v157 = vld [vmem:[#allocation2 + $0x18] sm:$0xff]
      %158 = vst.msk [vmem:[#allocation3] sm:$0xff] %vm33, %v154
      %159 = vst.msk [vmem:[#allocation3 + $0x8] sm:$0xff] %vm33, %v155
      %160 = vst.msk [vmem:[#allocation3 + $0x10] sm:$0xff] %vm33, %v156
      %161 = vst.msk [vmem:[#allocation3 + $0x18] sm:$0xff] %vm33, %v157
    $region17: #{mha_forward.5} parent=1 // pred_fallthru
      _
    // Predicated region
    $region18: #{mha_forward.5} parent=1 // pred_check
      _
    $region19: #{mha_forward.5} parent=1 // pred_check_branch
      %163 = sbr.rel (0) target = $region21
    $region20: #{mha_forward.5} parent=1 // pred_region
      %s165 = ssub.s32 512, 512
      %166 = vsyncadd [#allocation4], %s165
      %s167 = sshll.u32 [#allocation3], 4
      %s168 = int_to_ptr.vmem [resolvable:$true] %s167
      %173 = dma.vmem_to_hbm [thread:$0]  %s168, 512, %s2, [#allocation4], 128, 128, 8
    $region21: #{mha_forward.5} parent=1 // pred_fallthru
      _
    // Predicated region
    $region22: #{mha_forward.5} parent=1 // pred_check
      _
    $region23: #{mha_forward.5} parent=1 // pred_check_branch
      %175 = sbr.rel (0) target = $region25
    $region24: #{mha_forward.5} parent=1 // pred_region
      %176 = dma.done [#allocation4], 512
    $region25: #{mha_forward.5} parent=1 // pred_fallthru
      _
    %177 = vsyncpa [#allocation4], 1

// kernel: mha_forward.4
$region0: #{mha_forward.4}
  #allocation0 [shape = 'u32[]', space=smem, size = 0x4, offset = 0x4, fixed_abs, tag = 'smem constant byte address 0x4 - core index']
  #allocation1 [shape = 'u32[144,128]{1,0:T(1,128)}', space=vmem, size = 0x12000, scoped, tag = 'internal scratch']
  %s0 = inlined_call_operand.vmem [shape: f32[2,16,3,4,8], index: 0, kind: input, shape index: {}]
  %s1 = inlined_call_operand.vmem [shape: f32[16,4], index: 1, kind: input, shape index: {}]
  %s2 = inlined_call_operand.vmem [shape: f32[16,4], index: 2, kind: input, shape index: {}]
  %s3 = inlined_call_operand.vmem [shape: f32[2,16,32], index: 3, kind: output, shape index: {}]
  %s4 = sld [smem:[#allocation0]]
  $region45: #{mha_forward.4} parent=0
    _
  %s6 = ssub.s32 1, %s4
  %s7 = scalar_select 0, %s6, %s4
  loop: start=0, step=1, limit=4
  $region2: #{mha_forward.4} parent=0 // loop_pre_header
    _
  $region3: #{mha_forward.4} parent=0 // loop_header
    %s9 = sphi 0, %s13
    %p10 = scmp.ge.s32.totalorder %s9, 4
    %s16 = sphi 0, %s28
    %s17 = sphi 0, %s24
    %s18 = sphi 0, %s16
    %s19 = sphi 0, %s17
    %s20 = sphi 0, %s18
    %s21 = sphi 0, %s19
    %s33 = sphi 0, %s35
    %s36 = sphi 0, %s33
    %s37 = sphi 0, %s36
    %s53 = sphi 0, %s37
    %s57 = sphi 0, %s57
    %s59 = sphi 0, %s57
    %s60 = sphi 0, %s59
    %s74 = sphi 0, %s60
    %s78 = sphi 0, %s78
    %s80 = sphi 0, %s78
    %s81 = sphi 0, %s80
    %s95 = sphi 0, %s81
    %s103 = sphi 0, %s105
    %s106 = sphi 0, %s103
    %s107 = sphi 0, %s106
    %s123 = sphi 0, %s107
  $region4: #{mha_forward.4} parent=0 // loop_header_branch
    %12 = sbr.rel (%p10) target = $region8
  $region5: #{mha_forward.4} parent=0 // loop_body
    %s14 = ssub.s32 %s9, 1
    %s15 = ssub.s32 %s9, 2
    %s22 = sadd.s32 1, %s17
    %p23 = scmp.ge.s32.totalorder %s22, 1
    %s24 = scalar_select %p23, 0, %s22
    %s25 = sadd.s32 1, %s16
    %s26 = scalar_select %p23, %s25, %s16
    %p27 = scmp.ge.s32.totalorder %s26, 2
    %s28 = scalar_select %p27, 0, %s26
    %s29 = ssub.s32 %s16, %s28
    %s30 = ssub.s32 %s17, %s24
    %s31 = sor.u32 %s29, %s30
    %p32 = scmp.eq.s32.totalorder %s31, 0
    %s34 = sadd.s32 %s33, 1
    %s35 = scalar_select %p32, %s33, %s34
    %p38 = pneg %p32
    %p39 = scmp.eq.s32.totalorder %s9, 1
    %p40 = por %p38, %p39
    %p41 = scmp.ne.s32.totalorder %s33, %s36
    %p42 = scmp.eq.s32.totalorder %s9, 0
    %p43 = por %p41, %p42
    %p44 = scmp.ne.s32.totalorder %s33, %s36
    %p45 = scmp.eq.s32.totalorder %s14, 1
    %p46 = por %p44, %p45
    %p47 = scmp.ne.s32.totalorder %s36, %s37
    %p48 = scmp.eq.s32.totalorder %s14, 0
    %p49 = por %p47, %p48
    %p50 = scmp.ne.s32.totalorder %s36, %s37
    %p51 = scmp.eq.s32.totalorder %s15, 1
    %p52 = por %p50, %p51
    %p54 = scmp.ne.s32.totalorder %s37, %s53
    %p55 = scmp.eq.s32.totalorder %s15, 0
    %p56 = por %p54, %p55
    %s58 = sadd.s32 %s57, 1
    %p61 = scmp.eq.s32.totalorder %s9, 1
    %p62 = scmp.ne.s32.totalorder %s57, %s59
    %p63 = scmp.eq.s32.totalorder %s9, 0
    %p64 = por %p62, %p63
    %p65 = scmp.ne.s32.totalorder %s57, %s59
    %p66 = scmp.eq.s32.totalorder %s14, 1
    %p67 = por %p65, %p66
    %p68 = scmp.ne.s32.totalorder %s59, %s60
    %p69 = scmp.eq.s32.totalorder %s14, 0
    %p70 = por %p68, %p69
    %p71 = scmp.ne.s32.totalorder %s59, %s60
    %p72 = scmp.eq.s32.totalorder %s15, 1
    %p73 = por %p71, %p72
    %p75 = scmp.ne.s32.totalorder %s60, %s74
    %p76 = scmp.eq.s32.totalorder %s15, 0
    %p77 = por %p75, %p76
    %s79 = sadd.s32 %s78, 1
    %p82 = scmp.eq.s32.totalorder %s9, 1
    %p83 = scmp.ne.s32.totalorder %s78, %s80
    %p84 = scmp.eq.s32.totalorder %s9, 0
    %p85 = por %p83, %p84
    %p86 = scmp.ne.s32.totalorder %s78, %s80
    %p87 = scmp.eq.s32.totalorder %s14, 1
    %p88 = por %p86, %p87
    %p89 = scmp.ne.s32.totalorder %s80, %s81
    %p90 = scmp.eq.s32.totalorder %s14, 0
    %p91 = por %p89, %p90
    %p92 = scmp.ne.s32.totalorder %s80, %s81
    %p93 = scmp.eq.s32.totalorder %s15, 1
    %p94 = por %p92, %p93
    %p96 = scmp.ne.s32.totalorder %s81, %s95
    %p97 = scmp.eq.s32.totalorder %s15, 0
    %p98 = por %p96, %p97
    %s99 = ssub.s32 %s16, %s28
    %s100 = ssub.s32 %s17, %s24
    %s101 = sor.u32 %s99, %s100
    %p102 = scmp.eq.s32.totalorder %s101, 0
    %s104 = sadd.s32 %s103, 1
    %s105 = scalar_select %p102, %s103, %s104
    %p108 = pneg %p102
    %p109 = scmp.eq.s32.totalorder %s9, 1
    %p110 = por %p108, %p109
    %p111 = scmp.ne.s32.totalorder %s103, %s106
    %p112 = scmp.eq.s32.totalorder %s9, 0
    %p113 = por %p111, %p112
    %p114 = scmp.ne.s32.totalorder %s103, %s106
    %p115 = scmp.eq.s32.totalorder %s14, 1
    %p116 = por %p114, %p115
    %p117 = scmp.ne.s32.totalorder %s106, %s107
    %p118 = scmp.eq.s32.totalorder %s14, 0
    %p119 = por %p117, %p118
    %p120 = scmp.ne.s32.totalorder %s106, %s107
    %p121 = scmp.eq.s32.totalorder %s15, 1
    %p122 = por %p120, %p121
    %p124 = scmp.ne.s32.totalorder %s107, %s123
    %p125 = scmp.eq.s32.totalorder %s15, 0
    %p126 = por %p124, %p125
    %p127 = scmp.le.s32.totalorder 1, %s9
    %p128 = scmp.lt.s32.totalorder %s9, 3
    %p129 = pnand %p127, %p128
    %p130 = pneg %p129
    // Predicated region
    $region9: #{mha_forward.4} parent=5 // pred_check
      _
    $region10: #{mha_forward.4} parent=5 // pred_check_branch
      %132 = sbr.rel (%p129) target = $region12
    $region11: #{mha_forward.4} parent=5 // pred_region
      %s133 = ssub.s32 %s9, 1
      // Predicated region
      $region13: #{mha_forward.4} parent=11 // pred_check
        %p134 = pneg %p70
      $region14: #{mha_forward.4} parent=11 // pred_check_branch
        %136 = sbr.rel (%p134) target = $region16
      $region15: #{mha_forward.4} parent=11 // pred_region
        _
      $region16: #{mha_forward.4} parent=11 // pred_fallthru
        _
      // Predicated region
      $region17: #{mha_forward.4} parent=11 // pred_check
        %p137 = pneg %p91
      $region18: #{mha_forward.4} parent=11 // pred_check_branch
        %139 = sbr.rel (%p137) target = $region20
      $region19: #{mha_forward.4} parent=11 // pred_region
        _
      $region20: #{mha_forward.4} parent=11 // pred_fallthru
        _
    $region12: #{mha_forward.4} parent=5 // pred_fallthru
      _
    %p140 = scmp.lt.s32.totalorder %s9, 2
    // Predicated region
    $region21: #{mha_forward.4} parent=5 // pred_check
      %p141 = pneg %p140
    $region22: #{mha_forward.4} parent=5 // pred_check_branch
      %143 = sbr.rel (%p141) target = $region24
    $region23: #{mha_forward.4} parent=5 // pred_region
      // Predicated region
      $region25: #{mha_forward.4} parent=23 // pred_check
        %p144 = pneg %p43
      $region26: #{mha_forward.4} parent=23 // pred_check_branch
        %146 = sbr.rel (%p144) target = $region28
      $region27: #{mha_forward.4} parent=23 // pred_region
        %p147 = scmp.lt.s32.totalorder %s16, 1
        %s148 = scalar_select %p147, %s16, 1
        %p149 = scmp.lt.s32.totalorder %s17, 0
        %s150 = scalar_select %p149, %s17, 0
        %s151 = smul.addr %s148, 48
        %s152 = sadd.s32 %s150, %s151
        %s153 = smul.addr %s152, 4
        %s154 = scalar_lea.vmem %s0, %s153
      $region28: #{mha_forward.4} parent=23 // pred_fallthru
        _
    $region24: #{mha_forward.4} parent=5 // pred_fallthru
      _
    %p155 = scmp.le.s32.totalorder 1, %s9
    %p156 = scmp.lt.s32.totalorder %s9, 3
    %p157 = pnand %p155, %p156
    %p158 = pneg %p157
    // Predicated region
    $region29: #{mha_forward.4} parent=5 // pred_check
      _
    $region30: #{mha_forward.4} parent=5 // pred_check_branch
      %160 = sbr.rel (%p157) target = $region32
    $region31: #{mha_forward.4} parent=5 // pred_region
      %s161 = ssub.s32 %s9, 1
      %p162 = scmp.lt.s32.totalorder %s18, 1
      %s163 = scalar_select %p162, %s18, 1
      %p164 = scmp.lt.s32.totalorder %s19, 0
      %s165 = scalar_select %p164, %s19, 0
      %s166 = smul.addr %s163, 48
      %s167 = sadd.s32 %s165, %s166
      %s168 = smul.addr %s167, 4
      %s169 = scalar_lea.vmem %s0, %s168
      %p170 = pneg %p49
      %p171 = pneg %p46
      %p172 = pneg %p70
      %p173 = pneg %p67
      %p174 = pneg %p91
      %p175 = pneg %p88
      %p176 = pneg %p119
      %p177 = pneg %p116
      %p178 = scmp.lt.s32.totalorder %s18, 1
      %s179 = scalar_select %p178, %s18, 1
      %p180 = scmp.lt.s32.totalorder %s19, 0
      %s181 = scalar_select %p180, %s19, 0
      %s182 = smul.addr %s179, 2
      %s183 = sadd.s32 %s181, %s182
      %s184 = smul.addr %s183, 8
      %s185 = scalar_lea.vmem %s3, %s184
      %p186 = scmp.lt.s32.totalorder %s18, 1
      %s187 = scalar_select %p186, %s18, 1
      %p188 = scmp.lt.s32.totalorder %s19, 0
      %s189 = scalar_select %p188, %s19, 0
      %s190 = smul.addr %s187, 48
      %s191 = sadd.s32 %s189, %s190
      %s192 = smul.addr %s191, 4
      %s193 = scalar_lea.vmem %s0, %s192
      %p194 = scmp.lt.s32.totalorder %s18, 1
      %s195 = scalar_select %p194, %s18, 1
      %p196 = scmp.lt.s32.totalorder %s19, 0
      %s197 = scalar_select %p196, %s19, 0
      %s198 = smul.addr %s195, 2
      %s199 = sadd.s32 %s197, %s198
      %s200 = smul.addr %s199, 8
      %s201 = scalar_lea.vmem %s3, %s200
      %v202 = vld [vmem:[%s1] sm:$0xff]
      %v203 = vld [vmem:[%s1 + $0x8] sm:$0xff]
      %v204 = vld [vmem:[%s2] sm:$0xff]
      %v205 = vld [vmem:[%s2 + $0x8] sm:$0xff]
      %v206 = vld [vmem:[%s193] sm:$0x1]
      %v207 = vld [vmem:[%s193 + $0xc] sm:$0x1]
      %v208 = vld [vmem:[%s193 + $0x18] sm:$0x1]
      %v209 = vld [vmem:[%s193 + $0x24] sm:$0x1]
      %v210 = vld [vmem:[%s193 + $0x30] sm:$0x1]
      %v211 = vld [vmem:[%s193 + $0x3c] sm:$0x1]
      %v212 = vld [vmem:[%s193 + $0x48] sm:$0x1]
      %v213 = vld [vmem:[%s193 + $0x54] sm:$0x1]
      %v214 = vld [vmem:[%s193 + $0x60] sm:$0x1]
      %v215 = vld [vmem:[%s193 + $0x6c] sm:$0x1]
      %v216 = vld [vmem:[%s193 + $0x78] sm:$0x1]
      %v217 = vld [vmem:[%s193 + $0x84] sm:$0x1]
      %v218 = vld [vmem:[%s193 + $0x90] sm:$0x1]
      %v219 = vld [vmem:[%s193 + $0x9c] sm:$0x1]
      %v220 = vld [vmem:[%s193 + $0xa8] sm:$0x1]
      %v221 = vld [vmem:[%s193 + $0xb4] sm:$0x1]
      %v224 = vrot.slane %v202, 1
      %v225 = vrot.slane %v202, 2
      %v226 = vrot.slane %v202, 3
      %v227 = vrot.slane %v202, 4
      %v228 = vrot.slane %v202, 5
      %v229 = vrot.slane %v202, 6
      %v230 = vrot.slane %v202, 7
      %v231 = vrot.slane %v203, 1
      %v232 = vrot.slane %v203, 2
      %v233 = vrot.slane %v203, 3
      %v234 = vrot.slane %v203, 4
      %v235 = vrot.slane %v203, 5
      %v236 = vrot.slane %v203, 6
      %v237 = vrot.slane %v203, 7
      %v254 = vmul.f32 %v206, %v202
      %v255 = vmul.f32 %v207, %v224
      %v256 = vmul.f32 %v208, %v225
      %v257 = vmul.f32 %v209, %v226
      %v258 = vmul.f32 %v210, %v227
      %v259 = vmul.f32 %v211, %v228
      %v260 = vmul.f32 %v212, %v229
      %v261 = vmul.f32 %v213, %v230
      %v262 = vmul.f32 %v214, %v203
      %v263 = vmul.f32 %v215, %v231
      %v264 = vmul.f32 %v216, %v232
      %v265 = vmul.f32 %v217, %v233
      %v266 = vmul.f32 %v218, %v234
      %v267 = vmul.f32 %v219, %v235
      %v268 = vmul.f32 %v220, %v236
      %v269 = vmul.f32 %v221, %v237
      %v272 = vrot.slane %v204, 1
      %v273 = vrot.slane %v204, 2
      %v274 = vrot.slane %v204, 3
      %v275 = vrot.slane %v204, 4
      %v276 = vrot.slane %v204, 5
      %v277 = vrot.slane %v204, 6
      %v278 = vrot.slane %v204, 7
      %v279 = vrot.slane %v205, 1
      %v280 = vrot.slane %v205, 2
      %v281 = vrot.slane %v205, 3
      %v282 = vrot.slane %v205, 4
      %v283 = vrot.slane %v205, 5
      %v284 = vrot.slane %v205, 6
      %v285 = vrot.slane %v205, 7
      %286 = vrot.lane.b32.xlu0 %v204, 4
      %v287 = vpop.permute.xlu0 %286
      %288 = vrot.lane.b32.xlu0 %v272, 4
      %v289 = vpop.permute.xlu0 %288
      %290 = vrot.lane.b32.xlu0 %v273, 4
      %v291 = vpop.permute.xlu0 %290
      %292 = vrot.lane.b32.xlu0 %v274, 4
      %v293 = vpop.permute.xlu0 %292
      %294 = vrot.lane.b32.xlu0 %v275, 4
      %v295 = vpop.permute.xlu0 %294
      %296 = vrot.lane.b32.xlu0 %v276, 4
      %v297 = vpop.permute.xlu0 %296
      %298 = vrot.lane.b32.xlu0 %v277, 4
      %v299 = vpop.permute.xlu0 %298
      %300 = vrot.lane.b32.xlu0 %v278, 4
      %v301 = vpop.permute.xlu0 %300
      %302 = vrot.lane.b32.xlu0 %v205, 4
      %v303 = vpop.permute.xlu0 %302
      %304 = vrot.lane.b32.xlu0 %v279, 4
      %v305 = vpop.permute.xlu0 %304
      %306 = vrot.lane.b32.xlu0 %v280, 4
      %v307 = vpop.permute.xlu0 %306
      %308 = vrot.lane.b32.xlu0 %v281, 4
      %v309 = vpop.permute.xlu0 %308
      %310 = vrot.lane.b32.xlu0 %v282, 4
      %v311 = vpop.permute.xlu0 %310
      %312 = vrot.lane.b32.xlu0 %v283, 4
      %v313 = vpop.permute.xlu0 %312
      %314 = vrot.lane.b32.xlu0 %v284, 4
      %v315 = vpop.permute.xlu0 %314
      %316 = vrot.lane.b32.xlu0 %v285, 4
      %v317 = vpop.permute.xlu0 %316
      %v334 = vmul.f32 %v206, %v287
      %v335 = vmul.f32 %v207, %v289
      %v336 = vmul.f32 %v208, %v291
      %v337 = vmul.f32 %v209, %v293
      %v338 = vmul.f32 %v210, %v295
      %v339 = vmul.f32 %v211, %v297
      %v340 = vmul.f32 %v212, %v299
      %v341 = vmul.f32 %v213, %v301
      %v342 = vmul.f32 %v214, %v303
      %v343 = vmul.f32 %v215, %v305
      %v344 = vmul.f32 %v216, %v307
      %v345 = vmul.f32 %v217, %v309
      %v346 = vmul.f32 %v218, %v311
      %v347 = vmul.f32 %v219, %v313
      %v348 = vmul.f32 %v220, %v315
      %v349 = vmul.f32 %v221, %v317
      %366 = vrot.lane.b32.xlu0 %v334, 124
      %v367 = vpop.permute.xlu0 %366
      %368 = vrot.lane.b32.xlu0 %v335, 124
      %v369 = vpop.permute.xlu0 %368
      %370 = vrot.lane.b32.xlu0 %v336, 124
      %v371 = vpop.permute.xlu0 %370
      %372 = vrot.lane.b32.xlu0 %v337, 124
      %v373 = vpop.permute.xlu0 %372
      %374 = vrot.lane.b32.xlu0 %v338, 124
      %v375 = vpop.permute.xlu0 %374
      %376 = vrot.lane.b32.xlu0 %v339, 124
      %v377 = vpop.permute.xlu0 %376
      %378 = vrot.lane.b32.xlu0 %v340, 124
      %v379 = vpop.permute.xlu0 %378
      %380 = vrot.lane.b32.xlu0 %v341, 124
      %v381 = vpop.permute.xlu0 %380
      %382 = vrot.lane.b32.xlu0 %v342, 124
      %v383 = vpop.permute.xlu0 %382
      %384 = vrot.lane.b32.xlu0 %v343, 124
      %v385 = vpop.permute.xlu0 %384
      %386 = vrot.lane.b32.xlu0 %v344, 124
      %v387 = vpop.permute.xlu0 %386
      %388 = vrot.lane.b32.xlu0 %v345, 124
      %v389 = vpop.permute.xlu0 %388
      %390 = vrot.lane.b32.xlu0 %v346, 124
      %v391 = vpop.permute.xlu0 %390
      %392 = vrot.lane.b32.xlu0 %v347, 124
      %v393 = vpop.permute.xlu0 %392
      %394 = vrot.lane.b32.xlu0 %v348, 124
      %v395 = vpop.permute.xlu0 %394
      %396 = vrot.lane.b32.xlu0 %v349, 124
      %v397 = vpop.permute.xlu0 %396
      %v414 = vsub.f32 %v254, %v367
      %v415 = vsub.f32 %v255, %v369
      %v416 = vsub.f32 %v256, %v371
      %v417 = vsub.f32 %v257, %v373
      %v418 = vsub.f32 %v258, %v375
      %v419 = vsub.f32 %v259, %v377
      %v420 = vsub.f32 %v260, %v379
      %v421 = vsub.f32 %v261, %v381
      %v422 = vsub.f32 %v262, %v383
      %v423 = vsub.f32 %v263, %v385
      %v424 = vsub.f32 %v264, %v387
      %v425 = vsub.f32 %v265, %v389
      %v426 = vsub.f32 %v266, %v391
      %v427 = vsub.f32 %v267, %v393
      %v428 = vsub.f32 %v268, %v395
      %v429 = vsub.f32 %v269, %v397
      %430 = vrot.lane.b32.xlu0 %v202, 4
      %v431 = vpop.permute.xlu0 %430
      %432 = vrot.lane.b32.xlu0 %v224, 4
      %v433 = vpop.permute.xlu0 %432
      %434 = vrot.lane.b32.xlu0 %v225, 4
      %v435 = vpop.permute.xlu0 %434
      %436 = vrot.lane.b32.xlu0 %v226, 4
      %v437 = vpop.permute.xlu0 %436
      %438 = vrot.lane.b32.xlu0 %v227, 4
      %v439 = vpop.permute.xlu0 %438
      %440 = vrot.lane.b32.xlu0 %v228, 4
      %v441 = vpop.permute.xlu0 %440
      %442 = vrot.lane.b32.xlu0 %v229, 4
      %v443 = vpop.permute.xlu0 %442
      %444 = vrot.lane.b32.xlu0 %v230, 4
      %v445 = vpop.permute.xlu0 %444
      %446 = vrot.lane.b32.xlu0 %v203, 4
      %v447 = vpop.permute.xlu0 %446
      %448 = vrot.lane.b32.xlu0 %v231, 4
      %v449 = vpop.permute.xlu0 %448
      %450 = vrot.lane.b32.xlu0 %v232, 4
      %v451 = vpop.permute.xlu0 %450
      %452 = vrot.lane.b32.xlu0 %v233, 4
      %v453 = vpop.permute.xlu0 %452
      %454 = vrot.lane.b32.xlu0 %v234, 4
      %v455 = vpop.permute.xlu0 %454
      %456 = vrot.lane.b32.xlu0 %v235, 4
      %v457 = vpop.permute.xlu0 %456
      %458 = vrot.lane.b32.xlu0 %v236, 4
      %v459 = vpop.permute.xlu0 %458
      %460 = vrot.lane.b32.xlu0 %v237, 4
      %v461 = vpop.permute.xlu0 %460
      %v478 = vmul.f32 %v206, %v431
      %v479 = vmul.f32 %v207, %v433
      %v480 = vmul.f32 %v208, %v435
      %v481 = vmul.f32 %v209, %v437
      %v482 = vmul.f32 %v210, %v439
      %v483 = vmul.f32 %v211, %v441
      %v484 = vmul.f32 %v212, %v443
      %v485 = vmul.f32 %v213, %v445
      %v486 = vmul.f32 %v214, %v447
      %v487 = vmul.f32 %v215, %v449
      %v488 = vmul.f32 %v216, %v451
      %v489 = vmul.f32 %v217, %v453
      %v490 = vmul.f32 %v218, %v455
      %v491 = vmul.f32 %v219, %v457
      %v492 = vmul.f32 %v220, %v459
      %v493 = vmul.f32 %v221, %v461
      %v510 = vmul.f32 %v206, %v204
      %v511 = vmul.f32 %v207, %v272
      %v512 = vmul.f32 %v208, %v273
      %v513 = vmul.f32 %v209, %v274
      %v514 = vmul.f32 %v210, %v275
      %v515 = vmul.f32 %v211, %v276
      %v516 = vmul.f32 %v212, %v277
      %v517 = vmul.f32 %v213, %v278
      %v518 = vmul.f32 %v214, %v205
      %v519 = vmul.f32 %v215, %v279
      %v520 = vmul.f32 %v216, %v280
      %v521 = vmul.f32 %v217, %v281
      %v522 = vmul.f32 %v218, %v282
      %v523 = vmul.f32 %v219, %v283
      %v524 = vmul.f32 %v220, %v284
      %v525 = vmul.f32 %v221, %v285
      %542 = vrot.lane.b32.xlu0 %v510, 4
      %v543 = vpop.permute.xlu0 %542
      %544 = vrot.lane.b32.xlu0 %v511, 4
      %v545 = vpop.permute.xlu0 %544
      %546 = vrot.lane.b32.xlu0 %v512, 4
      %v547 = vpop.permute.xlu0 %546
      %548 = vrot.lane.b32.xlu0 %v513, 4
      %v549 = vpop.permute.xlu0 %548
      %550 = vrot.lane.b32.xlu0 %v514, 4
      %v551 = vpop.permute.xlu0 %550
      %552 = vrot.lane.b32.xlu0 %v515, 4
      %v553 = vpop.permute.xlu0 %552
      %554 = vrot.lane.b32.xlu0 %v516, 4
      %v555 = vpop.permute.xlu0 %554
      %556 = vrot.lane.b32.xlu0 %v517, 4
      %v557 = vpop.permute.xlu0 %556
      %558 = vrot.lane.b32.xlu0 %v518, 4
      %v559 = vpop.permute.xlu0 %558
      %560 = vrot.lane.b32.xlu0 %v519, 4
      %v561 = vpop.permute.xlu0 %560
      %562 = vrot.lane.b32.xlu0 %v520, 4
      %v563 = vpop.permute.xlu0 %562
      %564 = vrot.lane.b32.xlu0 %v521, 4
      %v565 = vpop.permute.xlu0 %564
      %566 = vrot.lane.b32.xlu0 %v522, 4
      %v567 = vpop.permute.xlu0 %566
      %568 = vrot.lane.b32.xlu0 %v523, 4
      %v569 = vpop.permute.xlu0 %568
      %570 = vrot.lane.b32.xlu0 %v524, 4
      %v571 = vpop.permute.xlu0 %570
      %572 = vrot.lane.b32.xlu0 %v525, 4
      %v573 = vpop.permute.xlu0 %572
      %v590 = vadd.f32 %v478, %v543
      %v591 = vadd.f32 %v479, %v545
      %v592 = vadd.f32 %v480, %v547
      %v593 = vadd.f32 %v481, %v549
      %v594 = vadd.f32 %v482, %v551
      %v595 = vadd.f32 %v483, %v553
      %v596 = vadd.f32 %v484, %v555
      %v597 = vadd.f32 %v485, %v557
      %v598 = vadd.f32 %v486, %v559
      %v599 = vadd.f32 %v487, %v561
      %v600 = vadd.f32 %v488, %v563
      %v601 = vadd.f32 %v489, %v565
      %v602 = vadd.f32 %v490, %v567
      %v603 = vadd.f32 %v491, %v569
      %v604 = vadd.f32 %v492, %v571
      %v605 = vadd.f32 %v493, %v573
      %v622 = vrot.slane %v415, 7
      %vm623 = vcmask 1041409
      %v624 = vsel %vm623, %v622, %v414
      %v625 = vrot.slane %v416, 6
      %vm626 = vcmask 1042434
      %v627 = vsel %vm626, %v625, %v624
      %v628 = vrot.slane %v417, 5
      %vm629 = vcmask 1043459
      %v630 = vsel %vm629, %v628, %v627
      %v631 = vrot.slane %v418, 4
      %vm632 = vcmask 1044484
      %v633 = vsel %vm632, %v631, %v630
      %v634 = vrot.slane %v419, 3
      %vm635 = vcmask 1045509
      %v636 = vsel %vm635, %v634, %v633
      %v637 = vrot.slane %v420, 2
      %vm638 = vcmask 1046534
      %v639 = vsel %vm638, %v637, %v636
      %v640 = vrot.slane %v421, 1
      %vm641 = vcmask 1047559
      %v642 = vsel %vm641, %v640, %v639
      %v643 = vrot.slane %v423, 7
      %v644 = vsel %vm623, %v643, %v422
      %v645 = vrot.slane %v424, 6
      %v646 = vsel %vm626, %v645, %v644
      %v647 = vrot.slane %v425, 5
      %v648 = vsel %vm629, %v647, %v646
      %v649 = vrot.slane %v426, 4
      %v650 = vsel %vm632, %v649, %v648
      %v651 = vrot.slane %v427, 3
      %v652 = vsel %vm635, %v651, %v650
      %v653 = vrot.slane %v428, 2
      %v654 = vsel %vm638, %v653, %v652
      %v655 = vrot.slane %v429, 1
      %v656 = vsel %vm641, %v655, %v654
      %v675 = vrot.slane %v591, 7
      %v676 = vsel %vm623, %v675, %v590
      %v677 = vrot.slane %v592, 6
      %v678 = vsel %vm626, %v677, %v676
      %v679 = vrot.slane %v593, 5
      %v680 = vsel %vm629, %v679, %v678
      %v681 = vrot.slane %v594, 4
      %v682 = vsel %vm632, %v681, %v680
      %v683 = vrot.slane %v595, 3
      %v684 = vsel %vm635, %v683, %v682
      %v685 = vrot.slane %v596, 2
      %v686 = vsel %vm638, %v685, %v684
      %v687 = vrot.slane %v597, 1
      %v688 = vsel %vm641, %v687, %v686
      %v689 = vrot.slane %v599, 7
      %v690 = vsel %vm623, %v689, %v598
      %v691 = vrot.slane %v600, 6
      %v692 = vsel %vm626, %v691, %v690
      %v693 = vrot.slane %v601, 5
      %v694 = vsel %vm629, %v693, %v692
      %v695 = vrot.slane %v602, 4
      %v696 = vsel %vm632, %v695, %v694
      %v697 = vrot.slane %v603, 3
      %v698 = vsel %vm635, %v697, %v696
      %v699 = vrot.slane %v604, 2
      %v700 = vsel %vm638, %v699, %v698
      %v701 = vrot.slane %v605, 1
      %v702 = vsel %vm641, %v701, %v700
      %vm705 = vcmask 31744
      %v706 = vsel %vm705, %v642, %v688
      %v707 = vsel %vm705, %v656, %v702
      %v708 = vmul.f32 %v706, 0.35355338
      %v709 = vmul.f32 %v707, 0.35355338
      %s710 = scalar_lea.vmem %s193, 4
      %v711 = vld [vmem:[%s710] sm:$0x1]
      %v712 = vld [vmem:[%s710 + $0xc] sm:$0x1]
      %v713 = vld [vmem:[%s710 + $0x18] sm:$0x1]
      %v714 = vld [vmem:[%s710 + $0x24] sm:$0x1]
      %v715 = vld [vmem:[%s710 + $0x30] sm:$0x1]
      %v716 = vld [vmem:[%s710 + $0x3c] sm:$0x1]
      %v717 = vld [vmem:[%s710 + $0x48] sm:$0x1]
      %v718 = vld [vmem:[%s710 + $0x54] sm:$0x1]
      %v719 = vld [vmem:[%s710 + $0x60] sm:$0x1]
      %v720 = vld [vmem:[%s710 + $0x6c] sm:$0x1]
      %v721 = vld [vmem:[%s710 + $0x78] sm:$0x1]
      %v722 = vld [vmem:[%s710 + $0x84] sm:$0x1]
      %v723 = vld [vmem:[%s710 + $0x90] sm:$0x1]
      %v724 = vld [vmem:[%s710 + $0x9c] sm:$0x1]
      %v725 = vld [vmem:[%s710 + $0xa8] sm:$0x1]
      %v726 = vld [vmem:[%s710 + $0xb4] sm:$0x1]
      %v727 = vmul.f32 %v711, %v202
      %v728 = vmul.f32 %v712, %v224
      %v729 = vmul.f32 %v713, %v225
      %v730 = vmul.f32 %v714, %v226
      %v731 = vmul.f32 %v715, %v227
      %v732 = vmul.f32 %v716, %v228
      %v733 = vmul.f32 %v717, %v229
      %v734 = vmul.f32 %v718, %v230
      %v735 = vmul.f32 %v719, %v203
      %v736 = vmul.f32 %v720, %v231
      %v737 = vmul.f32 %v721, %v232
      %v738 = vmul.f32 %v722, %v233
      %v739 = vmul.f32 %v723, %v234
      %v740 = vmul.f32 %v724, %v235
      %v741 = vmul.f32 %v725, %v236
      %v742 = vmul.f32 %v726, %v237
      %v743 = vmul.f32 %v711, %v287
      %v744 = vmul.f32 %v712, %v289
      %v745 = vmul.f32 %v713, %v291
      %v746 = vmul.f32 %v714, %v293
      %v747 = vmul.f32 %v715, %v295
      %v748 = vmul.f32 %v716, %v297
      %v749 = vmul.f32 %v717, %v299
      %v750 = vmul.f32 %v718, %v301
      %v751 = vmul.f32 %v719, %v303
      %v752 = vmul.f32 %v720, %v305
      %v753 = vmul.f32 %v721, %v307
      %v754 = vmul.f32 %v722, %v309
      %v755 = vmul.f32 %v723, %v311
      %v756 = vmul.f32 %v724, %v313
      %v757 = vmul.f32 %v725, %v315
      %v758 = vmul.f32 %v726, %v317
      %775 = vrot.lane.b32.xlu0 %v743, 124
      %v776 = vpop.permute.xlu0 %775
      %777 = vrot.lane.b32.xlu0 %v744, 124
      %v778 = vpop.permute.xlu0 %777
      %779 = vrot.lane.b32.xlu0 %v745, 124
      %v780 = vpop.permute.xlu0 %779
      %781 = vrot.lane.b32.xlu0 %v746, 124
      %v782 = vpop.permute.xlu0 %781
      %783 = vrot.lane.b32.xlu0 %v747, 124
      %v784 = vpop.permute.xlu0 %783
      %785 = vrot.lane.b32.xlu0 %v748, 124
      %v786 = vpop.permute.xlu0 %785
      %787 = vrot.lane.b32.xlu0 %v749, 124
      %v788 = vpop.permute.xlu0 %787
      %789 = vrot.lane.b32.xlu0 %v750, 124
      %v790 = vpop.permute.xlu0 %789
      %791 = vrot.lane.b32.xlu0 %v751, 124
      %v792 = vpop.permute.xlu0 %791
      %793 = vrot.lane.b32.xlu0 %v752, 124
      %v794 = vpop.permute.xlu0 %793
      %795 = vrot.lane.b32.xlu0 %v753, 124
      %v796 = vpop.permute.xlu0 %795
      %797 = vrot.lane.b32.xlu0 %v754, 124
      %v798 = vpop.permute.xlu0 %797
      %799 = vrot.lane.b32.xlu0 %v755, 124
      %v800 = vpop.permute.xlu0 %799
      %801 = vrot.lane.b32.xlu0 %v756, 124
      %v802 = vpop.permute.xlu0 %801
      %803 = vrot.lane.b32.xlu0 %v757, 124
      %v804 = vpop.permute.xlu0 %803
      %805 = vrot.lane.b32.xlu0 %v758, 124
      %v806 = vpop.permute.xlu0 %805
      %v823 = vsub.f32 %v727, %v776
      %v824 = vsub.f32 %v728, %v778
      %v825 = vsub.f32 %v729, %v780
      %v826 = vsub.f32 %v730, %v782
      %v827 = vsub.f32 %v731, %v784
      %v828 = vsub.f32 %v732, %v786
      %v829 = vsub.f32 %v733, %v788
      %v830 = vsub.f32 %v734, %v790
      %v831 = vsub.f32 %v735, %v792
      %v832 = vsub.f32 %v736, %v794
      %v833 = vsub.f32 %v737, %v796
      %v834 = vsub.f32 %v738, %v798
      %v835 = vsub.f32 %v739, %v800
      %v836 = vsub.f32 %v740, %v802
      %v837 = vsub.f32 %v741, %v804
      %v838 = vsub.f32 %v742, %v806
      %v839 = vmul.f32 %v711, %v431
      %v840 = vmul.f32 %v712, %v433
      %v841 = vmul.f32 %v713, %v435
      %v842 = vmul.f32 %v714, %v437
      %v843 = vmul.f32 %v715, %v439
      %v844 = vmul.f32 %v716, %v441
      %v845 = vmul.f32 %v717, %v443
      %v846 = vmul.f32 %v718, %v445
      %v847 = vmul.f32 %v719, %v447
      %v848 = vmul.f32 %v720, %v449
      %v849 = vmul.f32 %v721, %v451
      %v850 = vmul.f32 %v722, %v453
      %v851 = vmul.f32 %v723, %v455
      %v852 = vmul.f32 %v724, %v457
      %v853 = vmul.f32 %v725, %v459
      %v854 = vmul.f32 %v726, %v461
      %v855 = vmul.f32 %v711, %v204
      %v856 = vmul.f32 %v712, %v272
      %v857 = vmul.f32 %v713, %v273
      %v858 = vmul.f32 %v714, %v274
      %v859 = vmul.f32 %v715, %v275
      %v860 = vmul.f32 %v716, %v276
      %v861 = vmul.f32 %v717, %v277
      %v862 = vmul.f32 %v718, %v278
      %v863 = vmul.f32 %v719, %v205
      %v864 = vmul.f32 %v720, %v279
      %v865 = vmul.f32 %v721, %v280
      %v866 = vmul.f32 %v722, %v281
      %v867 = vmul.f32 %v723, %v282
      %v868 = vmul.f32 %v724, %v283
      %v869 = vmul.f32 %v725, %v284
      %v870 = vmul.f32 %v726, %v285
      %887 = vrot.lane.b32.xlu0 %v855, 4
      %v888 = vpop.permute.xlu0 %887
      %889 = vrot.lane.b32.xlu0 %v856, 4
      %v890 = vpop.permute.xlu0 %889
      %891 = vrot.lane.b32.xlu0 %v857, 4
      %v892 = vpop.permute.xlu0 %891
      %893 = vrot.lane.b32.xlu0 %v858, 4
      %v894 = vpop.permute.xlu0 %893
      %895 = vrot.lane.b32.xlu0 %v859, 4
      %v896 = vpop.permute.xlu0 %895
      %897 = vrot.lane.b32.xlu0 %v860, 4
      %v898 = vpop.permute.xlu0 %897
      %899 = vrot.lane.b32.xlu0 %v861, 4
      %v900 = vpop.permute.xlu0 %899
      %901 = vrot.lane.b32.xlu0 %v862, 4
      %v902 = vpop.permute.xlu0 %901
      %903 = vrot.lane.b32.xlu0 %v863, 4
      %v904 = vpop.permute.xlu0 %903
      %905 = vrot.lane.b32.xlu0 %v864, 4
      %v906 = vpop.permute.xlu0 %905
      %907 = vrot.lane.b32.xlu0 %v865, 4
      %v908 = vpop.permute.xlu0 %907
      %909 = vrot.lane.b32.xlu0 %v866, 4
      %v910 = vpop.permute.xlu0 %909
      %911 = vrot.lane.b32.xlu0 %v867, 4
      %v912 = vpop.permute.xlu0 %911
      %913 = vrot.lane.b32.xlu0 %v868, 4
      %v914 = vpop.permute.xlu0 %913
      %915 = vrot.lane.b32.xlu0 %v869, 4
      %v916 = vpop.permute.xlu0 %915
      %917 = vrot.lane.b32.xlu0 %v870, 4
      %v918 = vpop.permute.xlu0 %917
      %v935 = vadd.f32 %v839, %v888
      %v936 = vadd.f32 %v840, %v890
      %v937 = vadd.f32 %v841, %v892
      %v938 = vadd.f32 %v842, %v894
      %v939 = vadd.f32 %v843, %v896
      %v940 = vadd.f32 %v844, %v898
      %v941 = vadd.f32 %v845, %v900
      %v942 = vadd.f32 %v846, %v902
      %v943 = vadd.f32 %v847, %v904
      %v944 = vadd.f32 %v848, %v906
      %v945 = vadd.f32 %v849, %v908
      %v946 = vadd.f32 %v850, %v910
      %v947 = vadd.f32 %v851, %v912
      %v948 = vadd.f32 %v852, %v914
      %v949 = vadd.f32 %v853, %v916
      %v950 = vadd.f32 %v854, %v918
      %v967 = vrot.slane %v824, 7
      %v968 = vsel %vm623, %v967, %v823
      %v969 = vrot.slane %v825, 6
      %v970 = vsel %vm626, %v969, %v968
      %v971 = vrot.slane %v826, 5
      %v972 = vsel %vm629, %v971, %v970
      %v973 = vrot.slane %v827, 4
      %v974 = vsel %vm632, %v973, %v972
      %v975 = vrot.slane %v828, 3
      %v976 = vsel %vm635, %v975, %v974
      %v977 = vrot.slane %v829, 2
      %v978 = vsel %vm638, %v977, %v976
      %v979 = vrot.slane %v830, 1
      %v980 = vsel %vm641, %v979, %v978
      %v981 = vrot.slane %v832, 7
      %v982 = vsel %vm623, %v981, %v831
      %v983 = vrot.slane %v833, 6
      %v984 = vsel %vm626, %v983, %v982
      %v985 = vrot.slane %v834, 5
      %v986 = vsel %vm629, %v985, %v984
      %v987 = vrot.slane %v835, 4
      %v988 = vsel %vm632, %v987, %v986
      %v989 = vrot.slane %v836, 3
      %v990 = vsel %vm635, %v989, %v988
      %v991 = vrot.slane %v837, 2
      %v992 = vsel %vm638, %v991, %v990
      %v993 = vrot.slane %v838, 1
      %v994 = vsel %vm641, %v993, %v992
      %v1013 = vrot.slane %v936, 7
      %v1014 = vsel %vm623, %v1013, %v935
      %v1015 = vrot.slane %v937, 6
      %v1016 = vsel %vm626, %v1015, %v1014
      %v1017 = vrot.slane %v938, 5
      %v1018 = vsel %vm629, %v1017, %v1016
      %v1019 = vrot.slane %v939, 4
      %v1020 = vsel %vm632, %v1019, %v1018
      %v1021 = vrot.slane %v940, 3
      %v1022 = vsel %vm635, %v1021, %v1020
      %v1023 = vrot.slane %v941, 2
      %v1024 = vsel %vm638, %v1023, %v1022
      %v1025 = vrot.slane %v942, 1
      %v1026 = vsel %vm641, %v1025, %v1024
      %v1027 = vrot.slane %v944, 7
      %v1028 = vsel %vm623, %v1027, %v943
      %v1029 = vrot.slane %v945, 6
      %v1030 = vsel %vm626, %v1029, %v1028
      %v1031 = vrot.slane %v946, 5
      %v1032 = vsel %vm629, %v1031, %v1030
      %v1033 = vrot.slane %v947, 4
      %v1034 = vsel %vm632, %v1033, %v1032
      %v1035 = vrot.slane %v948, 3
      %v1036 = vsel %vm635, %v1035, %v1034
      %v1037 = vrot.slane %v949, 2
      %v1038 = vsel %vm638, %v1037, %v1036
      %v1039 = vrot.slane %v950, 1
      %v1040 = vsel %vm641, %v1039, %v1038
      %v1043 = vsel %vm705, %v980, %v1026
      %v1044 = vsel %vm705, %v994, %v1040
      %s1045 = scalar_lea.vmem %s193, 8
      %v1046 = vld [vmem:[%s1045] sm:$0x1]
      %v1047 = vld [vmem:[%s1045 + $0xc] sm:$0x1]
      %v1048 = vld [vmem:[%s1045 + $0x18] sm:$0x1]
      %v1049 = vld [vmem:[%s1045 + $0x24] sm:$0x1]
      %v1050 = vld [vmem:[%s1045 + $0x30] sm:$0x1]
      %v1051 = vld [vmem:[%s1045 + $0x3c] sm:$0x1]
      %v1052 = vld [vmem:[%s1045 + $0x48] sm:$0x1]
      %v1053 = vld [vmem:[%s1045 + $0x54] sm:$0x1]
      %v1054 = vld [vmem:[%s1045 + $0x60] sm:$0x1]
      %v1055 = vld [vmem:[%s1045 + $0x6c] sm:$0x1]
      %v1056 = vld [vmem:[%s1045 + $0x78] sm:$0x1]
      %v1057 = vld [vmem:[%s1045 + $0x84] sm:$0x1]
      %v1058 = vld [vmem:[%s1045 + $0x90] sm:$0x1]
      %v1059 = vld [vmem:[%s1045 + $0x9c] sm:$0x1]
      %v1060 = vld [vmem:[%s1045 + $0xa8] sm:$0x1]
      %v1061 = vld [vmem:[%s1045 + $0xb4] sm:$0x1]
      %vm1062 = vcmask 64512
      %v1064 = vsel %vm1062, %v708, 0
      %v1067 = vsel %vm1062, %v709, 0
      %v1070 = vsel %vm1062, %v1043, 0
      %v1073 = vsel %vm1062, %v1044, 0
      %1075 = vmatprep.subr.mxu0 0.0
      %1076 = vmatpush1.xpose.msra.mxu0 %v1070
      %1077 = vmatprep.subr.mxu0 0.0
      %1078 = vmatpush1.xpose.msra.mxu0 %v1073
      %1079 = vmatprep.subr.mxu0 0.0
      %1080 = vmatpush1.xpose.msra.mxu0 0.0
      %1081 = vmatprep.subr.mxu0 0.0
      %1082 = vmatpush1.xpose.msra.mxu0 0.0
      %1083 = vmatprep.subr.mxu0 0.0
      %1084 = vmatpush1.xpose.msra.mxu0 0.0
      %1085 = vmatprep.subr.mxu0 0.0
      %1086 = vmatpush1.xpose.msra.mxu0 0.0
      %1087 = vmatprep.subr.mxu0 0.0
      %1088 = vmatpush1.xpose.msra.mxu0 0.0
      %1089 = vmatprep.subr.mxu0 0.0
      %1090 = vmatpush1.xpose.msra.mxu0 0.0
      %1091 = vmatprep.subr.mxu0 0.0
      %1092 = vmatpush1.xpose.msra.mxu0 0.0
      %1093 = vmatprep.subr.mxu0 0.0
      %1094 = vmatpush1.xpose.msra.mxu0 0.0
      %1095 = vmatprep.subr.mxu0 0.0
      %1096 = vmatpush1.xpose.msra.mxu0 0.0
      %1097 = vmatprep.subr.mxu0 0.0
      %1098 = vmatpush1.xpose.msra.mxu0 0.0
      %1099 = vmatprep.subr.mxu0 0.0
      %1100 = vmatpush1.xpose.msra.mxu0 0.0
      %1101 = vmatprep.subr.mxu0 0.0
      %1102 = vmatpush1.xpose.msra.mxu0 0.0
      %1103 = vmatprep.subr.mxu0 0.0
      %1104 = vmatpush1.xpose.msra.mxu0 0.0
      %1105 = vmatprep.subr.mxu0 0.0
      %1106 = vmatpush1.xpose.msra.mxu0 0.0
      %1107 = vmatprep.subr.mxu0 0.0
      %1108 = vmatpush1.xpose.msra.mxu0 0.0
      %1109 = vmatprep.subr.mxu0 0.0
      %1110 = vmatpush1.xpose.msra.mxu0 0.0
      %1111 = vmatprep.subr.mxu0 0.0
      %1112 = vmatpush1.xpose.msra.mxu0 0.0
      %1113 = vmatprep.subr.mxu0 0.0
      %1114 = vmatpush1.xpose.msra.mxu0 0.0
      %1115 = vmatprep.subr.mxu0 0.0
      %1116 = vmatpush1.xpose.msra.mxu0 0.0
      %1117 = vmatprep.subr.mxu0 0.0
      %1118 = vmatpush1.xpose.msra.mxu0 0.0
      %1119 = vmatprep.subr.mxu0 0.0
      %1120 = vmatpush1.xpose.msra.mxu0 0.0
      %1121 = vmatprep.subr.mxu0 0.0
      %1122 = vmatpush1.xpose.msra.mxu0 0.0
      %1123 = vmatprep.subr.mxu0 0.0
      %1124 = vmatpush1.xpose.msra.mxu0 0.0
      %1125 = vmatprep.subr.mxu0 0.0
      %1126 = vmatpush1.xpose.msra.mxu0 0.0
      %1127 = vmatprep.subr.mxu0 0.0
      %1128 = vmatpush1.xpose.msra.mxu0 0.0
      %1129 = vmatprep.subr.mxu0 0.0
      %1130 = vmatpush1.xpose.msra.mxu0 0.0
      %1131 = vmatprep.subr.mxu0 0.0
      %1132 = vmatpush1.xpose.msra.mxu0 0.0
      %1133 = vmatprep.subr.mxu0 0.0
      %1134 = vmatpush1.xpose.msra.mxu0 0.0
      %1135 = vmatprep.subr.mxu0 0.0
      %1136 = vmatpush1.xpose.msra.mxu0 0.0
      %1137 = vmatprep.subr.mxu0 0.0
      %1138 = vmatpush1.xpose.msra.mxu0 0.0
      %1139 = vmatprep.mubr.f32.mxu0 0.0
      %1140 = vmatmul.mubr.f32.gmra.mrb[0].mxu0 %v1064
      %v1141 = vpop.f32.mrb[0].mxu0
      %v1142 = vadd.f32 0.0, %v1141
      %v1143 = vpop.f32.mrb[0].mxu0
      %1144 = vmatprep.mubr.f32.mxu0 0.0
      %1145 = vmatmul.mubr.f32.gmra.mrb[0].mxu0 %v1067
      %v1146 = vpop.f32.mrb[0].mxu0
      %v1147 = vadd.f32 0.0, %v1146
      %v1148 = vpop.f32.mrb[0].mxu0
      %1149 = vdwg.mxu0
      %vm1150 = vcmask 130048
      %v1151 = vsel %vm1150, %v1142, -inf
      %1152 = vmax.xlane.f32.xlu0 %v1151
      %v1153 = vpop.xlane.xlu0 %1152
      %v1154 = vsel %vm1150, %v1147, -inf
      %1155 = vmax.xlane.f32.xlu0 %v1154
      %v1156 = vpop.xlane.xlu0 %1155
      %v1157 = vsub.f32 %v1142, %v1153
      %v1158 = vsub.f32 %v1147, %v1156
      %v1159 = vmul.f32 %v1157, 1.442695
      %v1160 = vpow.pop %v1159
      %v1161 = vmul.f32 %v1158, 1.442695
      %v1162 = vpow.pop %v1161
      %v1163 = vsel %vm1150, %v1160, 0.0
      %1164 = vadd.xlane.f32.xlu0 %v1163
      %v1165 = vpop.xlane.xlu0 %1164
      %v1166 = vsel %vm1150, %v1162, 0.0
      %1167 = vadd.xlane.f32.xlu0 %v1166
      %v1168 = vpop.xlane.xlu0 %1167
      %v1185 = vrot.slane %v1047, 7
      %v1186 = vsel %vm623, %v1185, %v1046
      %v1187 = vrot.slane %v1048, 6
      %v1188 = vsel %vm626, %v1187, %v1186
      %v1189 = vrot.slane %v1049, 5
      %v1190 = vsel %vm629, %v1189, %v1188
      %v1191 = vrot.slane %v1050, 4
      %v1192 = vsel %vm632, %v1191, %v1190
      %v1193 = vrot.slane %v1051, 3
      %v1194 = vsel %vm635, %v1193, %v1192
      %v1195 = vrot.slane %v1052, 2
      %v1196 = vsel %vm638, %v1195, %v1194
      %v1197 = vrot.slane %v1053, 1
      %v1198 = vsel %vm641, %v1197, %v1196
      %v1199 = vrot.slane %v1055, 7
      %v1200 = vsel %vm623, %v1199, %v1054
      %v1201 = vrot.slane %v1056, 6
      %v1202 = vsel %vm626, %v1201, %v1200
      %v1203 = vrot.slane %v1057, 5
      %v1204 = vsel %vm629, %v1203, %v1202
      %v1205 = vrot.slane %v1058, 4
      %v1206 = vsel %vm632, %v1205, %v1204
      %v1207 = vrot.slane %v1059, 3
      %v1208 = vsel %vm635, %v1207, %v1206
      %v1209 = vrot.slane %v1060, 2
      %v1210 = vsel %vm638, %v1209, %v1208
      %v1211 = vrot.slane %v1061, 1
      %v1212 = vsel %vm641, %v1211, %v1210
      %v1216 = vsel %vm1150, %v1160, 0
      %v1219 = vsel %vm1150, %v1162, 0
      %1221 = vmatprep.subr.mxu0 0.0
      %1222 = vmatpush1.msra.mxu0 %v1198
      %1223 = vmatprep.subr.mxu0 0.0
      %1224 = vmatpush1.msra.mxu0 %v1212
      %1225 = vmatprep.subr.mxu0 0.0
      %1226 = vmatpush1.msra.mxu0 0.0
      %1227 = vmatprep.subr.mxu0 0.0
      %1228 = vmatpush1.msra.mxu0 0.0
      %1229 = vmatprep.subr.mxu0 0.0
      %1230 = vmatpush1.msra.mxu0 0.0
      %1231 = vmatprep.subr.mxu0 0.0
      %1232 = vmatpush1.msra.mxu0 0.0
      %1233 = vmatprep.subr.mxu0 0.0
      %1234 = vmatpush1.msra.mxu0 0.0
      %1235 = vmatprep.subr.mxu0 0.0
      %1236 = vmatpush1.msra.mxu0 0.0
      %1237 = vmatprep.subr.mxu0 0.0
      %1238 = vmatpush1.msra.mxu0 0.0
      %1239 = vmatprep.subr.mxu0 0.0
      %1240 = vmatpush1.msra.mxu0 0.0
      %1241 = vmatprep.subr.mxu0 0.0
      %1242 = vmatpush1.msra.mxu0 0.0
      %1243 = vmatprep.subr.mxu0 0.0
      %1244 = vmatpush1.msra.mxu0 0.0
      %1245 = vmatprep.subr.mxu0 0.0
      %1246 = vmatpush1.msra.mxu0 0.0
      %1247 = vmatprep.subr.mxu0 0.0
      %1248 = vmatpush1.msra.mxu0 0.0
      %1249 = vmatprep.subr.mxu0 0.0
      %1250 = vmatpush1.msra.mxu0 0.0
      %1251 = vmatprep.subr.mxu0 0.0
      %1252 = vmatpush1.msra.mxu0 0.0
      %1253 = vmatprep.subr.mxu0 0.0
      %1254 = vmatpush1.msra.mxu0 0.0
      %1255 = vmatprep.subr.mxu0 0.0
      %1256 = vmatpush1.msra.mxu0 0.0
      %1257 = vmatprep.subr.mxu0 0.0
      %1258 = vmatpush1.msra.mxu0 0.0
      %1259 = vmatprep.subr.mxu0 0.0
      %1260 = vmatpush1.msra.mxu0 0.0
      %1261 = vmatprep.subr.mxu0 0.0
      %1262 = vmatpush1.msra.mxu0 0.0
      %1263 = vmatprep.subr.mxu0 0.0
      %1264 = vmatpush1.msra.mxu0 0.0
      %1265 = vmatprep.subr.mxu0 0.0
      %1266 = vmatpush1.msra.mxu0 0.0
      %1267 = vmatprep.subr.mxu0 0.0
      %1268 = vmatpush1.msra.mxu0 0.0
      %1269 = vmatprep.subr.mxu0 0.0
      %1270 = vmatpush1.msra.mxu0 0.0
      %1271 = vmatprep.subr.mxu0 0.0
      %1272 = vmatpush1.msra.mxu0 0.0
      %1273 = vmatprep.subr.mxu0 0.0
      %1274 = vmatpush1.msra.mxu0 0.0
      %1275 = vmatprep.subr.mxu0 0.0
      %1276 = vmatpush1.msra.mxu0 0.0
      %1277 = vmatprep.subr.mxu0 0.0
      %1278 = vmatpush1.msra.mxu0 0.0
      %1279 = vmatprep.subr.mxu0 0.0
      %1280 = vmatpush1.msra.mxu0 0.0
      %1281 = vmatprep.subr.mxu0 0.0
      %1282 = vmatpush1.msra.mxu0 0.0
      %1283 = vmatprep.subr.mxu0 0.0
      %1284 = vmatpush1.msra.mxu0 0.0
      %1285 = vmatprep.mubr.f32.mxu0 0.0
      %1286 = vmatmul.mubr.f32.gmra.mrb[0].mxu0 %v1216
      %v1287 = vpop.f32.mrb[0].mxu0
      %v1288 = vadd.f32 0.0, %v1287
      %v1289 = vpop.f32.mrb[0].mxu0
      %1290 = vmatprep.mubr.f32.mxu0 0.0
      %1291 = vmatmul.mubr.f32.gmra.mrb[0].mxu0 %v1219
      %v1292 = vpop.f32.mrb[0].mxu0
      %v1293 = vadd.f32 0.0, %v1292
      %v1294 = vpop.f32.mrb[0].mxu0
      %1295 = vdwg.mxu0
      %v1296 = vrcp.pop %v1165
      %v1297 = vrcp.pop %v1168
      %v1298 = vmul.f32 %v1288, %v1296
      %v1299 = vmul.f32 %v1293, %v1297
      %v1300 = vld [vmem:[%s193 + $0x1] sm:$0x1]
      %v1301 = vld [vmem:[%s193 + $0xd] sm:$0x1]
      %v1302 = vld [vmem:[%s193 + $0x19] sm:$0x1]
      %v1303 = vld [vmem:[%s193 + $0x25] sm:$0x1]
      %v1304 = vld [vmem:[%s193 + $0x31] sm:$0x1]
      %v1305 = vld [vmem:[%s193 + $0x3d] sm:$0x1]
      %v1306 = vld [vmem:[%s193 + $0x49] sm:$0x1]
      %v1307 = vld [vmem:[%s193 + $0x55] sm:$0x1]
      %v1308 = vld [vmem:[%s193 + $0x61] sm:$0x1]
      %v1309 = vld [vmem:[%s193 + $0x6d] sm:$0x1]
      %v1310 = vld [vmem:[%s193 + $0x79] sm:$0x1]
      %v1311 = vld [vmem:[%s193 + $0x85] sm:$0x1]
      %v1312 = vld [vmem:[%s193 + $0x91] sm:$0x1]
      %v1313 = vld [vmem:[%s193 + $0x9d] sm:$0x1]
      %v1314 = vld [vmem:[%s193 + $0xa9] sm:$0x1]
      %v1315 = vld [vmem:[%s193 + $0xb5] sm:$0x1]
      %v1316 = vmul.f32 %v1300, %v202
      %v1317 = vmul.f32 %v1301, %v224
      %v1318 = vmul.f32 %v1302, %v225
      %v1319 = vmul.f32 %v1303, %v226
      %v1320 = vmul.f32 %v1304, %v227
      %v1321 = vmul.f32 %v1305, %v228
      %v1322 = vmul.f32 %v1306, %v229
      %v1323 = vmul.f32 %v1307, %v230
      %v1324 = vmul.f32 %v1308, %v203
      %v1325 = vmul.f32 %v1309, %v231
      %v1326 = vmul.f32 %v1310, %v232
      %v1327 = vmul.f32 %v1311, %v233
      %v1328 = vmul.f32 %v1312, %v234
      %v1329 = vmul.f32 %v1313, %v235
      %v1330 = vmul.f32 %v1314, %v236
      %v1331 = vmul.f32 %v1315, %v237
      %v1332 = vmul.f32 %v1300, %v287
      %v1333 = vmul.f32 %v1301, %v289
      %v1334 = vmul.f32 %v1302, %v291
      %v1335 = vmul.f32 %v1303, %v293
      %v1336 = vmul.f32 %v1304, %v295
      %v1337 = vmul.f32 %v1305, %v297
      %v1338 = vmul.f32 %v1306, %v299
      %v1339 = vmul.f32 %v1307, %v301
      %v1340 = vmul.f32 %v1308, %v303
      %v1341 = vmul.f32 %v1309, %v305
      %v1342 = vmul.f32 %v1310, %v307
      %v1343 = vmul.f32 %v1311, %v309
      %v1344 = vmul.f32 %v1312, %v311
      %v1345 = vmul.f32 %v1313, %v313
      %v1346 = vmul.f32 %v1314, %v315
      %v1347 = vmul.f32 %v1315, %v317
      %1364 = vrot.lane.b32.xlu0 %v1332, 124
      %v1365 = vpop.permute.xlu0 %1364
      %1366 = vrot.lane.b32.xlu0 %v1333, 124
      %v1367 = vpop.permute.xlu0 %1366
      %1368 = vrot.lane.b32.xlu0 %v1334, 124
      %v1369 = vpop.permute.xlu0 %1368
      %1370 = vrot.lane.b32.xlu0 %v1335, 124
      %v1371 = vpop.permute.xlu0 %1370
      %1372 = vrot.lane.b32.xlu0 %v1336, 124
      %v1373 = vpop.permute.xlu0 %1372
      %1374 = vrot.lane.b32.xlu0 %v1337, 124
      %v1375 = vpop.permute.xlu0 %1374
      %1376 = vrot.lane.b32.xlu0 %v1338, 124
      %v1377 = vpop.permute.xlu0 %1376
      %1378 = vrot.lane.b32.xlu0 %v1339, 124
      %v1379 = vpop.permute.xlu0 %1378
      %1380 = vrot.lane.b32.xlu0 %v1340, 124
      %v1381 = vpop.permute.xlu0 %1380
      %1382 = vrot.lane.b32.xlu0 %v1341, 124
      %v1383 = vpop.permute.xlu0 %1382
      %1384 = vrot.lane.b32.xlu0 %v1342, 124
      %v1385 = vpop.permute.xlu0 %1384
      %1386 = vrot.lane.b32.xlu0 %v1343, 124
      %v1387 = vpop.permute.xlu0 %1386
      %1388 = vrot.lane.b32.xlu0 %v1344, 124
      %v1389 = vpop.permute.xlu0 %1388
      %1390 = vrot.lane.b32.xlu0 %v1345, 124
      %v1391 = vpop.permute.xlu0 %1390
      %1392 = vrot.lane.b32.xlu0 %v1346, 124
      %v1393 = vpop.permute.xlu0 %1392
      %1394 = vrot.lane.b32.xlu0 %v1347, 124
      %v1395 = vpop.permute.xlu0 %1394
      %v1412 = vsub.f32 %v1316, %v1365
      %v1413 = vsub.f32 %v1317, %v1367
      %v1414 = vsub.f32 %v1318, %v1369
      %v1415 = vsub.f32 %v1319, %v1371
      %v1416 = vsub.f32 %v1320, %v1373
      %v1417 = vsub.f32 %v1321, %v1375
      %v1418 = vsub.f32 %v1322, %v1377
      %v1419 = vsub.f32 %v1323, %v1379
      %v1420 = vsub.f32 %v1324, %v1381
      %v1421 = vsub.f32 %v1325, %v1383
      %v1422 = vsub.f32 %v1326, %v1385
      %v1423 = vsub.f32 %v1327, %v1387
      %v1424 = vsub.f32 %v1328, %v1389
      %v1425 = vsub.f32 %v1329, %v1391
      %v1426 = vsub.f32 %v1330, %v1393
      %v1427 = vsub.f32 %v1331, %v1395
      %v1428 = vmul.f32 %v1300, %v431
      %v1429 = vmul.f32 %v1301, %v433
      %v1430 = vmul.f32 %v1302, %v435
      %v1431 = vmul.f32 %v1303, %v437
      %v1432 = vmul.f32 %v1304, %v439
      %v1433 = vmul.f32 %v1305, %v441
      %v1434 = vmul.f32 %v1306, %v443
      %v1435 = vmul.f32 %v1307, %v445
      %v1436 = vmul.f32 %v1308, %v447
      %v1437 = vmul.f32 %v1309, %v449
      %v1438 = vmul.f32 %v1310, %v451
      %v1439 = vmul.f32 %v1311, %v453
      %v1440 = vmul.f32 %v1312, %v455
      %v1441 = vmul.f32 %v1313, %v457
      %v1442 = vmul.f32 %v1314, %v459
      %v1443 = vmul.f32 %v1315, %v461
      %v1444 = vmul.f32 %v1300, %v204
      %v1445 = vmul.f32 %v1301, %v272
      %v1446 = vmul.f32 %v1302, %v273
      %v1447 = vmul.f32 %v1303, %v274
      %v1448 = vmul.f32 %v1304, %v275
      %v1449 = vmul.f32 %v1305, %v276
      %v1450 = vmul.f32 %v1306, %v277
      %v1451 = vmul.f32 %v1307, %v278
      %v1452 = vmul.f32 %v1308, %v205
      %v1453 = vmul.f32 %v1309, %v279
      %v1454 = vmul.f32 %v1310, %v280
      %v1455 = vmul.f32 %v1311, %v281
      %v1456 = vmul.f32 %v1312, %v282
      %v1457 = vmul.f32 %v1313, %v283
      %v1458 = vmul.f32 %v1314, %v284
      %v1459 = vmul.f32 %v1315, %v285
      %1476 = vrot.lane.b32.xlu0 %v1444, 4
      %v1477 = vpop.permute.xlu0 %1476
      %1478 = vrot.lane.b32.xlu0 %v1445, 4
      %v1479 = vpop.permute.xlu0 %1478
      %1480 = vrot.lane.b32.xlu0 %v1446, 4
      %v1481 = vpop.permute.xlu0 %1480
      %1482 = vrot.lane.b32.xlu0 %v1447, 4
      %v1483 = vpop.permute.xlu0 %1482
      %1484 = vrot.lane.b32.xlu0 %v1448, 4
      %v1485 = vpop.permute.xlu0 %1484
      %1486 = vrot.lane.b32.xlu0 %v1449, 4
      %v1487 = vpop.permute.xlu0 %1486
      %1488 = vrot.lane.b32.xlu0 %v1450, 4
      %v1489 = vpop.permute.xlu0 %1488
      %1490 = vrot.lane.b32.xlu0 %v1451, 4
      %v1491 = vpop.permute.xlu0 %1490
      %1492 = vrot.lane.b32.xlu0 %v1452, 4
      %v1493 = vpop.permute.xlu0 %1492
      %1494 = vrot.lane.b32.xlu0 %v1453, 4
      %v1495 = vpop.permute.xlu0 %1494
      %1496 = vrot.lane.b32.xlu0 %v1454, 4
      %v1497 = vpop.permute.xlu0 %1496
      %1498 = vrot.lane.b32.xlu0 %v1455, 4
      %v1499 = vpop.permute.xlu0 %1498
      %1500 = vrot.lane.b32.xlu0 %v1456, 4
      %v1501 = vpop.permute.xlu0 %1500
      %1502 = vrot.lane.b32.xlu0 %v1457, 4
      %v1503 = vpop.permute.xlu0 %1502
      %1504 = vrot.lane.b32.xlu0 %v1458, 4
      %v1505 = vpop.permute.xlu0 %1504
      %1506 = vrot.lane.b32.xlu0 %v1459, 4
      %v1507 = vpop.permute.xlu0 %1506
      %v1524 = vadd.f32 %v1428, %v1477
      %v1525 = vadd.f32 %v1429, %v1479
      %v1526 = vadd.f32 %v1430, %v1481
      %v1527 = vadd.f32 %v1431, %v1483
      %v1528 = vadd.f32 %v1432, %v1485
      %v1529 = vadd.f32 %v1433, %v1487
      %v1530 = vadd.f32 %v1434, %v1489
      %v1531 = vadd.f32 %v1435, %v1491
      %v1532 = vadd.f32 %v1436, %v1493
      %v1533 = vadd.f32 %v1437, %v1495
      %v1534 = vadd.f32 %v1438, %v1497
      %v1535 = vadd.f32 %v1439, %v1499
      %v1536 = vadd.f32 %v1440, %v1501
      %v1537 = vadd.f32 %v1441, %v1503
      %v1538 = vadd.f32 %v1442, %v1505
      %v1539 = vadd.f32 %v1443, %v1507
      %v1556 = vrot.slane %v1413, 7
      %v1557 = vsel %vm623, %v1556, %v1412
      %v1558 = vrot.slane %v1414, 6
      %v1559 = vsel %vm626, %v1558, %v1557
      %v1560 = vrot.slane %v1415, 5
      %v1561 = vsel %vm629, %v1560, %v1559
      %v1562 = vrot.slane %v1416, 4
      %v1563 = vsel %vm632, %v1562, %v1561
      %v1564 = vrot.slane %v1417, 3
      %v1565 = vsel %vm635, %v1564, %v1563
      %v1566 = vrot.slane %v1418, 2
      %v1567 = vsel %vm638, %v1566, %v1565
      %v1568 = vrot.slane %v1419, 1
      %v1569 = vsel %vm641, %v1568, %v1567
      %v1570 = vrot.slane %v1421, 7
      %v1571 = vsel %vm623, %v1570, %v1420
      %v1572 = vrot.slane %v1422, 6
      %v1573 = vsel %vm626, %v1572, %v1571
      %v1574 = vrot.slane %v1423, 5
      %v1575 = vsel %vm629, %v1574, %v1573
      %v1576 = vrot.slane %v1424, 4
      %v1577 = vsel %vm632, %v1576, %v1575
      %v1578 = vrot.slane %v1425, 3
      %v1579 = vsel %vm635, %v1578, %v1577
      %v1580 = vrot.slane %v1426, 2
      %v1581 = vsel %vm638, %v1580, %v1579
      %v1582 = vrot.slane %v1427, 1
      %v1583 = vsel %vm641, %v1582, %v1581
      %v1602 = vrot.slane %v1525, 7
      %v1603 = vsel %vm623, %v1602, %v1524
      %v1604 = vrot.slane %v1526, 6
      %v1605 = vsel %vm626, %v1604, %v1603
      %v1606 = vrot.slane %v1527, 5
      %v1607 = vsel %vm629, %v1606, %v1605
      %v1608 = vrot.slane %v1528, 4
      %v1609 = vsel %vm632, %v1608, %v1607
      %v1610 = vrot.slane %v1529, 3
      %v1611 = vsel %vm635, %v1610, %v1609
      %v1612 = vrot.slane %v1530, 2
      %v1613 = vsel %vm638, %v1612, %v1611
      %v1614 = vrot.slane %v1531, 1
      %v1615 = vsel %vm641, %v1614, %v1613
      %v1616 = vrot.slane %v1533, 7
      %v1617 = vsel %vm623, %v1616, %v1532
      %v1618 = vrot.slane %v1534, 6
      %v1619 = vsel %vm626, %v1618, %v1617
      %v1620 = vrot.slane %v1535, 5
      %v1621 = vsel %vm629, %v1620, %v1619
      %v1622 = vrot.slane %v1536, 4
      %v1623 = vsel %vm632, %v1622, %v1621
      %v1624 = vrot.slane %v1537, 3
      %v1625 = vsel %vm635, %v1624, %v1623
      %v1626 = vrot.slane %v1538, 2
      %v1627 = vsel %vm638, %v1626, %v1625
      %v1628 = vrot.slane %v1539, 1
      %v1629 = vsel %vm641, %v1628, %v1627
      %v1632 = vsel %vm705, %v1569, %v1615
      %v1633 = vsel %vm705, %v1583, %v1629
      %v1634 = vmul.f32 %v1632, 0.35355338
      %v1635 = vmul.f32 %v1633, 0.35355338
      %v1636 = vld [vmem:[%s710 + $0x1] sm:$0x1]
      %v1637 = vld [vmem:[%s710 + $0xd] sm:$0x1]
      %v1638 = vld [vmem:[%s710 + $0x19] sm:$0x1]
      %v1639 = vld [vmem:[%s710 + $0x25] sm:$0x1]
      %v1640 = vld [vmem:[%s710 + $0x31] sm:$0x1]
      %v1641 = vld [vmem:[%s710 + $0x3d] sm:$0x1]
      %v1642 = vld [vmem:[%s710 + $0x49] sm:$0x1]
      %v1643 = vld [vmem:[%s710 + $0x55] sm:$0x1]
      %v1644 = vld [vmem:[%s710 + $0x61] sm:$0x1]
      %v1645 = vld [vmem:[%s710 + $0x6d] sm:$0x1]
      %v1646 = vld [vmem:[%s710 + $0x79] sm:$0x1]
      %v1647 = vld [vmem:[%s710 + $0x85] sm:$0x1]
      %v1648 = vld [vmem:[%s710 + $0x91] sm:$0x1]
      %v1649 = vld [vmem:[%s710 + $0x9d] sm:$0x1]
      %v1650 = vld [vmem:[%s710 + $0xa9] sm:$0x1]
      %v1651 = vld [vmem:[%s710 + $0xb5] sm:$0x1]
      %v1652 = vmul.f32 %v1636, %v202
      %v1653 = vmul.f32 %v1637, %v224
      %v1654 = vmul.f32 %v1638, %v225
      %v1655 = vmul.f32 %v1639, %v226
      %v1656 = vmul.f32 %v1640, %v227
      %v1657 = vmul.f32 %v1641, %v228
      %v1658 = vmul.f32 %v1642, %v229
      %v1659 = vmul.f32 %v1643, %v230
      %v1660 = vmul.f32 %v1644, %v203
      %v1661 = vmul.f32 %v1645, %v231
      %v1662 = vmul.f32 %v1646, %v232
      %v1663 = vmul.f32 %v1647, %v233
      %v1664 = vmul.f32 %v1648, %v234
      %v1665 = vmul.f32 %v1649, %v235
      %v1666 = vmul.f32 %v1650, %v236
      %v1667 = vmul.f32 %v1651, %v237
      %v1668 = vmul.f32 %v1636, %v287
      %v1669 = vmul.f32 %v1637, %v289
      %v1670 = vmul.f32 %v1638, %v291
      %v1671 = vmul.f32 %v1639, %v293
      %v1672 = vmul.f32 %v1640, %v295
      %v1673 = vmul.f32 %v1641, %v297
      %v1674 = vmul.f32 %v1642, %v299
      %v1675 = vmul.f32 %v1643, %v301
      %v1676 = vmul.f32 %v1644, %v303
      %v1677 = vmul.f32 %v1645, %v305
      %v1678 = vmul.f32 %v1646, %v307
      %v1679 = vmul.f32 %v1647, %v309
      %v1680 = vmul.f32 %v1648, %v311
      %v1681 = vmul.f32 %v1649, %v313
      %v1682 = vmul.f32 %v1650, %v315
      %v1683 = vmul.f32 %v1651, %v317
      %1700 = vrot.lane.b32.xlu0 %v1668, 124
      %v1701 = vpop.permute.xlu0 %1700
      %1702 = vrot.lane.b32.xlu0 %v1669, 124
      %v1703 = vpop.permute.xlu0 %1702
      %1704 = vrot.lane.b32.xlu0 %v1670, 124
      %v1705 = vpop.permute.xlu0 %1704
      %1706 = vrot.lane.b32.xlu0 %v1671, 124
      %v1707 = vpop.permute.xlu0 %1706
      %1708 = vrot.lane.b32.xlu0 %v1672, 124
      %v1709 = vpop.permute.xlu0 %1708
      %1710 = vrot.lane.b32.xlu0 %v1673, 124
      %v1711 = vpop.permute.xlu0 %1710
      %1712 = vrot.lane.b32.xlu0 %v1674, 124
      %v1713 = vpop.permute.xlu0 %1712
      %1714 = vrot.lane.b32.xlu0 %v1675, 124
      %v1715 = vpop.permute.xlu0 %1714
      %1716 = vrot.lane.b32.xlu0 %v1676, 124
      %v1717 = vpop.permute.xlu0 %1716
      %1718 = vrot.lane.b32.xlu0 %v1677, 124
      %v1719 = vpop.permute.xlu0 %1718
      %1720 = vrot.lane.b32.xlu0 %v1678, 124
      %v1721 = vpop.permute.xlu0 %1720
      %1722 = vrot.lane.b32.xlu0 %v1679, 124
      %v1723 = vpop.permute.xlu0 %1722
      %1724 = vrot.lane.b32.xlu0 %v1680, 124
      %v1725 = vpop.permute.xlu0 %1724
      %1726 = vrot.lane.b32.xlu0 %v1681, 124
      %v1727 = vpop.permute.xlu0 %1726
      %1728 = vrot.lane.b32.xlu0 %v1682, 124
      %v1729 = vpop.permute.xlu0 %1728
      %1730 = vrot.lane.b32.xlu0 %v1683, 124
      %v1731 = vpop.permute.xlu0 %1730
      %v1748 = vsub.f32 %v1652, %v1701
      %v1749 = vsub.f32 %v1653, %v1703
      %v1750 = vsub.f32 %v1654, %v1705
      %v1751 = vsub.f32 %v1655, %v1707
      %v1752 = vsub.f32 %v1656, %v1709
      %v1753 = vsub.f32 %v1657, %v1711
      %v1754 = vsub.f32 %v1658, %v1713
      %v1755 = vsub.f32 %v1659, %v1715
      %v1756 = vsub.f32 %v1660, %v1717
      %v1757 = vsub.f32 %v1661, %v1719
      %v1758 = vsub.f32 %v1662, %v1721
      %v1759 = vsub.f32 %v1663, %v1723
      %v1760 = vsub.f32 %v1664, %v1725
      %v1761 = vsub.f32 %v1665, %v1727
      %v1762 = vsub.f32 %v1666, %v1729
      %v1763 = vsub.f32 %v1667, %v1731
      %v1764 = vmul.f32 %v1636, %v431
      %v1765 = vmul.f32 %v1637, %v433
      %v1766 = vmul.f32 %v1638, %v435
      %v1767 = vmul.f32 %v1639, %v437
      %v1768 = vmul.f32 %v1640, %v439
      %v1769 = vmul.f32 %v1641, %v441
      %v1770 = vmul.f32 %v1642, %v443
      %v1771 = vmul.f32 %v1643, %v445
      %v1772 = vmul.f32 %v1644, %v447
      %v1773 = vmul.f32 %v1645, %v449
      %v1774 = vmul.f32 %v1646, %v451
      %v1775 = vmul.f32 %v1647, %v453
      %v1776 = vmul.f32 %v1648, %v455
      %v1777 = vmul.f32 %v1649, %v457
      %v1778 = vmul.f32 %v1650, %v459
      %v1779 = vmul.f32 %v1651, %v461
      %v1780 = vmul.f32 %v1636, %v204
      %v1781 = vmul.f32 %v1637, %v272
      %v1782 = vmul.f32 %v1638, %v273
      %v1783 = vmul.f32 %v1639, %v274
      %v1784 = vmul.f32 %v1640, %v275
      %v1785 = vmul.f32 %v1641, %v276
      %v1786 = vmul.f32 %v1642, %v277
      %v1787 = vmul.f32 %v1643, %v278
      %v1788 = vmul.f32 %v1644, %v205
      %v1789 = vmul.f32 %v1645, %v279
      %v1790 = vmul.f32 %v1646, %v280
      %v1791 = vmul.f32 %v1647, %v281
      %v1792 = vmul.f32 %v1648, %v282
      %v1793 = vmul.f32 %v1649, %v283
      %v1794 = vmul.f32 %v1650, %v284
      %v1795 = vmul.f32 %v1651, %v285
      %1812 = vrot.lane.b32.xlu0 %v1780, 4
      %v1813 = vpop.permute.xlu0 %1812
      %1814 = vrot.lane.b32.xlu0 %v1781, 4
      %v1815 = vpop.permute.xlu0 %1814
      %1816 = vrot.lane.b32.xlu0 %v1782, 4
      %v1817 = vpop.permute.xlu0 %1816
      %1818 = vrot.lane.b32.xlu0 %v1783, 4
      %v1819 = vpop.permute.xlu0 %1818
      %1820 = vrot.lane.b32.xlu0 %v1784, 4
      %v1821 = vpop.permute.xlu0 %1820
      %1822 = vrot.lane.b32.xlu0 %v1785, 4
      %v1823 = vpop.permute.xlu0 %1822
      %1824 = vrot.lane.b32.xlu0 %v1786, 4
      %v1825 = vpop.permute.xlu0 %1824
      %1826 = vrot.lane.b32.xlu0 %v1787, 4
      %v1827 = vpop.permute.xlu0 %1826
      %1828 = vrot.lane.b32.xlu0 %v1788, 4
      %v1829 = vpop.permute.xlu0 %1828
      %1830 = vrot.lane.b32.xlu0 %v1789, 4
      %v1831 = vpop.permute.xlu0 %1830
      %1832 = vrot.lane.b32.xlu0 %v1790, 4
      %v1833 = vpop.permute.xlu0 %1832
      %1834 = vrot.lane.b32.xlu0 %v1791, 4
      %v1835 = vpop.permute.xlu0 %1834
      %1836 = vrot.lane.b32.xlu0 %v1792, 4
      %v1837 = vpop.permute.xlu0 %1836
      %1838 = vrot.lane.b32.xlu0 %v1793, 4
      %v1839 = vpop.permute.xlu0 %1838
      %1840 = vrot.lane.b32.xlu0 %v1794, 4
      %v1841 = vpop.permute.xlu0 %1840
      %1842 = vrot.lane.b32.xlu0 %v1795, 4
      %v1843 = vpop.permute.xlu0 %1842
      %v1860 = vadd.f32 %v1764, %v1813
      %v1861 = vadd.f32 %v1765, %v1815
      %v1862 = vadd.f32 %v1766, %v1817
      %v1863 = vadd.f32 %v1767, %v1819
      %v1864 = vadd.f32 %v1768, %v1821
      %v1865 = vadd.f32 %v1769, %v1823
      %v1866 = vadd.f32 %v1770, %v1825
      %v1867 = vadd.f32 %v1771, %v1827
      %v1868 = vadd.f32 %v1772, %v1829
      %v1869 = vadd.f32 %v1773, %v1831
      %v1870 = vadd.f32 %v1774, %v1833
      %v1871 = vadd.f32 %v1775, %v1835
      %v1872 = vadd.f32 %v1776, %v1837
      %v1873 = vadd.f32 %v1777, %v1839
      %v1874 = vadd.f32 %v1778, %v1841
      %v1875 = vadd.f32 %v1779, %v1843
      %v1892 = vrot.slane %v1749, 7
      %v1893 = vsel %vm623, %v1892, %v1748
      %v1894 = vrot.slane %v1750, 6
      %v1895 = vsel %vm626, %v1894, %v1893
      %v1896 = vrot.slane %v1751, 5
      %v1897 = vsel %vm629, %v1896, %v1895
      %v1898 = vrot.slane %v1752, 4
      %v1899 = vsel %vm632, %v1898, %v1897
      %v1900 = vrot.slane %v1753, 3
      %v1901 = vsel %vm635, %v1900, %v1899
      %v1902 = vrot.slane %v1754, 2
      %v1903 = vsel %vm638, %v1902, %v1901
      %v1904 = vrot.slane %v1755, 1
      %v1905 = vsel %vm641, %v1904, %v1903
      %v1906 = vrot.slane %v1757, 7
      %v1907 = vsel %vm623, %v1906, %v1756
      %v1908 = vrot.slane %v1758, 6
      %v1909 = vsel %vm626, %v1908, %v1907
      %v1910 = vrot.slane %v1759, 5
      %v1911 = vsel %vm629, %v1910, %v1909
      %v1912 = vrot.slane %v1760, 4
      %v1913 = vsel %vm632, %v1912, %v1911
      %v1914 = vrot.slane %v1761, 3
      %v1915 = vsel %vm635, %v1914, %v1913
      %v1916 = vrot.slane %v1762, 2
      %v1917 = vsel %vm638, %v1916, %v1915
      %v1918 = vrot.slane %v1763, 1
      %v1919 = vsel %vm641, %v1918, %v1917
      %v1938 = vrot.slane %v1861, 7
      %v1939 = vsel %vm623, %v1938, %v1860
      %v1940 = vrot.slane %v1862, 6
      %v1941 = vsel %vm626, %v1940, %v1939
      %v1942 = vrot.slane %v1863, 5
      %v1943 = vsel %vm629, %v1942, %v1941
      %v1944 = vrot.slane %v1864, 4
      %v1945 = vsel %vm632, %v1944, %v1943
      %v1946 = vrot.slane %v1865, 3
      %v1947 = vsel %vm635, %v1946, %v1945
      %v1948 = vrot.slane %v1866, 2
      %v1949 = vsel %vm638, %v1948, %v1947
      %v1950 = vrot.slane %v1867, 1
      %v1951 = vsel %vm641, %v1950, %v1949
      %v1952 = vrot.slane %v1869, 7
      %v1953 = vsel %vm623, %v1952, %v1868
      %v1954 = vrot.slane %v1870, 6
      %v1955 = vsel %vm626, %v1954, %v1953
      %v1956 = vrot.slane %v1871, 5
      %v1957 = vsel %vm629, %v1956, %v1955
      %v1958 = vrot.slane %v1872, 4
      %v1959 = vsel %vm632, %v1958, %v1957
      %v1960 = vrot.slane %v1873, 3
      %v1961 = vsel %vm635, %v1960, %v1959
      %v1962 = vrot.slane %v1874, 2
      %v1963 = vsel %vm638, %v1962, %v1961
      %v1964 = vrot.slane %v1875, 1
      %v1965 = vsel %vm641, %v1964, %v1963
      %v1968 = vsel %vm705, %v1905, %v1951
      %v1969 = vsel %vm705, %v1919, %v1965
      %v1970 = vld [vmem:[%s1045 + $0x1] sm:$0x1]
      %v1971 = vld [vmem:[%s1045 + $0xd] sm:$0x1]
      %v1972 = vld [vmem:[%s1045 + $0x19] sm:$0x1]
      %v1973 = vld [vmem:[%s1045 + $0x25] sm:$0x1]
      %v1974 = vld [vmem:[%s1045 + $0x31] sm:$0x1]
      %v1975 = vld [vmem:[%s1045 + $0x3d] sm:$0x1]
      %v1976 = vld [vmem:[%s1045 + $0x49] sm:$0x1]
      %v1977 = vld [vmem:[%s1045 + $0x55] sm:$0x1]
      %v1978 = vld [vmem:[%s1045 + $0x61] sm:$0x1]
      %v1979 = vld [vmem:[%s1045 + $0x6d] sm:$0x1]
      %v1980 = vld [vmem:[%s1045 + $0x79] sm:$0x1]
      %v1981 = vld [vmem:[%s1045 + $0x85] sm:$0x1]
      %v1982 = vld [vmem:[%s1045 + $0x91] sm:$0x1]
      %v1983 = vld [vmem:[%s1045 + $0x9d] sm:$0x1]
      %v1984 = vld [vmem:[%s1045 + $0xa9] sm:$0x1]
      %v1985 = vld [vmem:[%s1045 + $0xb5] sm:$0x1]
      %v1987 = vsel %vm1062, %v1634, 0
      %v1990 = vsel %vm1062, %v1635, 0
      %v1993 = vsel %vm1062, %v1968, 0
      %v1996 = vsel %vm1062, %v1969, 0
      %1998 = vmatprep.subr.mxu0 0.0
      %1999 = vmatpush1.xpose.msra.mxu0 %v1993
      %2000 = vmatprep.subr.mxu0 0.0
      %2001 = vmatpush1.xpose.msra.mxu0 %v1996
      %2002 = vmatprep.subr.mxu0 0.0
      %2003 = vmatpush1.xpose.msra.mxu0 0.0
      %2004 = vmatprep.subr.mxu0 0.0
      %2005 = vmatpush1.xpose.msra.mxu0 0.0
      %2006 = vmatprep.subr.mxu0 0.0
      %2007 = vmatpush1.xpose.msra.mxu0 0.0
      %2008 = vmatprep.subr.mxu0 0.0
      %2009 = vmatpush1.xpose.msra.mxu0 0.0
      %2010 = vmatprep.subr.mxu0 0.0
      %2011 = vmatpush1.xpose.msra.mxu0 0.0
      %2012 = vmatprep.subr.mxu0 0.0
      %2013 = vmatpush1.xpose.msra.mxu0 0.0
      %2014 = vmatprep.subr.mxu0 0.0
      %2015 = vmatpush1.xpose.msra.mxu0 0.0
      %2016 = vmatprep.subr.mxu0 0.0
      %2017 = vmatpush1.xpose.msra.mxu0 0.0
      %2018 = vmatprep.subr.mxu0 0.0
      %2019 = vmatpush1.xpose.msra.mxu0 0.0
      %2020 = vmatprep.subr.mxu0 0.0
      %2021 = vmatpush1.xpose.msra.mxu0 0.0
      %2022 = vmatprep.subr.mxu0 0.0
      %2023 = vmatpush1.xpose.msra.mxu0 0.0
      %2024 = vmatprep.subr.mxu0 0.0
      %2025 = vmatpush1.xpose.msra.mxu0 0.0
      %2026 = vmatprep.subr.mxu0 0.0
      %2027 = vmatpush1.xpose.msra.mxu0 0.0
      %2028 = vmatprep.subr.mxu0 0.0
      %2029 = vmatpush1.xpose.msra.mxu0 0.0
      %2030 = vmatprep.subr.mxu0 0.0
      %2031 = vmatpush1.xpose.msra.mxu0 0.0
      %2032 = vmatprep.subr.mxu0 0.0
      %2033 = vmatpush1.xpose.msra.mxu0 0.0
      %2034 = vmatprep.subr.mxu0 0.0
      %2035 = vmatpush1.xpose.msra.mxu0 0.0
      %2036 = vmatprep.subr.mxu0 0.0
      %2037 = vmatpush1.xpose.msra.mxu0 0.0
      %2038 = vmatprep.subr.mxu0 0.0
      %2039 = vmatpush1.xpose.msra.mxu0 0.0
      %2040 = vmatprep.subr.mxu0 0.0
      %2041 = vmatpush1.xpose.msra.mxu0 0.0
      %2042 = vmatprep.subr.mxu0 0.0
      %2043 = vmatpush1.xpose.msra.mxu0 0.0
      %2044 = vmatprep.subr.mxu0 0.0
      %2045 = vmatpush1.xpose.msra.mxu0 0.0
      %2046 = vmatprep.subr.mxu0 0.0
      %2047 = vmatpush1.xpose.msra.mxu0 0.0
      %2048 = vmatprep.subr.mxu0 0.0
      %2049 = vmatpush1.xpose.msra.mxu0 0.0
      %2050 = vmatprep.subr.mxu0 0.0
      %2051 = vmatpush1.xpose.msra.mxu0 0.0
      %2052 = vmatprep.subr.mxu0 0.0
      %2053 = vmatpush1.xpose.msra.mxu0 0.0
      %2054 = vmatprep.subr.mxu0 0.0
      %2055 = vmatpush1.xpose.msra.mxu0 0.0
      %2056 = vmatprep.subr.mxu0 0.0
      %2057 = vmatpush1.xpose.msra.mxu0 0.0
      %2058 = vmatprep.subr.mxu0 0.0
      %2059 = vmatpush1.xpose.msra.mxu0 0.0
      %2060 = vmatprep.subr.mxu0 0.0
      %2061 = vmatpush1.xpose.msra.mxu0 0.0
      %2062 = vmatprep.mubr.f32.mxu0 0.0
      %2063 = vmatmul.mubr.f32.gmra.mrb[0].mxu0 %v1987
      %v2064 = vpop.f32.mrb[0].mxu0
      %v2065 = vadd.f32 0.0, %v2064
      %v2066 = vpop.f32.mrb[0].mxu0
      %2067 = vmatprep.mubr.f32.mxu0 0.0
      %2068 = vmatmul.mubr.f32.gmra.mrb[0].mxu0 %v1990
      %v2069 = vpop.f32.mrb[0].mxu0
      %v2070 = vadd.f32 0.0, %v2069
      %v2071 = vpop.f32.mrb[0].mxu0
      %2072 = vdwg.mxu0
      %v2073 = vsel %vm1150, %v2065, -inf
      %2074 = vmax.xlane.f32.xlu0 %v2073
      %v2075 = vpop.xlane.xlu0 %2074
      %v2076 = vsel %vm1150, %v2070, -inf
      %2077 = vmax.xlane.f32.xlu0 %v2076
      %v2078 = vpop.xlane.xlu0 %2077
      %v2079 = vsub.f32 %v2065, %v2075
      %v2080 = vsub.f32 %v2070, %v2078
      %v2081 = vmul.f32 %v2079, 1.442695
      %v2082 = vpow.pop %v2081
      %v2083 = vmul.f32 %v2080, 1.442695
      %v2084 = vpow.pop %v2083
      %v2085 = vsel %vm1150, %v2082, 0.0
      %2086 = vadd.xlane.f32.xlu0 %v2085
      %v2087 = vpop.xlane.xlu0 %2086
      %v2088 = vsel %vm1150, %v2084, 0.0
      %2089 = vadd.xlane.f32.xlu0 %v2088
      %v2090 = vpop.xlane.xlu0 %2089
      %v2107 = vrot.slane %v1971, 7
      %v2108 = vsel %vm623, %v2107, %v1970
      %v2109 = vrot.slane %v1972, 6
      %v2110 = vsel %vm626, %v2109, %v2108
      %v2111 = vrot.slane %v1973, 5
      %v2112 = vsel %vm629, %v2111, %v2110
      %v2113 = vrot.slane %v1974, 4
      %v2114 = vsel %vm632, %v2113, %v2112
      %v2115 = vrot.slane %v1975, 3
      %v2116 = vsel %vm635, %v2115, %v2114
      %v2117 = vrot.slane %v1976, 2
      %v2118 = vsel %vm638, %v2117, %v2116
      %v2119 = vrot.slane %v1977, 1
      %v2120 = vsel %vm641, %v2119, %v2118
      %v2121 = vrot.slane %v1979, 7
      %v2122 = vsel %vm623, %v2121, %v1978
      %v2123 = vrot.slane %v1980, 6
      %v2124 = vsel %vm626, %v2123, %v2122
      %v2125 = vrot.slane %v1981, 5
      %v2126 = vsel %vm629, %v2125, %v2124
      %v2127 = vrot.slane %v1982, 4
      %v2128 = vsel %vm632, %v2127, %v2126
      %v2129 = vrot.slane %v1983, 3
      %v2130 = vsel %vm635, %v2129, %v2128
      %v2131 = vrot.slane %v1984, 2
      %v2132 = vsel %vm638, %v2131, %v2130
      %v2133 = vrot.slane %v1985, 1
      %v2134 = vsel %vm641, %v2133, %v2132
      %v2138 = vsel %vm1150, %v2082, 0
      %v2141 = vsel %vm1150, %v2084, 0
      %2143 = vmatprep.subr.mxu0 0.0
      %2144 = vmatpush1.msra.mxu0 %v2120
      %2145 = vmatprep.subr.mxu0 0.0
      %2146 = vmatpush1.msra.mxu0 %v2134
      %2147 = vmatprep.subr.mxu0 0.0
      %2148 = vmatpush1.msra.mxu0 0.0
      %2149 = vmatprep.subr.mxu0 0.0
      %2150 = vmatpush1.msra.mxu0 0.0
      %2151 = vmatprep.subr.mxu0 0.0
      %2152 = vmatpush1.msra.mxu0 0.0
      %2153 = vmatprep.subr.mxu0 0.0
      %2154 = vmatpush1.msra.mxu0 0.0
      %2155 = vmatprep.subr.mxu0 0.0
      %2156 = vmatpush1.msra.mxu0 0.0
      %2157 = vmatprep.subr.mxu0 0.0
      %2158 = vmatpush1.msra.mxu0 0.0
      %2159 = vmatprep.subr.mxu0 0.0
      %2160 = vmatpush1.msra.mxu0 0.0
      %2161 = vmatprep.subr.mxu0 0.0
      %2162 = vmatpush1.msra.mxu0 0.0
      %2163 = vmatprep.subr.mxu0 0.0
      %2164 = vmatpush1.msra.mxu0 0.0
      %2165 = vmatprep.subr.mxu0 0.0
      %2166 = vmatpush1.msra.mxu0 0.0
      %2167 = vmatprep.subr.mxu0 0.0
      %2168 = vmatpush1.msra.mxu0 0.0
      %2169 = vmatprep.subr.mxu0 0.0
      %2170 = vmatpush1.msra.mxu0 0.0
      %2171 = vmatprep.subr.mxu0 0.0
      %2172 = vmatpush1.msra.mxu0 0.0
      %2173 = vmatprep.subr.mxu0 0.0
      %2174 = vmatpush1.msra.mxu0 0.0
      %2175 = vmatprep.subr.mxu0 0.0
      %2176 = vmatpush1.msra.mxu0 0.0
      %2177 = vmatprep.subr.mxu0 0.0
      %2178 = vmatpush1.msra.mxu0 0.0
      %2179 = vmatprep.subr.mxu0 0.0
      %2180 = vmatpush1.msra.mxu0 0.0
      %2181 = vmatprep.subr.mxu0 0.0
      %2182 = vmatpush1.msra.mxu0 0.0
      %2183 = vmatprep.subr.mxu0 0.0
      %2184 = vmatpush1.msra.mxu0 0.0
      %2185 = vmatprep.subr.mxu0 0.0
      %2186 = vmatpush1.msra.mxu0 0.0
      %2187 = vmatprep.subr.mxu0 0.0
      %2188 = vmatpush1.msra.mxu0 0.0
      %2189 = vmatprep.subr.mxu0 0.0
      %2190 = vmatpush1.msra.mxu0 0.0
      %2191 = vmatprep.subr.mxu0 0.0
      %2192 = vmatpush1.msra.mxu0 0.0
      %2193 = vmatprep.subr.mxu0 0.0
      %2194 = vmatpush1.msra.mxu0 0.0
      %2195 = vmatprep.subr.mxu0 0.0
      %2196 = vmatpush1.msra.mxu0 0.0
      %2197 = vmatprep.subr.mxu0 0.0
      %2198 = vmatpush1.msra.mxu0 0.0
      %2199 = vmatprep.subr.mxu0 0.0
      %2200 = vmatpush1.msra.mxu0 0.0
      %2201 = vmatprep.subr.mxu0 0.0
      %2202 = vmatpush1.msra.mxu0 0.0
      %2203 = vmatprep.subr.mxu0 0.0
      %2204 = vmatpush1.msra.mxu0 0.0
      %2205 = vmatprep.subr.mxu0 0.0
      %2206 = vmatpush1.msra.mxu0 0.0
      %2207 = vmatprep.mubr.f32.mxu0 0.0
      %2208 = vmatmul.mubr.f32.gmra.mrb[0].mxu0 %v2138
      %v2209 = vpop.f32.mrb[0].mxu0
      %v2210 = vadd.f32 0.0, %v2209
      %v2211 = vpop.f32.mrb[0].mxu0
      %2212 = vmatprep.mubr.f32.mxu0 0.0
      %2213 = vmatmul.mubr.f32.gmra.mrb[0].mxu0 %v2141
      %v2214 = vpop.f32.mrb[0].mxu0
      %v2215 = vadd.f32 0.0, %v2214
      %v2216 = vpop.f32.mrb[0].mxu0
      %2217 = vdwg.mxu0
      %v2218 = vrcp.pop %v2087
      %v2219 = vrcp.pop %v2090
      %v2220 = vmul.f32 %v2210, %v2218
      %v2221 = vmul.f32 %v2215, %v2219
      %v2222 = vld [vmem:[%s193 + $0x2] sm:$0x1]
      %v2223 = vld [vmem:[%s193 + $0xe] sm:$0x1]
      %v2224 = vld [vmem:[%s193 + $0x1a] sm:$0x1]
      %v2225 = vld [vmem:[%s193 + $0x26] sm:$0x1]
      %v2226 = vld [vmem:[%s193 + $0x32] sm:$0x1]
      %v2227 = vld [vmem:[%s193 + $0x3e] sm:$0x1]
      %v2228 = vld [vmem:[%s193 + $0x4a] sm:$0x1]
      %v2229 = vld [vmem:[%s193 + $0x56] sm:$0x1]
      %v2230 = vld [vmem:[%s193 + $0x62] sm:$0x1]
      %v2231 = vld [vmem:[%s193 + $0x6e] sm:$0x1]
      %v2232 = vld [vmem:[%s193 + $0x7a] sm:$0x1]
      %v2233 = vld [vmem:[%s193 + $0x86] sm:$0x1]
      %v2234 = vld [vmem:[%s193 + $0x92] sm:$0x1]
      %v2235 = vld [vmem:[%s193 + $0x9e] sm:$0x1]
      %v2236 = vld [vmem:[%s193 + $0xaa] sm:$0x1]
      %v2237 = vld [vmem:[%s193 + $0xb6] sm:$0x1]
      %v2238 = vmul.f32 %v2222, %v202
      %v2239 = vmul.f32 %v2223, %v224
      %v2240 = vmul.f32 %v2224, %v225
      %v2241 = vmul.f32 %v2225, %v226
      %v2242 = vmul.f32 %v2226, %v227
      %v2243 = vmul.f32 %v2227, %v228
      %v2244 = vmul.f32 %v2228, %v229
      %v2245 = vmul.f32 %v2229, %v230
      %v2246 = vmul.f32 %v2230, %v203
      %v2247 = vmul.f32 %v2231, %v231
      %v2248 = vmul.f32 %v2232, %v232
      %v2249 = vmul.f32 %v2233, %v233
      %v2250 = vmul.f32 %v2234, %v234
      %v2251 = vmul.f32 %v2235, %v235
      %v2252 = vmul.f32 %v2236, %v236
      %v2253 = vmul.f32 %v2237, %v237
      %v2254 = vmul.f32 %v2222, %v287
      %v2255 = vmul.f32 %v2223, %v289
      %v2256 = vmul.f32 %v2224, %v291
      %v2257 = vmul.f32 %v2225, %v293
      %v2258 = vmul.f32 %v2226, %v295
      %v2259 = vmul.f32 %v2227, %v297
      %v2260 = vmul.f32 %v2228, %v299
      %v2261 = vmul.f32 %v2229, %v301
      %v2262 = vmul.f32 %v2230, %v303
      %v2263 = vmul.f32 %v2231, %v305
      %v2264 = vmul.f32 %v2232, %v307
      %v2265 = vmul.f32 %v2233, %v309
      %v2266 = vmul.f32 %v2234, %v311
      %v2267 = vmul.f32 %v2235, %v313
      %v2268 = vmul.f32 %v2236, %v315
      %v2269 = vmul.f32 %v2237, %v317
      %2286 = vrot.lane.b32.xlu0 %v2254, 124
      %v2287 = vpop.permute.xlu0 %2286
      %2288 = vrot.lane.b32.xlu0 %v2255, 124
      %v2289 = vpop.permute.xlu0 %2288
      %2290 = vrot.lane.b32.xlu0 %v2256, 124
      %v2291 = vpop.permute.xlu0 %2290
      %2292 = vrot.lane.b32.xlu0 %v2257, 124
      %v2293 = vpop.permute.xlu0 %2292
      %2294 = vrot.lane.b32.xlu0 %v2258, 124
      %v2295 = vpop.permute.xlu0 %2294
      %2296 = vrot.lane.b32.xlu0 %v2259, 124
      %v2297 = vpop.permute.xlu0 %2296
      %2298 = vrot.lane.b32.xlu0 %v2260, 124
      %v2299 = vpop.permute.xlu0 %2298
      %2300 = vrot.lane.b32.xlu0 %v2261, 124
      %v2301 = vpop.permute.xlu0 %2300
      %2302 = vrot.lane.b32.xlu0 %v2262, 124
      %v2303 = vpop.permute.xlu0 %2302
      %2304 = vrot.lane.b32.xlu0 %v2263, 124
      %v2305 = vpop.permute.xlu0 %2304
      %2306 = vrot.lane.b32.xlu0 %v2264, 124
      %v2307 = vpop.permute.xlu0 %2306
      %2308 = vrot.lane.b32.xlu0 %v2265, 124
      %v2309 = vpop.permute.xlu0 %2308
      %2310 = vrot.lane.b32.xlu0 %v2266, 124
      %v2311 = vpop.permute.xlu0 %2310
      %2312 = vrot.lane.b32.xlu0 %v2267, 124
      %v2313 = vpop.permute.xlu0 %2312
      %2314 = vrot.lane.b32.xlu0 %v2268, 124
      %v2315 = vpop.permute.xlu0 %2314
      %2316 = vrot.lane.b32.xlu0 %v2269, 124
      %v2317 = vpop.permute.xlu0 %2316
      %v2334 = vsub.f32 %v2238, %v2287
      %v2335 = vsub.f32 %v2239, %v2289
      %v2336 = vsub.f32 %v2240, %v2291
      %v2337 = vsub.f32 %v2241, %v2293
      %v2338 = vsub.f32 %v2242, %v2295
      %v2339 = vsub.f32 %v2243, %v2297
      %v2340 = vsub.f32 %v2244, %v2299
      %v2341 = vsub.f32 %v2245, %v2301
      %v2342 = vsub.f32 %v2246, %v2303
      %v2343 = vsub.f32 %v2247, %v2305
      %v2344 = vsub.f32 %v2248, %v2307
      %v2345 = vsub.f32 %v2249, %v2309
      %v2346 = vsub.f32 %v2250, %v2311
      %v2347 = vsub.f32 %v2251, %v2313
      %v2348 = vsub.f32 %v2252, %v2315
      %v2349 = vsub.f32 %v2253, %v2317
      %v2350 = vmul.f32 %v2222, %v431
      %v2351 = vmul.f32 %v2223, %v433
      %v2352 = vmul.f32 %v2224, %v435
      %v2353 = vmul.f32 %v2225, %v437
      %v2354 = vmul.f32 %v2226, %v439
      %v2355 = vmul.f32 %v2227, %v441
      %v2356 = vmul.f32 %v2228, %v443
      %v2357 = vmul.f32 %v2229, %v445
      %v2358 = vmul.f32 %v2230, %v447
      %v2359 = vmul.f32 %v2231, %v449
      %v2360 = vmul.f32 %v2232, %v451
      %v2361 = vmul.f32 %v2233, %v453
      %v2362 = vmul.f32 %v2234, %v455
      %v2363 = vmul.f32 %v2235, %v457
      %v2364 = vmul.f32 %v2236, %v459
      %v2365 = vmul.f32 %v2237, %v461
      %v2366 = vmul.f32 %v2222, %v204
      %v2367 = vmul.f32 %v2223, %v272
      %v2368 = vmul.f32 %v2224, %v273
      %v2369 = vmul.f32 %v2225, %v274
      %v2370 = vmul.f32 %v2226, %v275
      %v2371 = vmul.f32 %v2227, %v276
      %v2372 = vmul.f32 %v2228, %v277
      %v2373 = vmul.f32 %v2229, %v278
      %v2374 = vmul.f32 %v2230, %v205
      %v2375 = vmul.f32 %v2231, %v279
      %v2376 = vmul.f32 %v2232, %v280
      %v2377 = vmul.f32 %v2233, %v281
      %v2378 = vmul.f32 %v2234, %v282
      %v2379 = vmul.f32 %v2235, %v283
      %v2380 = vmul.f32 %v2236, %v284
      %v2381 = vmul.f32 %v2237, %v285
      %2398 = vrot.lane.b32.xlu0 %v2366, 4
      %v2399 = vpop.permute.xlu0 %2398
      %2400 = vrot.lane.b32.xlu0 %v2367, 4
      %v2401 = vpop.permute.xlu0 %2400
      %2402 = vrot.lane.b32.xlu0 %v2368, 4
      %v2403 = vpop.permute.xlu0 %2402
      %2404 = vrot.lane.b32.xlu0 %v2369, 4
      %v2405 = vpop.permute.xlu0 %2404
      %2406 = vrot.lane.b32.xlu0 %v2370, 4
      %v2407 = vpop.permute.xlu0 %2406
      %2408 = vrot.lane.b32.xlu0 %v2371, 4
      %v2409 = vpop.permute.xlu0 %2408
      %2410 = vrot.lane.b32.xlu0 %v2372, 4
      %v2411 = vpop.permute.xlu0 %2410
      %2412 = vrot.lane.b32.xlu0 %v2373, 4
      %v2413 = vpop.permute.xlu0 %2412
      %2414 = vrot.lane.b32.xlu0 %v2374, 4
      %v2415 = vpop.permute.xlu0 %2414
      %2416 = vrot.lane.b32.xlu0 %v2375, 4
      %v2417 = vpop.permute.xlu0 %2416
      %2418 = vrot.lane.b32.xlu0 %v2376, 4
      %v2419 = vpop.permute.xlu0 %2418
      %2420 = vrot.lane.b32.xlu0 %v2377, 4
      %v2421 = vpop.permute.xlu0 %2420
      %2422 = vrot.lane.b32.xlu0 %v2378, 4
      %v2423 = vpop.permute.xlu0 %2422
      %2424 = vrot.lane.b32.xlu0 %v2379, 4
      %v2425 = vpop.permute.xlu0 %2424
      %2426 = vrot.lane.b32.xlu0 %v2380, 4
      %v2427 = vpop.permute.xlu0 %2426
      %2428 = vrot.lane.b32.xlu0 %v2381, 4
      %v2429 = vpop.permute.xlu0 %2428
      %v2446 = vadd.f32 %v2350, %v2399
      %v2447 = vadd.f32 %v2351, %v2401
      %v2448 = vadd.f32 %v2352, %v2403
      %v2449 = vadd.f32 %v2353, %v2405
      %v2450 = vadd.f32 %v2354, %v2407
      %v2451 = vadd.f32 %v2355, %v2409
      %v2452 = vadd.f32 %v2356, %v2411
      %v2453 = vadd.f32 %v2357, %v2413
      %v2454 = vadd.f32 %v2358, %v2415
      %v2455 = vadd.f32 %v2359, %v2417
      %v2456 = vadd.f32 %v2360, %v2419
      %v2457 = vadd.f32 %v2361, %v2421
      %v2458 = vadd.f32 %v2362, %v2423
      %v2459 = vadd.f32 %v2363, %v2425
      %v2460 = vadd.f32 %v2364, %v2427
      %v2461 = vadd.f32 %v2365, %v2429
      %v2478 = vrot.slane %v2335, 7
      %v2479 = vsel %vm623, %v2478, %v2334
      %v2480 = vrot.slane %v2336, 6
      %v2481 = vsel %vm626, %v2480, %v2479
      %v2482 = vrot.slane %v2337, 5
      %v2483 = vsel %vm629, %v2482, %v2481
      %v2484 = vrot.slane %v2338, 4
      %v2485 = vsel %vm632, %v2484, %v2483
      %v2486 = vrot.slane %v2339, 3
      %v2487 = vsel %vm635, %v2486, %v2485
      %v2488 = vrot.slane %v2340, 2
      %v2489 = vsel %vm638, %v2488, %v2487
      %v2490 = vrot.slane %v2341, 1
      %v2491 = vsel %vm641, %v2490, %v2489
      %v2492 = vrot.slane %v2343, 7
      %v2493 = vsel %vm623, %v2492, %v2342
      %v2494 = vrot.slane %v2344, 6
      %v2495 = vsel %vm626, %v2494, %v2493
      %v2496 = vrot.slane %v2345, 5
      %v2497 = vsel %vm629, %v2496, %v2495
      %v2498 = vrot.slane %v2346, 4
      %v2499 = vsel %vm632, %v2498, %v2497
      %v2500 = vrot.slane %v2347, 3
      %v2501 = vsel %vm635, %v2500, %v2499
      %v2502 = vrot.slane %v2348, 2
      %v2503 = vsel %vm638, %v2502, %v2501
      %v2504 = vrot.slane %v2349, 1
      %v2505 = vsel %vm641, %v2504, %v2503
      %v2524 = vrot.slane %v2447, 7
      %v2525 = vsel %vm623, %v2524, %v2446
      %v2526 = vrot.slane %v2448, 6
      %v2527 = vsel %vm626, %v2526, %v2525
      %v2528 = vrot.slane %v2449, 5
      %v2529 = vsel %vm629, %v2528, %v2527
      %v2530 = vrot.slane %v2450, 4
      %v2531 = vsel %vm632, %v2530, %v2529
      %v2532 = vrot.slane %v2451, 3
      %v2533 = vsel %vm635, %v2532, %v2531
      %v2534 = vrot.slane %v2452, 2
      %v2535 = vsel %vm638, %v2534, %v2533
      %v2536 = vrot.slane %v2453, 1
      %v2537 = vsel %vm641, %v2536, %v2535
      %v2538 = vrot.slane %v2455, 7
      %v2539 = vsel %vm623, %v2538, %v2454
      %v2540 = vrot.slane %v2456, 6
      %v2541 = vsel %vm626, %v2540, %v2539
      %v2542 = vrot.slane %v2457, 5
      %v2543 = vsel %vm629, %v2542, %v2541
      %v2544 = vrot.slane %v2458, 4
      %v2545 = vsel %vm632, %v2544, %v2543
      %v2546 = vrot.slane %v2459, 3
      %v2547 = vsel %vm635, %v2546, %v2545
      %v2548 = vrot.slane %v2460, 2
      %v2549 = vsel %vm638, %v2548, %v2547
      %v2550 = vrot.slane %v2461, 1
      %v2551 = vsel %vm641, %v2550, %v2549
      %v2554 = vsel %vm705, %v2491, %v2537
      %v2555 = vsel %vm705, %v2505, %v2551
      %v2556 = vmul.f32 %v2554, 0.35355338
      %v2557 = vmul.f32 %v2555, 0.35355338
      %v2558 = vld [vmem:[%s710 + $0x2] sm:$0x1]
      %v2559 = vld [vmem:[%s710 + $0xe] sm:$0x1]
      %v2560 = vld [vmem:[%s710 + $0x1a] sm:$0x1]
      %v2561 = vld [vmem:[%s710 + $0x26] sm:$0x1]
      %v2562 = vld [vmem:[%s710 + $0x32] sm:$0x1]
      %v2563 = vld [vmem:[%s710 + $0x3e] sm:$0x1]
      %v2564 = vld [vmem:[%s710 + $0x4a] sm:$0x1]
      %v2565 = vld [vmem:[%s710 + $0x56] sm:$0x1]
      %v2566 = vld [vmem:[%s710 + $0x62] sm:$0x1]
      %v2567 = vld [vmem:[%s710 + $0x6e] sm:$0x1]
      %v2568 = vld [vmem:[%s710 + $0x7a] sm:$0x1]
      %v2569 = vld [vmem:[%s710 + $0x86] sm:$0x1]
      %v2570 = vld [vmem:[%s710 + $0x92] sm:$0x1]
      %v2571 = vld [vmem:[%s710 + $0x9e] sm:$0x1]
      %v2572 = vld [vmem:[%s710 + $0xaa] sm:$0x1]
      %v2573 = vld [vmem:[%s710 + $0xb6] sm:$0x1]
      %v2574 = vmul.f32 %v2558, %v202
      %v2575 = vmul.f32 %v2559, %v224
      %v2576 = vmul.f32 %v2560, %v225
      %v2577 = vmul.f32 %v2561, %v226
      %v2578 = vmul.f32 %v2562, %v227
      %v2579 = vmul.f32 %v2563, %v228
      %v2580 = vmul.f32 %v2564, %v229
      %v2581 = vmul.f32 %v2565, %v230
      %v2582 = vmul.f32 %v2566, %v203
      %v2583 = vmul.f32 %v2567, %v231
      %v2584 = vmul.f32 %v2568, %v232
      %v2585 = vmul.f32 %v2569, %v233
      %v2586 = vmul.f32 %v2570, %v234
      %v2587 = vmul.f32 %v2571, %v235
      %v2588 = vmul.f32 %v2572, %v236
      %v2589 = vmul.f32 %v2573, %v237
      %v2590 = vmul.f32 %v2558, %v287
      %v2591 = vmul.f32 %v2559, %v289
      %v2592 = vmul.f32 %v2560, %v291
      %v2593 = vmul.f32 %v2561, %v293
      %v2594 = vmul.f32 %v2562, %v295
      %v2595 = vmul.f32 %v2563, %v297
      %v2596 = vmul.f32 %v2564, %v299
      %v2597 = vmul.f32 %v2565, %v301
      %v2598 = vmul.f32 %v2566, %v303
      %v2599 = vmul.f32 %v2567, %v305
      %v2600 = vmul.f32 %v2568, %v307
      %v2601 = vmul.f32 %v2569, %v309
      %v2602 = vmul.f32 %v2570, %v311
      %v2603 = vmul.f32 %v2571, %v313
      %v2604 = vmul.f32 %v2572, %v315
      %v2605 = vmul.f32 %v2573, %v317
      %2622 = vrot.lane.b32.xlu0 %v2590, 124
      %v2623 = vpop.permute.xlu0 %2622
      %2624 = vrot.lane.b32.xlu0 %v2591, 124
      %v2625 = vpop.permute.xlu0 %2624
      %2626 = vrot.lane.b32.xlu0 %v2592, 124
      %v2627 = vpop.permute.xlu0 %2626
      %2628 = vrot.lane.b32.xlu0 %v2593, 124
      %v2629 = vpop.permute.xlu0 %2628
      %2630 = vrot.lane.b32.xlu0 %v2594, 124
      %v2631 = vpop.permute.xlu0 %2630
      %2632 = vrot.lane.b32.xlu0 %v2595, 124
      %v2633 = vpop.permute.xlu0 %2632
      %2634 = vrot.lane.b32.xlu0 %v2596, 124
      %v2635 = vpop.permute.xlu0 %2634
      %2636 = vrot.lane.b32.xlu0 %v2597, 124
      %v2637 = vpop.permute.xlu0 %2636
      %2638 = vrot.lane.b32.xlu0 %v2598, 124
      %v2639 = vpop.permute.xlu0 %2638
      %2640 = vrot.lane.b32.xlu0 %v2599, 124
      %v2641 = vpop.permute.xlu0 %2640
      %2642 = vrot.lane.b32.xlu0 %v2600, 124
      %v2643 = vpop.permute.xlu0 %2642
      %2644 = vrot.lane.b32.xlu0 %v2601, 124
      %v2645 = vpop.permute.xlu0 %2644
      %2646 = vrot.lane.b32.xlu0 %v2602, 124
      %v2647 = vpop.permute.xlu0 %2646
      %2648 = vrot.lane.b32.xlu0 %v2603, 124
      %v2649 = vpop.permute.xlu0 %2648
      %2650 = vrot.lane.b32.xlu0 %v2604, 124
      %v2651 = vpop.permute.xlu0 %2650
      %2652 = vrot.lane.b32.xlu0 %v2605, 124
      %v2653 = vpop.permute.xlu0 %2652
      %v2670 = vsub.f32 %v2574, %v2623
      %v2671 = vsub.f32 %v2575, %v2625
      %v2672 = vsub.f32 %v2576, %v2627
      %v2673 = vsub.f32 %v2577, %v2629
      %v2674 = vsub.f32 %v2578, %v2631
      %v2675 = vsub.f32 %v2579, %v2633
      %v2676 = vsub.f32 %v2580, %v2635
      %v2677 = vsub.f32 %v2581, %v2637
      %v2678 = vsub.f32 %v2582, %v2639
      %v2679 = vsub.f32 %v2583, %v2641
      %v2680 = vsub.f32 %v2584, %v2643
      %v2681 = vsub.f32 %v2585, %v2645
      %v2682 = vsub.f32 %v2586, %v2647
      %v2683 = vsub.f32 %v2587, %v2649
      %v2684 = vsub.f32 %v2588, %v2651
      %v2685 = vsub.f32 %v2589, %v2653
      %v2686 = vmul.f32 %v2558, %v431
      %v2687 = vmul.f32 %v2559, %v433
      %v2688 = vmul.f32 %v2560, %v435
      %v2689 = vmul.f32 %v2561, %v437
      %v2690 = vmul.f32 %v2562, %v439
      %v2691 = vmul.f32 %v2563, %v441
      %v2692 = vmul.f32 %v2564, %v443
      %v2693 = vmul.f32 %v2565, %v445
      %v2694 = vmul.f32 %v2566, %v447
      %v2695 = vmul.f32 %v2567, %v449
      %v2696 = vmul.f32 %v2568, %v451
      %v2697 = vmul.f32 %v2569, %v453
      %v2698 = vmul.f32 %v2570, %v455
      %v2699 = vmul.f32 %v2571, %v457
      %v2700 = vmul.f32 %v2572, %v459
      %v2701 = vmul.f32 %v2573, %v461
      %v2702 = vmul.f32 %v2558, %v204
      %v2703 = vmul.f32 %v2559, %v272
      %v2704 = vmul.f32 %v2560, %v273
      %v2705 = vmul.f32 %v2561, %v274
      %v2706 = vmul.f32 %v2562, %v275
      %v2707 = vmul.f32 %v2563, %v276
      %v2708 = vmul.f32 %v2564, %v277
      %v2709 = vmul.f32 %v2565, %v278
      %v2710 = vmul.f32 %v2566, %v205
      %v2711 = vmul.f32 %v2567, %v279
      %v2712 = vmul.f32 %v2568, %v280
      %v2713 = vmul.f32 %v2569, %v281
      %v2714 = vmul.f32 %v2570, %v282
      %v2715 = vmul.f32 %v2571, %v283
      %v2716 = vmul.f32 %v2572, %v284
      %v2717 = vmul.f32 %v2573, %v285
      %2734 = vrot.lane.b32.xlu0 %v2702, 4
      %v2735 = vpop.permute.xlu0 %2734
      %2736 = vrot.lane.b32.xlu0 %v2703, 4
      %v2737 = vpop.permute.xlu0 %2736
      %2738 = vrot.lane.b32.xlu0 %v2704, 4
      %v2739 = vpop.permute.xlu0 %2738
      %2740 = vrot.lane.b32.xlu0 %v2705, 4
      %v2741 = vpop.permute.xlu0 %2740
      %2742 = vrot.lane.b32.xlu0 %v2706, 4
      %v2743 = vpop.permute.xlu0 %2742
      %2744 = vrot.lane.b32.xlu0 %v2707, 4
      %v2745 = vpop.permute.xlu0 %2744
      %2746 = vrot.lane.b32.xlu0 %v2708, 4
      %v2747 = vpop.permute.xlu0 %2746
      %2748 = vrot.lane.b32.xlu0 %v2709, 4
      %v2749 = vpop.permute.xlu0 %2748
      %2750 = vrot.lane.b32.xlu0 %v2710, 4
      %v2751 = vpop.permute.xlu0 %2750
      %2752 = vrot.lane.b32.xlu0 %v2711, 4
      %v2753 = vpop.permute.xlu0 %2752
      %2754 = vrot.lane.b32.xlu0 %v2712, 4
      %v2755 = vpop.permute.xlu0 %2754
      %2756 = vrot.lane.b32.xlu0 %v2713, 4
      %v2757 = vpop.permute.xlu0 %2756
      %2758 = vrot.lane.b32.xlu0 %v2714, 4
      %v2759 = vpop.permute.xlu0 %2758
      %2760 = vrot.lane.b32.xlu0 %v2715, 4
      %v2761 = vpop.permute.xlu0 %2760
      %2762 = vrot.lane.b32.xlu0 %v2716, 4
      %v2763 = vpop.permute.xlu0 %2762
      %2764 = vrot.lane.b32.xlu0 %v2717, 4
      %v2765 = vpop.permute.xlu0 %2764
      %v2782 = vadd.f32 %v2686, %v2735
      %v2783 = vadd.f32 %v2687, %v2737
      %v2784 = vadd.f32 %v2688, %v2739
      %v2785 = vadd.f32 %v2689, %v2741
      %v2786 = vadd.f32 %v2690, %v2743
      %v2787 = vadd.f32 %v2691, %v2745
      %v2788 = vadd.f32 %v2692, %v2747
      %v2789 = vadd.f32 %v2693, %v2749
      %v2790 = vadd.f32 %v2694, %v2751
      %v2791 = vadd.f32 %v2695, %v2753
      %v2792 = vadd.f32 %v2696, %v2755
      %v2793 = vadd.f32 %v2697, %v2757
      %v2794 = vadd.f32 %v2698, %v2759
      %v2795 = vadd.f32 %v2699, %v2761
      %v2796 = vadd.f32 %v2700, %v2763
      %v2797 = vadd.f32 %v2701, %v2765
      %v2814 = vrot.slane %v2671, 7
      %v2815 = vsel %vm623, %v2814, %v2670
      %v2816 = vrot.slane %v2672, 6
      %v2817 = vsel %vm626, %v2816, %v2815
      %v2818 = vrot.slane %v2673, 5
      %v2819 = vsel %vm629, %v2818, %v2817
      %v2820 = vrot.slane %v2674, 4
      %v2821 = vsel %vm632, %v2820, %v2819
      %v2822 = vrot.slane %v2675, 3
      %v2823 = vsel %vm635, %v2822, %v2821
      %v2824 = vrot.slane %v2676, 2
      %v2825 = vsel %vm638, %v2824, %v2823
      %v2826 = vrot.slane %v2677, 1
      %v2827 = vsel %vm641, %v2826, %v2825
      %v2828 = vrot.slane %v2679, 7
      %v2829 = vsel %vm623, %v2828, %v2678
      %v2830 = vrot.slane %v2680, 6
      %v2831 = vsel %vm626, %v2830, %v2829
      %v2832 = vrot.slane %v2681, 5
      %v2833 = vsel %vm629, %v2832, %v2831
      %v2834 = vrot.slane %v2682, 4
      %v2835 = vsel %vm632, %v2834, %v2833
      %v2836 = vrot.slane %v2683, 3
      %v2837 = vsel %vm635, %v2836, %v2835
      %v2838 = vrot.slane %v2684, 2
      %v2839 = vsel %vm638, %v2838, %v2837
      %v2840 = vrot.slane %v2685, 1
      %v2841 = vsel %vm641, %v2840, %v2839
      %v2860 = vrot.slane %v2783, 7
      %v2861 = vsel %vm623, %v2860, %v2782
      %v2862 = vrot.slane %v2784, 6
      %v2863 = vsel %vm626, %v2862, %v2861
      %v2864 = vrot.slane %v2785, 5
      %v2865 = vsel %vm629, %v2864, %v2863
      %v2866 = vrot.slane %v2786, 4
      %v2867 = vsel %vm632, %v2866, %v2865
      %v2868 = vrot.slane %v2787, 3
      %v2869 = vsel %vm635, %v2868, %v2867
      %v2870 = vrot.slane %v2788, 2
      %v2871 = vsel %vm638, %v2870, %v2869
      %v2872 = vrot.slane %v2789, 1
      %v2873 = vsel %vm641, %v2872, %v2871
      %v2874 = vrot.slane %v2791, 7
      %v2875 = vsel %vm623, %v2874, %v2790
      %v2876 = vrot.slane %v2792, 6
      %v2877 = vsel %vm626, %v2876, %v2875
      %v2878 = vrot.slane %v2793, 5
      %v2879 = vsel %vm629, %v2878, %v2877
      %v2880 = vrot.slane %v2794, 4
      %v2881 = vsel %vm632, %v2880, %v2879
      %v2882 = vrot.slane %v2795, 3
      %v2883 = vsel %vm635, %v2882, %v2881
      %v2884 = vrot.slane %v2796, 2
      %v2885 = vsel %vm638, %v2884, %v2883
      %v2886 = vrot.slane %v2797, 1
      %v2887 = vsel %vm641, %v2886, %v2885
      %v2890 = vsel %vm705, %v2827, %v2873
      %v2891 = vsel %vm705, %v2841, %v2887
      %v2892 = vld [vmem:[%s1045 + $0x2] sm:$0x1]
      %v2893 = vld [vmem:[%s1045 + $0xe] sm:$0x1]
      %v2894 = vld [vmem:[%s1045 + $0x1a] sm:$0x1]
      %v2895 = vld [vmem:[%s1045 + $0x26] sm:$0x1]
      %v2896 = vld [vmem:[%s1045 + $0x32] sm:$0x1]
      %v2897 = vld [vmem:[%s1045 + $0x3e] sm:$0x1]
      %v2898 = vld [vmem:[%s1045 + $0x4a] sm:$0x1]
      %v2899 = vld [vmem:[%s1045 + $0x56] sm:$0x1]
      %v2900 = vld [vmem:[%s1045 + $0x62] sm:$0x1]
      %v2901 = vld [vmem:[%s1045 + $0x6e] sm:$0x1]
      %v2902 = vld [vmem:[%s1045 + $0x7a] sm:$0x1]
      %v2903 = vld [vmem:[%s1045 + $0x86] sm:$0x1]
      %v2904 = vld [vmem:[%s1045 + $0x92] sm:$0x1]
      %v2905 = vld [vmem:[%s1045 + $0x9e] sm:$0x1]
      %v2906 = vld [vmem:[%s1045 + $0xaa] sm:$0x1]
      %v2907 = vld [vmem:[%s1045 + $0xb6] sm:$0x1]
      %v2909 = vsel %vm1062, %v2556, 0
      %v2912 = vsel %vm1062, %v2557, 0
      %v2915 = vsel %vm1062, %v2890, 0
      %v2918 = vsel %vm1062, %v2891, 0
      %2920 = vmatprep.subr.mxu0 0.0
      %2921 = vmatpush1.xpose.msra.mxu0 %v2915
      %2922 = vmatprep.subr.mxu0 0.0
      %2923 = vmatpush1.xpose.msra.mxu0 %v2918
      %2924 = vmatprep.subr.mxu0 0.0
      %2925 = vmatpush1.xpose.msra.mxu0 0.0
      %2926 = vmatprep.subr.mxu0 0.0
      %2927 = vmatpush1.xpose.msra.mxu0 0.0
      %2928 = vmatprep.subr.mxu0 0.0
      %2929 = vmatpush1.xpose.msra.mxu0 0.0
      %2930 = vmatprep.subr.mxu0 0.0
      %2931 = vmatpush1.xpose.msra.mxu0 0.0
      %2932 = vmatprep.subr.mxu0 0.0
      %2933 = vmatpush1.xpose.msra.mxu0 0.0
      %2934 = vmatprep.subr.mxu0 0.0
      %2935 = vmatpush1.xpose.msra.mxu0 0.0
      %2936 = vmatprep.subr.mxu0 0.0
      %2937 = vmatpush1.xpose.msra.mxu0 0.0
      %2938 = vmatprep.subr.mxu0 0.0
      %2939 = vmatpush1.xpose.msra.mxu0 0.0
      %2940 = vmatprep.subr.mxu0 0.0
      %2941 = vmatpush1.xpose.msra.mxu0 0.0
      %2942 = vmatprep.subr.mxu0 0.0
      %2943 = vmatpush1.xpose.msra.mxu0 0.0
      %2944 = vmatprep.subr.mxu0 0.0
      %2945 = vmatpush1.xpose.msra.mxu0 0.0
      %2946 = vmatprep.subr.mxu0 0.0
      %2947 = vmatpush1.xpose.msra.mxu0 0.0
      %2948 = vmatprep.subr.mxu0 0.0
      %2949 = vmatpush1.xpose.msra.mxu0 0.0
      %2950 = vmatprep.subr.mxu0 0.0
      %2951 = vmatpush1.xpose.msra.mxu0 0.0
      %2952 = vmatprep.subr.mxu0 0.0
      %2953 = vmatpush1.xpose.msra.mxu0 0.0
      %2954 = vmatprep.subr.mxu0 0.0
      %2955 = vmatpush1.xpose.msra.mxu0 0.0
      %2956 = vmatprep.subr.mxu0 0.0
      %2957 = vmatpush1.xpose.msra.mxu0 0.0
      %2958 = vmatprep.subr.mxu0 0.0
      %2959 = vmatpush1.xpose.msra.mxu0 0.0
      %2960 = vmatprep.subr.mxu0 0.0
      %2961 = vmatpush1.xpose.msra.mxu0 0.0
      %2962 = vmatprep.subr.mxu0 0.0
      %2963 = vmatpush1.xpose.msra.mxu0 0.0
      %2964 = vmatprep.subr.mxu0 0.0
      %2965 = vmatpush1.xpose.msra.mxu0 0.0
      %2966 = vmatprep.subr.mxu0 0.0
      %2967 = vmatpush1.xpose.msra.mxu0 0.0
      %2968 = vmatprep.subr.mxu0 0.0
      %2969 = vmatpush1.xpose.msra.mxu0 0.0
      %2970 = vmatprep.subr.mxu0 0.0
      %2971 = vmatpush1.xpose.msra.mxu0 0.0
      %2972 = vmatprep.subr.mxu0 0.0
      %2973 = vmatpush1.xpose.msra.mxu0 0.0
      %2974 = vmatprep.subr.mxu0 0.0
      %2975 = vmatpush1.xpose.msra.mxu0 0.0
      %2976 = vmatprep.subr.mxu0 0.0
      %2977 = vmatpush1.xpose.msra.mxu0 0.0
      %2978 = vmatprep.subr.mxu0 0.0
      %2979 = vmatpush1.xpose.msra.mxu0 0.0
      %2980 = vmatprep.subr.mxu0 0.0
      %2981 = vmatpush1.xpose.msra.mxu0 0.0
      %2982 = vmatprep.subr.mxu0 0.0
      %2983 = vmatpush1.xpose.msra.mxu0 0.0
      %2984 = vmatprep.mubr.f32.mxu0 0.0
      %2985 = vmatmul.mubr.f32.gmra.mrb[0].mxu0 %v2909
      %v2986 = vpop.f32.mrb[0].mxu0
      %v2987 = vadd.f32 0.0, %v2986
      %v2988 = vpop.f32.mrb[0].mxu0
      %2989 = vmatprep.mubr.f32.mxu0 0.0
      %2990 = vmatmul.mubr.f32.gmra.mrb[0].mxu0 %v2912
      %v2991 = vpop.f32.mrb[0].mxu0
      %v2992 = vadd.f32 0.0, %v2991
      %v2993 = vpop.f32.mrb[0].mxu0
      %2994 = vdwg.mxu0
      %v2995 = vsel %vm1150, %v2987, -inf
      %2996 = vmax.xlane.f32.xlu0 %v2995
      %v2997 = vpop.xlane.xlu0 %2996
      %v2998 = vsel %vm1150, %v2992, -inf
      %2999 = vmax.xlane.f32.xlu0 %v2998
      %v3000 = vpop.xlane.xlu0 %2999
      %v3001 = vsub.f32 %v2987, %v2997
      %v3002 = vsub.f32 %v2992, %v3000
      %v3003 = vmul.f32 %v3001, 1.442695
      %v3004 = vpow.pop %v3003
      %v3005 = vmul.f32 %v3002, 1.442695
      %v3006 = vpow.pop %v3005
      %v3007 = vsel %vm1150, %v3004, 0.0
      %3008 = vadd.xlane.f32.xlu0 %v3007
      %v3009 = vpop.xlane.xlu0 %3008
      %v3010 = vsel %vm1150, %v3006, 0.0
      %3011 = vadd.xlane.f32.xlu0 %v3010
      %v3012 = vpop.xlane.xlu0 %3011
      %v3029 = vrot.slane %v2893, 7
      %v3030 = vsel %vm623, %v3029, %v2892
      %v3031 = vrot.slane %v2894, 6
      %v3032 = vsel %vm626, %v3031, %v3030
      %v3033 = vrot.slane %v2895, 5
      %v3034 = vsel %vm629, %v3033, %v3032
      %v3035 = vrot.slane %v2896, 4
      %v3036 = vsel %vm632, %v3035, %v3034
      %v3037 = vrot.slane %v2897, 3
      %v3038 = vsel %vm635, %v3037, %v3036
      %v3039 = vrot.slane %v2898, 2
      %v3040 = vsel %vm638, %v3039, %v3038
      %v3041 = vrot.slane %v2899, 1
      %v3042 = vsel %vm641, %v3041, %v3040
      %v3043 = vrot.slane %v2901, 7
      %v3044 = vsel %vm623, %v3043, %v2900
      %v3045 = vrot.slane %v2902, 6
      %v3046 = vsel %vm626, %v3045, %v3044
      %v3047 = vrot.slane %v2903, 5
      %v3048 = vsel %vm629, %v3047, %v3046
      %v3049 = vrot.slane %v2904, 4
      %v3050 = vsel %vm632, %v3049, %v3048
      %v3051 = vrot.slane %v2905, 3
      %v3052 = vsel %vm635, %v3051, %v3050
      %v3053 = vrot.slane %v2906, 2
      %v3054 = vsel %vm638, %v3053, %v3052
      %v3055 = vrot.slane %v2907, 1
      %v3056 = vsel %vm641, %v3055, %v3054
      %v3060 = vsel %vm1150, %v3004, 0
      %v3063 = vsel %vm1150, %v3006, 0
      %3065 = vmatprep.subr.mxu0 0.0
      %3066 = vmatpush1.msra.mxu0 %v3042
      %3067 = vmatprep.subr.mxu0 0.0
      %3068 = vmatpush1.msra.mxu0 %v3056
      %3069 = vmatprep.subr.mxu0 0.0
      %3070 = vmatpush1.msra.mxu0 0.0
      %3071 = vmatprep.subr.mxu0 0.0
      %3072 = vmatpush1.msra.mxu0 0.0
      %3073 = vmatprep.subr.mxu0 0.0
      %3074 = vmatpush1.msra.mxu0 0.0
      %3075 = vmatprep.subr.mxu0 0.0
      %3076 = vmatpush1.msra.mxu0 0.0
      %3077 = vmatprep.subr.mxu0 0.0
      %3078 = vmatpush1.msra.mxu0 0.0
      %3079 = vmatprep.subr.mxu0 0.0
      %3080 = vmatpush1.msra.mxu0 0.0
      %3081 = vmatprep.subr.mxu0 0.0
      %3082 = vmatpush1.msra.mxu0 0.0
      %3083 = vmatprep.subr.mxu0 0.0
      %3084 = vmatpush1.msra.mxu0 0.0
      %3085 = vmatprep.subr.mxu0 0.0
      %3086 = vmatpush1.msra.mxu0 0.0
      %3087 = vmatprep.subr.mxu0 0.0
      %3088 = vmatpush1.msra.mxu0 0.0
      %3089 = vmatprep.subr.mxu0 0.0
      %3090 = vmatpush1.msra.mxu0 0.0
      %3091 = vmatprep.subr.mxu0 0.0
      %3092 = vmatpush1.msra.mxu0 0.0
      %3093 = vmatprep.subr.mxu0 0.0
      %3094 = vmatpush1.msra.mxu0 0.0
      %3095 = vmatprep.subr.mxu0 0.0
      %3096 = vmatpush1.msra.mxu0 0.0
      %3097 = vmatprep.subr.mxu0 0.0
      %3098 = vmatpush1.msra.mxu0 0.0
      %3099 = vmatprep.subr.mxu0 0.0
      %3100 = vmatpush1.msra.mxu0 0.0
      %3101 = vmatprep.subr.mxu0 0.0
      %3102 = vmatpush1.msra.mxu0 0.0
      %3103 = vmatprep.subr.mxu0 0.0
      %3104 = vmatpush1.msra.mxu0 0.0
      %3105 = vmatprep.subr.mxu0 0.0
      %3106 = vmatpush1.msra.mxu0 0.0
      %3107 = vmatprep.subr.mxu0 0.0
      %3108 = vmatpush1.msra.mxu0 0.0
      %3109 = vmatprep.subr.mxu0 0.0
      %3110 = vmatpush1.msra.mxu0 0.0
      %3111 = vmatprep.subr.mxu0 0.0
      %3112 = vmatpush1.msra.mxu0 0.0
      %3113 = vmatprep.subr.mxu0 0.0
      %3114 = vmatpush1.msra.mxu0 0.0
      %3115 = vmatprep.subr.mxu0 0.0
      %3116 = vmatpush1.msra.mxu0 0.0
      %3117 = vmatprep.subr.mxu0 0.0
      %3118 = vmatpush1.msra.mxu0 0.0
      %3119 = vmatprep.subr.mxu0 0.0
      %3120 = vmatpush1.msra.mxu0 0.0
      %3121 = vmatprep.subr.mxu0 0.0
      %3122 = vmatpush1.msra.mxu0 0.0
      %3123 = vmatprep.subr.mxu0 0.0
      %3124 = vmatpush1.msra.mxu0 0.0
      %3125 = vmatprep.subr.mxu0 0.0
      %3126 = vmatpush1.msra.mxu0 0.0
      %3127 = vmatprep.subr.mxu0 0.0
      %3128 = vmatpush1.msra.mxu0 0.0
      %3129 = vmatprep.mubr.f32.mxu0 0.0
      %3130 = vmatmul.mubr.f32.gmra.mrb[0].mxu0 %v3060
      %v3131 = vpop.f32.mrb[0].mxu0
      %v3132 = vadd.f32 0.0, %v3131
      %v3133 = vpop.f32.mrb[0].mxu0
      %3134 = vmatprep.mubr.f32.mxu0 0.0
      %3135 = vmatmul.mubr.f32.gmra.mrb[0].mxu0 %v3063
      %v3136 = vpop.f32.mrb[0].mxu0
      %v3137 = vadd.f32 0.0, %v3136
      %v3138 = vpop.f32.mrb[0].mxu0
      %3139 = vdwg.mxu0
      %v3140 = vrcp.pop %v3009
      %v3141 = vrcp.pop %v3012
      %v3142 = vmul.f32 %v3132, %v3140
      %v3143 = vmul.f32 %v3137, %v3141
      %v3144 = vld [vmem:[%s193 + $0x3] sm:$0x1]
      %v3145 = vld [vmem:[%s193 + $0xf] sm:$0x1]
      %v3146 = vld [vmem:[%s193 + $0x1b] sm:$0x1]
      %v3147 = vld [vmem:[%s193 + $0x27] sm:$0x1]
      %v3148 = vld [vmem:[%s193 + $0x33] sm:$0x1]
      %v3149 = vld [vmem:[%s193 + $0x3f] sm:$0x1]
      %v3150 = vld [vmem:[%s193 + $0x4b] sm:$0x1]
      %v3151 = vld [vmem:[%s193 + $0x57] sm:$0x1]
      %v3152 = vld [vmem:[%s193 + $0x63] sm:$0x1]
      %v3153 = vld [vmem:[%s193 + $0x6f] sm:$0x1]
      %v3154 = vld [vmem:[%s193 + $0x7b] sm:$0x1]
      %v3155 = vld [vmem:[%s193 + $0x87] sm:$0x1]
      %v3156 = vld [vmem:[%s193 + $0x93] sm:$0x1]
      %v3157 = vld [vmem:[%s193 + $0x9f] sm:$0x1]
      %v3158 = vld [vmem:[%s193 + $0xab] sm:$0x1]
      %v3159 = vld [vmem:[%s193 + $0xb7] sm:$0x1]
      %v3160 = vmul.f32 %v3144, %v202
      %v3161 = vmul.f32 %v3145, %v224
      %v3162 = vmul.f32 %v3146, %v225
      %v3163 = vmul.f32 %v3147, %v226
      %v3164 = vmul.f32 %v3148, %v227
      %v3165 = vmul.f32 %v3149, %v228
      %v3166 = vmul.f32 %v3150, %v229
      %v3167 = vmul.f32 %v3151, %v230
      %v3168 = vmul.f32 %v3152, %v203
      %v3169 = vmul.f32 %v3153, %v231
      %v3170 = vmul.f32 %v3154, %v232
      %v3171 = vmul.f32 %v3155, %v233
      %v3172 = vmul.f32 %v3156, %v234
      %v3173 = vmul.f32 %v3157, %v235
      %v3174 = vmul.f32 %v3158, %v236
      %v3175 = vmul.f32 %v3159, %v237
      %v3176 = vmul.f32 %v3144, %v287
      %v3177 = vmul.f32 %v3145, %v289
      %v3178 = vmul.f32 %v3146, %v291
      %v3179 = vmul.f32 %v3147, %v293
      %v3180 = vmul.f32 %v3148, %v295
      %v3181 = vmul.f32 %v3149, %v297
      %v3182 = vmul.f32 %v3150, %v299
      %v3183 = vmul.f32 %v3151, %v301
      %v3184 = vmul.f32 %v3152, %v303
      %v3185 = vmul.f32 %v3153, %v305
      %v3186 = vmul.f32 %v3154, %v307
      %v3187 = vmul.f32 %v3155, %v309
      %v3188 = vmul.f32 %v3156, %v311
      %v3189 = vmul.f32 %v3157, %v313
      %v3190 = vmul.f32 %v3158, %v315
      %v3191 = vmul.f32 %v3159, %v317
      %3208 = vrot.lane.b32.xlu0 %v3176, 124
      %v3209 = vpop.permute.xlu0 %3208
      %3210 = vrot.lane.b32.xlu0 %v3177, 124
      %v3211 = vpop.permute.xlu0 %3210
      %3212 = vrot.lane.b32.xlu0 %v3178, 124
      %v3213 = vpop.permute.xlu0 %3212
      %3214 = vrot.lane.b32.xlu0 %v3179, 124
      %v3215 = vpop.permute.xlu0 %3214
      %3216 = vrot.lane.b32.xlu0 %v3180, 124
      %v3217 = vpop.permute.xlu0 %3216
      %3218 = vrot.lane.b32.xlu0 %v3181, 124
      %v3219 = vpop.permute.xlu0 %3218
      %3220 = vrot.lane.b32.xlu0 %v3182, 124
      %v3221 = vpop.permute.xlu0 %3220
      %3222 = vrot.lane.b32.xlu0 %v3183, 124
      %v3223 = vpop.permute.xlu0 %3222
      %3224 = vrot.lane.b32.xlu0 %v3184, 124
      %v3225 = vpop.permute.xlu0 %3224
      %3226 = vrot.lane.b32.xlu0 %v3185, 124
      %v3227 = vpop.permute.xlu0 %3226
      %3228 = vrot.lane.b32.xlu0 %v3186, 124
      %v3229 = vpop.permute.xlu0 %3228
      %3230 = vrot.lane.b32.xlu0 %v3187, 124
      %v3231 = vpop.permute.xlu0 %3230
      %3232 = vrot.lane.b32.xlu0 %v3188, 124
      %v3233 = vpop.permute.xlu0 %3232
      %3234 = vrot.lane.b32.xlu0 %v3189, 124
      %v3235 = vpop.permute.xlu0 %3234
      %3236 = vrot.lane.b32.xlu0 %v3190, 124
      %v3237 = vpop.permute.xlu0 %3236
      %3238 = vrot.lane.b32.xlu0 %v3191, 124
      %v3239 = vpop.permute.xlu0 %3238
      %v3256 = vsub.f32 %v3160, %v3209
      %v3257 = vsub.f32 %v3161, %v3211
      %v3258 = vsub.f32 %v3162, %v3213
      %v3259 = vsub.f32 %v3163, %v3215
      %v3260 = vsub.f32 %v3164, %v3217
      %v3261 = vsub.f32 %v3165, %v3219
      %v3262 = vsub.f32 %v3166, %v3221
      %v3263 = vsub.f32 %v3167, %v3223
      %v3264 = vsub.f32 %v3168, %v3225
      %v3265 = vsub.f32 %v3169, %v3227
      %v3266 = vsub.f32 %v3170, %v3229
      %v3267 = vsub.f32 %v3171, %v3231
      %v3268 = vsub.f32 %v3172, %v3233
      %v3269 = vsub.f32 %v3173, %v3235
      %v3270 = vsub.f32 %v3174, %v3237
      %v3271 = vsub.f32 %v3175, %v3239
      %v3272 = vmul.f32 %v3144, %v431
      %v3273 = vmul.f32 %v3145, %v433
      %v3274 = vmul.f32 %v3146, %v435
      %v3275 = vmul.f32 %v3147, %v437
      %v3276 = vmul.f32 %v3148, %v439
      %v3277 = vmul.f32 %v3149, %v441
      %v3278 = vmul.f32 %v3150, %v443
      %v3279 = vmul.f32 %v3151, %v445
      %v3280 = vmul.f32 %v3152, %v447
      %v3281 = vmul.f32 %v3153, %v449
      %v3282 = vmul.f32 %v3154, %v451
      %v3283 = vmul.f32 %v3155, %v453
      %v3284 = vmul.f32 %v3156, %v455
      %v3285 = vmul.f32 %v3157, %v457
      %v3286 = vmul.f32 %v3158, %v459
      %v3287 = vmul.f32 %v3159, %v461
      %v3288 = vmul.f32 %v3144, %v204
      %v3289 = vmul.f32 %v3145, %v272
      %v3290 = vmul.f32 %v3146, %v273
      %v3291 = vmul.f32 %v3147, %v274
      %v3292 = vmul.f32 %v3148, %v275
      %v3293 = vmul.f32 %v3149, %v276
      %v3294 = vmul.f32 %v3150, %v277
      %v3295 = vmul.f32 %v3151, %v278
      %v3296 = vmul.f32 %v3152, %v205
      %v3297 = vmul.f32 %v3153, %v279
      %v3298 = vmul.f32 %v3154, %v280
      %v3299 = vmul.f32 %v3155, %v281
      %v3300 = vmul.f32 %v3156, %v282
      %v3301 = vmul.f32 %v3157, %v283
      %v3302 = vmul.f32 %v3158, %v284
      %v3303 = vmul.f32 %v3159, %v285
      %3320 = vrot.lane.b32.xlu0 %v3288, 4
      %v3321 = vpop.permute.xlu0 %3320
      %3322 = vrot.lane.b32.xlu0 %v3289, 4
      %v3323 = vpop.permute.xlu0 %3322
      %3324 = vrot.lane.b32.xlu0 %v3290, 4
      %v3325 = vpop.permute.xlu0 %3324
      %3326 = vrot.lane.b32.xlu0 %v3291, 4
      %v3327 = vpop.permute.xlu0 %3326
      %3328 = vrot.lane.b32.xlu0 %v3292, 4
      %v3329 = vpop.permute.xlu0 %3328
      %3330 = vrot.lane.b32.xlu0 %v3293, 4
      %v3331 = vpop.permute.xlu0 %3330
      %3332 = vrot.lane.b32.xlu0 %v3294, 4
      %v3333 = vpop.permute.xlu0 %3332
      %3334 = vrot.lane.b32.xlu0 %v3295, 4
      %v3335 = vpop.permute.xlu0 %3334
      %3336 = vrot.lane.b32.xlu0 %v3296, 4
      %v3337 = vpop.permute.xlu0 %3336
      %3338 = vrot.lane.b32.xlu0 %v3297, 4
      %v3339 = vpop.permute.xlu0 %3338
      %3340 = vrot.lane.b32.xlu0 %v3298, 4
      %v3341 = vpop.permute.xlu0 %3340
      %3342 = vrot.lane.b32.xlu0 %v3299, 4
      %v3343 = vpop.permute.xlu0 %3342
      %3344 = vrot.lane.b32.xlu0 %v3300, 4
      %v3345 = vpop.permute.xlu0 %3344
      %3346 = vrot.lane.b32.xlu0 %v3301, 4
      %v3347 = vpop.permute.xlu0 %3346
      %3348 = vrot.lane.b32.xlu0 %v3302, 4
      %v3349 = vpop.permute.xlu0 %3348
      %3350 = vrot.lane.b32.xlu0 %v3303, 4
      %v3351 = vpop.permute.xlu0 %3350
      %v3368 = vadd.f32 %v3272, %v3321
      %v3369 = vadd.f32 %v3273, %v3323
      %v3370 = vadd.f32 %v3274, %v3325
      %v3371 = vadd.f32 %v3275, %v3327
      %v3372 = vadd.f32 %v3276, %v3329
      %v3373 = vadd.f32 %v3277, %v3331
      %v3374 = vadd.f32 %v3278, %v3333
      %v3375 = vadd.f32 %v3279, %v3335
      %v3376 = vadd.f32 %v3280, %v3337
      %v3377 = vadd.f32 %v3281, %v3339
      %v3378 = vadd.f32 %v3282, %v3341
      %v3379 = vadd.f32 %v3283, %v3343
      %v3380 = vadd.f32 %v3284, %v3345
      %v3381 = vadd.f32 %v3285, %v3347
      %v3382 = vadd.f32 %v3286, %v3349
      %v3383 = vadd.f32 %v3287, %v3351
      %v3400 = vrot.slane %v3257, 7
      %v3401 = vsel %vm623, %v3400, %v3256
      %v3402 = vrot.slane %v3258, 6
      %v3403 = vsel %vm626, %v3402, %v3401
      %v3404 = vrot.slane %v3259, 5
      %v3405 = vsel %vm629, %v3404, %v3403
      %v3406 = vrot.slane %v3260, 4
      %v3407 = vsel %vm632, %v3406, %v3405
      %v3408 = vrot.slane %v3261, 3
      %v3409 = vsel %vm635, %v3408, %v3407
      %v3410 = vrot.slane %v3262, 2
      %v3411 = vsel %vm638, %v3410, %v3409
      %v3412 = vrot.slane %v3263, 1
      %v3413 = vsel %vm641, %v3412, %v3411
      %v3414 = vrot.slane %v3265, 7
      %v3415 = vsel %vm623, %v3414, %v3264
      %v3416 = vrot.slane %v3266, 6
      %v3417 = vsel %vm626, %v3416, %v3415
      %v3418 = vrot.slane %v3267, 5
      %v3419 = vsel %vm629, %v3418, %v3417
      %v3420 = vrot.slane %v3268, 4
      %v3421 = vsel %vm632, %v3420, %v3419
      %v3422 = vrot.slane %v3269, 3
      %v3423 = vsel %vm635, %v3422, %v3421
      %v3424 = vrot.slane %v3270, 2
      %v3425 = vsel %vm638, %v3424, %v3423
      %v3426 = vrot.slane %v3271, 1
      %v3427 = vsel %vm641, %v3426, %v3425
      %v3446 = vrot.slane %v3369, 7
      %v3447 = vsel %vm623, %v3446, %v3368
      %v3448 = vrot.slane %v3370, 6
      %v3449 = vsel %vm626, %v3448, %v3447
      %v3450 = vrot.slane %v3371, 5
      %v3451 = vsel %vm629, %v3450, %v3449
      %v3452 = vrot.slane %v3372, 4
      %v3453 = vsel %vm632, %v3452, %v3451
      %v3454 = vrot.slane %v3373, 3
      %v3455 = vsel %vm635, %v3454, %v3453
      %v3456 = vrot.slane %v3374, 2
      %v3457 = vsel %vm638, %v3456, %v3455
      %v3458 = vrot.slane %v3375, 1
      %v3459 = vsel %vm641, %v3458, %v3457
      %v3460 = vrot.slane %v3377, 7
      %v3461 = vsel %vm623, %v3460, %v3376
      %v3462 = vrot.slane %v3378, 6
      %v3463 = vsel %vm626, %v3462, %v3461
      %v3464 = vrot.slane %v3379, 5
      %v3465 = vsel %vm629, %v3464, %v3463
      %v3466 = vrot.slane %v3380, 4
      %v3467 = vsel %vm632, %v3466, %v3465
      %v3468 = vrot.slane %v3381, 3
      %v3469 = vsel %vm635, %v3468, %v3467
      %v3470 = vrot.slane %v3382, 2
      %v3471 = vsel %vm638, %v3470, %v3469
      %v3472 = vrot.slane %v3383, 1
      %v3473 = vsel %vm641, %v3472, %v3471
      %v3476 = vsel %vm705, %v3413, %v3459
      %v3477 = vsel %vm705, %v3427, %v3473
      %v3478 = vmul.f32 %v3476, 0.35355338
      %v3479 = vmul.f32 %v3477, 0.35355338
      %v3480 = vld [vmem:[%s710 + $0x3] sm:$0x1]
      %v3481 = vld [vmem:[%s710 + $0xf] sm:$0x1]
      %v3482 = vld [vmem:[%s710 + $0x1b] sm:$0x1]
      %v3483 = vld [vmem:[%s710 + $0x27] sm:$0x1]
      %v3484 = vld [vmem:[%s710 + $0x33] sm:$0x1]
      %v3485 = vld [vmem:[%s710 + $0x3f] sm:$0x1]
      %v3486 = vld [vmem:[%s710 + $0x4b] sm:$0x1]
      %v3487 = vld [vmem:[%s710 + $0x57] sm:$0x1]
      %v3488 = vld [vmem:[%s710 + $0x63] sm:$0x1]
      %v3489 = vld [vmem:[%s710 + $0x6f] sm:$0x1]
      %v3490 = vld [vmem:[%s710 + $0x7b] sm:$0x1]
      %v3491 = vld [vmem:[%s710 + $0x87] sm:$0x1]
      %v3492 = vld [vmem:[%s710 + $0x93] sm:$0x1]
      %v3493 = vld [vmem:[%s710 + $0x9f] sm:$0x1]
      %v3494 = vld [vmem:[%s710 + $0xab] sm:$0x1]
      %v3495 = vld [vmem:[%s710 + $0xb7] sm:$0x1]
      %v3496 = vmul.f32 %v3480, %v202
      %v3497 = vmul.f32 %v3481, %v224
      %v3498 = vmul.f32 %v3482, %v225
      %v3499 = vmul.f32 %v3483, %v226
      %v3500 = vmul.f32 %v3484, %v227
      %v3501 = vmul.f32 %v3485, %v228
      %v3502 = vmul.f32 %v3486, %v229
      %v3503 = vmul.f32 %v3487, %v230
      %v3504 = vmul.f32 %v3488, %v203
      %v3505 = vmul.f32 %v3489, %v231
      %v3506 = vmul.f32 %v3490, %v232
      %v3507 = vmul.f32 %v3491, %v233
      %v3508 = vmul.f32 %v3492, %v234
      %v3509 = vmul.f32 %v3493, %v235
      %v3510 = vmul.f32 %v3494, %v236
      %v3511 = vmul.f32 %v3495, %v237
      %v3512 = vmul.f32 %v3480, %v287
      %v3513 = vmul.f32 %v3481, %v289
      %v3514 = vmul.f32 %v3482, %v291
      %v3515 = vmul.f32 %v3483, %v293
      %v3516 = vmul.f32 %v3484, %v295
      %v3517 = vmul.f32 %v3485, %v297
      %v3518 = vmul.f32 %v3486, %v299
      %v3519 = vmul.f32 %v3487, %v301
      %v3520 = vmul.f32 %v3488, %v303
      %v3521 = vmul.f32 %v3489, %v305
      %v3522 = vmul.f32 %v3490, %v307
      %v3523 = vmul.f32 %v3491, %v309
      %v3524 = vmul.f32 %v3492, %v311
      %v3525 = vmul.f32 %v3493, %v313
      %v3526 = vmul.f32 %v3494, %v315
      %v3527 = vmul.f32 %v3495, %v317
      %3544 = vrot.lane.b32.xlu0 %v3512, 124
      %v3545 = vpop.permute.xlu0 %3544
      %3546 = vrot.lane.b32.xlu0 %v3513, 124
      %v3547 = vpop.permute.xlu0 %3546
      %3548 = vrot.lane.b32.xlu0 %v3514, 124
      %v3549 = vpop.permute.xlu0 %3548
      %3550 = vrot.lane.b32.xlu0 %v3515, 124
      %v3551 = vpop.permute.xlu0 %3550
      %3552 = vrot.lane.b32.xlu0 %v3516, 124
      %v3553 = vpop.permute.xlu0 %3552
      %3554 = vrot.lane.b32.xlu0 %v3517, 124
      %v3555 = vpop.permute.xlu0 %3554
      %3556 = vrot.lane.b32.xlu0 %v3518, 124
      %v3557 = vpop.permute.xlu0 %3556
      %3558 = vrot.lane.b32.xlu0 %v3519, 124
      %v3559 = vpop.permute.xlu0 %3558
      %3560 = vrot.lane.b32.xlu0 %v3520, 124
      %v3561 = vpop.permute.xlu0 %3560
      %3562 = vrot.lane.b32.xlu0 %v3521, 124
      %v3563 = vpop.permute.xlu0 %3562
      %3564 = vrot.lane.b32.xlu0 %v3522, 124
      %v3565 = vpop.permute.xlu0 %3564
      %3566 = vrot.lane.b32.xlu0 %v3523, 124
      %v3567 = vpop.permute.xlu0 %3566
      %3568 = vrot.lane.b32.xlu0 %v3524, 124
      %v3569 = vpop.permute.xlu0 %3568
      %3570 = vrot.lane.b32.xlu0 %v3525, 124
      %v3571 = vpop.permute.xlu0 %3570
      %3572 = vrot.lane.b32.xlu0 %v3526, 124
      %v3573 = vpop.permute.xlu0 %3572
      %3574 = vrot.lane.b32.xlu0 %v3527, 124
      %v3575 = vpop.permute.xlu0 %3574
      %v3592 = vsub.f32 %v3496, %v3545
      %v3593 = vsub.f32 %v3497, %v3547
      %v3594 = vsub.f32 %v3498, %v3549
      %v3595 = vsub.f32 %v3499, %v3551
      %v3596 = vsub.f32 %v3500, %v3553
      %v3597 = vsub.f32 %v3501, %v3555
      %v3598 = vsub.f32 %v3502, %v3557
      %v3599 = vsub.f32 %v3503, %v3559
      %v3600 = vsub.f32 %v3504, %v3561
      %v3601 = vsub.f32 %v3505, %v3563
      %v3602 = vsub.f32 %v3506, %v3565
      %v3603 = vsub.f32 %v3507, %v3567
      %v3604 = vsub.f32 %v3508, %v3569
      %v3605 = vsub.f32 %v3509, %v3571
      %v3606 = vsub.f32 %v3510, %v3573
      %v3607 = vsub.f32 %v3511, %v3575
      %v3608 = vmul.f32 %v3480, %v431
      %v3609 = vmul.f32 %v3481, %v433
      %v3610 = vmul.f32 %v3482, %v435
      %v3611 = vmul.f32 %v3483, %v437
      %v3612 = vmul.f32 %v3484, %v439
      %v3613 = vmul.f32 %v3485, %v441
      %v3614 = vmul.f32 %v3486, %v443
      %v3615 = vmul.f32 %v3487, %v445
      %v3616 = vmul.f32 %v3488, %v447
      %v3617 = vmul.f32 %v3489, %v449
      %v3618 = vmul.f32 %v3490, %v451
      %v3619 = vmul.f32 %v3491, %v453
      %v3620 = vmul.f32 %v3492, %v455
      %v3621 = vmul.f32 %v3493, %v457
      %v3622 = vmul.f32 %v3494, %v459
      %v3623 = vmul.f32 %v3495, %v461
      %v3624 = vmul.f32 %v3480, %v204
      %v3625 = vmul.f32 %v3481, %v272
      %v3626 = vmul.f32 %v3482, %v273
      %v3627 = vmul.f32 %v3483, %v274
      %v3628 = vmul.f32 %v3484, %v275
      %v3629 = vmul.f32 %v3485, %v276
      %v3630 = vmul.f32 %v3486, %v277
      %v3631 = vmul.f32 %v3487, %v278
      %v3632 = vmul.f32 %v3488, %v205
      %v3633 = vmul.f32 %v3489, %v279
      %v3634 = vmul.f32 %v3490, %v280
      %v3635 = vmul.f32 %v3491, %v281
      %v3636 = vmul.f32 %v3492, %v282
      %v3637 = vmul.f32 %v3493, %v283
      %v3638 = vmul.f32 %v3494, %v284
      %v3639 = vmul.f32 %v3495, %v285
      %3656 = vrot.lane.b32.xlu0 %v3624, 4
      %v3657 = vpop.permute.xlu0 %3656
      %3658 = vrot.lane.b32.xlu0 %v3625, 4
      %v3659 = vpop.permute.xlu0 %3658
      %3660 = vrot.lane.b32.xlu0 %v3626, 4
      %v3661 = vpop.permute.xlu0 %3660
      %3662 = vrot.lane.b32.xlu0 %v3627, 4
      %v3663 = vpop.permute.xlu0 %3662
      %3664 = vrot.lane.b32.xlu0 %v3628, 4
      %v3665 = vpop.permute.xlu0 %3664
      %3666 = vrot.lane.b32.xlu0 %v3629, 4
      %v3667 = vpop.permute.xlu0 %3666
      %3668 = vrot.lane.b32.xlu0 %v3630, 4
      %v3669 = vpop.permute.xlu0 %3668
      %3670 = vrot.lane.b32.xlu0 %v3631, 4
      %v3671 = vpop.permute.xlu0 %3670
      %3672 = vrot.lane.b32.xlu0 %v3632, 4
      %v3673 = vpop.permute.xlu0 %3672
      %3674 = vrot.lane.b32.xlu0 %v3633, 4
      %v3675 = vpop.permute.xlu0 %3674
      %3676 = vrot.lane.b32.xlu0 %v3634, 4
      %v3677 = vpop.permute.xlu0 %3676
      %3678 = vrot.lane.b32.xlu0 %v3635, 4
      %v3679 = vpop.permute.xlu0 %3678
      %3680 = vrot.lane.b32.xlu0 %v3636, 4
      %v3681 = vpop.permute.xlu0 %3680
      %3682 = vrot.lane.b32.xlu0 %v3637, 4
      %v3683 = vpop.permute.xlu0 %3682
      %3684 = vrot.lane.b32.xlu0 %v3638, 4
      %v3685 = vpop.permute.xlu0 %3684
      %3686 = vrot.lane.b32.xlu0 %v3639, 4
      %v3687 = vpop.permute.xlu0 %3686
      %v3704 = vadd.f32 %v3608, %v3657
      %v3705 = vadd.f32 %v3609, %v3659
      %v3706 = vadd.f32 %v3610, %v3661
      %v3707 = vadd.f32 %v3611, %v3663
      %v3708 = vadd.f32 %v3612, %v3665
      %v3709 = vadd.f32 %v3613, %v3667
      %v3710 = vadd.f32 %v3614, %v3669
      %v3711 = vadd.f32 %v3615, %v3671
      %v3712 = vadd.f32 %v3616, %v3673
      %v3713 = vadd.f32 %v3617, %v3675
      %v3714 = vadd.f32 %v3618, %v3677
      %v3715 = vadd.f32 %v3619, %v3679
      %v3716 = vadd.f32 %v3620, %v3681
      %v3717 = vadd.f32 %v3621, %v3683
      %v3718 = vadd.f32 %v3622, %v3685
      %v3719 = vadd.f32 %v3623, %v3687
      %v3736 = vrot.slane %v3593, 7
      %v3737 = vsel %vm623, %v3736, %v3592
      %v3738 = vrot.slane %v3594, 6
      %v3739 = vsel %vm626, %v3738, %v3737
      %v3740 = vrot.slane %v3595, 5
      %v3741 = vsel %vm629, %v3740, %v3739
      %v3742 = vrot.slane %v3596, 4
      %v3743 = vsel %vm632, %v3742, %v3741
      %v3744 = vrot.slane %v3597, 3
      %v3745 = vsel %vm635, %v3744, %v3743
      %v3746 = vrot.slane %v3598, 2
      %v3747 = vsel %vm638, %v3746, %v3745
      %v3748 = vrot.slane %v3599, 1
      %v3749 = vsel %vm641, %v3748, %v3747
      %v3750 = vrot.slane %v3601, 7
      %v3751 = vsel %vm623, %v3750, %v3600
      %v3752 = vrot.slane %v3602, 6
      %v3753 = vsel %vm626, %v3752, %v3751
      %v3754 = vrot.slane %v3603, 5
      %v3755 = vsel %vm629, %v3754, %v3753
      %v3756 = vrot.slane %v3604, 4
      %v3757 = vsel %vm632, %v3756, %v3755
      %v3758 = vrot.slane %v3605, 3
      %v3759 = vsel %vm635, %v3758, %v3757
      %v3760 = vrot.slane %v3606, 2
      %v3761 = vsel %vm638, %v3760, %v3759
      %v3762 = vrot.slane %v3607, 1
      %v3763 = vsel %vm641, %v3762, %v3761
      %v3782 = vrot.slane %v3705, 7
      %v3783 = vsel %vm623, %v3782, %v3704
      %v3784 = vrot.slane %v3706, 6
      %v3785 = vsel %vm626, %v3784, %v3783
      %v3786 = vrot.slane %v3707, 5
      %v3787 = vsel %vm629, %v3786, %v3785
      %v3788 = vrot.slane %v3708, 4
      %v3789 = vsel %vm632, %v3788, %v3787
      %v3790 = vrot.slane %v3709, 3
      %v3791 = vsel %vm635, %v3790, %v3789
      %v3792 = vrot.slane %v3710, 2
      %v3793 = vsel %vm638, %v3792, %v3791
      %v3794 = vrot.slane %v3711, 1
      %v3795 = vsel %vm641, %v3794, %v3793
      %v3796 = vrot.slane %v3713, 7
      %v3797 = vsel %vm623, %v3796, %v3712
      %v3798 = vrot.slane %v3714, 6
      %v3799 = vsel %vm626, %v3798, %v3797
      %v3800 = vrot.slane %v3715, 5
      %v3801 = vsel %vm629, %v3800, %v3799
      %v3802 = vrot.slane %v3716, 4
      %v3803 = vsel %vm632, %v3802, %v3801
      %v3804 = vrot.slane %v3717, 3
      %v3805 = vsel %vm635, %v3804, %v3803
      %v3806 = vrot.slane %v3718, 2
      %v3807 = vsel %vm638, %v3806, %v3805
      %v3808 = vrot.slane %v3719, 1
      %v3809 = vsel %vm641, %v3808, %v3807
      %v3812 = vsel %vm705, %v3749, %v3795
      %v3813 = vsel %vm705, %v3763, %v3809
      %v3814 = vld [vmem:[%s1045 + $0x3] sm:$0x1]
      %v3815 = vld [vmem:[%s1045 + $0xf] sm:$0x1]
      %v3816 = vld [vmem:[%s1045 + $0x1b] sm:$0x1]
      %v3817 = vld [vmem:[%s1045 + $0x27] sm:$0x1]
      %v3818 = vld [vmem:[%s1045 + $0x33] sm:$0x1]
      %v3819 = vld [vmem:[%s1045 + $0x3f] sm:$0x1]
      %v3820 = vld [vmem:[%s1045 + $0x4b] sm:$0x1]
      %v3821 = vld [vmem:[%s1045 + $0x57] sm:$0x1]
      %v3822 = vld [vmem:[%s1045 + $0x63] sm:$0x1]
      %v3823 = vld [vmem:[%s1045 + $0x6f] sm:$0x1]
      %v3824 = vld [vmem:[%s1045 + $0x7b] sm:$0x1]
      %v3825 = vld [vmem:[%s1045 + $0x87] sm:$0x1]
      %v3826 = vld [vmem:[%s1045 + $0x93] sm:$0x1]
      %v3827 = vld [vmem:[%s1045 + $0x9f] sm:$0x1]
      %v3828 = vld [vmem:[%s1045 + $0xab] sm:$0x1]
      %v3829 = vld [vmem:[%s1045 + $0xb7] sm:$0x1]
      %v3831 = vsel %vm1062, %v3478, 0
      %v3834 = vsel %vm1062, %v3479, 0
      %v3837 = vsel %vm1062, %v3812, 0
      %v3840 = vsel %vm1062, %v3813, 0
      %3842 = vmatprep.subr.mxu0 0.0
      %3843 = vmatpush1.xpose.msra.mxu0 %v3837
      %3844 = vmatprep.subr.mxu0 0.0
      %3845 = vmatpush1.xpose.msra.mxu0 %v3840
      %3846 = vmatprep.subr.mxu0 0.0
      %3847 = vmatpush1.xpose.msra.mxu0 0.0
      %3848 = vmatprep.subr.mxu0 0.0
      %3849 = vmatpush1.xpose.msra.mxu0 0.0
      %3850 = vmatprep.subr.mxu0 0.0
      %3851 = vmatpush1.xpose.msra.mxu0 0.0
      %3852 = vmatprep.subr.mxu0 0.0
      %3853 = vmatpush1.xpose.msra.mxu0 0.0
      %3854 = vmatprep.subr.mxu0 0.0
      %3855 = vmatpush1.xpose.msra.mxu0 0.0
      %3856 = vmatprep.subr.mxu0 0.0
      %3857 = vmatpush1.xpose.msra.mxu0 0.0
      %3858 = vmatprep.subr.mxu0 0.0
      %3859 = vmatpush1.xpose.msra.mxu0 0.0
      %3860 = vmatprep.subr.mxu0 0.0
      %3861 = vmatpush1.xpose.msra.mxu0 0.0
      %3862 = vmatprep.subr.mxu0 0.0
      %3863 = vmatpush1.xpose.msra.mxu0 0.0
      %3864 = vmatprep.subr.mxu0 0.0
      %3865 = vmatpush1.xpose.msra.mxu0 0.0
      %3866 = vmatprep.subr.mxu0 0.0
      %3867 = vmatpush1.xpose.msra.mxu0 0.0
      %3868 = vmatprep.subr.mxu0 0.0
      %3869 = vmatpush1.xpose.msra.mxu0 0.0
      %3870 = vmatprep.subr.mxu0 0.0
      %3871 = vmatpush1.xpose.msra.mxu0 0.0
      %3872 = vmatprep.subr.mxu0 0.0
      %3873 = vmatpush1.xpose.msra.mxu0 0.0
      %3874 = vmatprep.subr.mxu0 0.0
      %3875 = vmatpush1.xpose.msra.mxu0 0.0
      %3876 = vmatprep.subr.mxu0 0.0
      %3877 = vmatpush1.xpose.msra.mxu0 0.0
      %3878 = vmatprep.subr.mxu0 0.0
      %3879 = vmatpush1.xpose.msra.mxu0 0.0
      %3880 = vmatprep.subr.mxu0 0.0
      %3881 = vmatpush1.xpose.msra.mxu0 0.0
      %3882 = vmatprep.subr.mxu0 0.0
      %3883 = vmatpush1.xpose.msra.mxu0 0.0
      %3884 = vmatprep.subr.mxu0 0.0
      %3885 = vmatpush1.xpose.msra.mxu0 0.0
      %3886 = vmatprep.subr.mxu0 0.0
      %3887 = vmatpush1.xpose.msra.mxu0 0.0
      %3888 = vmatprep.subr.mxu0 0.0
      %3889 = vmatpush1.xpose.msra.mxu0 0.0
      %3890 = vmatprep.subr.mxu0 0.0
      %3891 = vmatpush1.xpose.msra.mxu0 0.0
      %3892 = vmatprep.subr.mxu0 0.0
      %3893 = vmatpush1.xpose.msra.mxu0 0.0
      %3894 = vmatprep.subr.mxu0 0.0
      %3895 = vmatpush1.xpose.msra.mxu0 0.0
      %3896 = vmatprep.subr.mxu0 0.0
      %3897 = vmatpush1.xpose.msra.mxu0 0.0
      %3898 = vmatprep.subr.mxu0 0.0
      %3899 = vmatpush1.xpose.msra.mxu0 0.0
      %3900 = vmatprep.subr.mxu0 0.0
      %3901 = vmatpush1.xpose.msra.mxu0 0.0
      %3902 = vmatprep.subr.mxu0 0.0
      %3903 = vmatpush1.xpose.msra.mxu0 0.0
      %3904 = vmatprep.subr.mxu0 0.0
      %3905 = vmatpush1.xpose.msra.mxu0 0.0
      %3906 = vmatprep.mubr.f32.mxu0 0.0
      %3907 = vmatmul.mubr.f32.gmra.mrb[0].mxu0 %v3831
      %v3908 = vpop.f32.mrb[0].mxu0
      %v3909 = vadd.f32 0.0, %v3908
      %v3910 = vpop.f32.mrb[0].mxu0
      %3911 = vmatprep.mubr.f32.mxu0 0.0
      %3912 = vmatmul.mubr.f32.gmra.mrb[0].mxu0 %v3834
      %v3913 = vpop.f32.mrb[0].mxu0
      %v3914 = vadd.f32 0.0, %v3913
      %v3915 = vpop.f32.mrb[0].mxu0
      %3916 = vdwg.mxu0
      %v3917 = vsel %vm1150, %v3909, -inf
      %3918 = vmax.xlane.f32.xlu0 %v3917
      %v3919 = vpop.xlane.xlu0 %3918
      %v3920 = vsel %vm1150, %v3914, -inf
      %3921 = vmax.xlane.f32.xlu0 %v3920
      %v3922 = vpop.xlane.xlu0 %3921
      %v3923 = vsub.f32 %v3909, %v3919
      %v3924 = vsub.f32 %v3914, %v3922
      %v3925 = vmul.f32 %v3923, 1.442695
      %v3926 = vpow.pop %v3925
      %v3927 = vmul.f32 %v3924, 1.442695
      %v3928 = vpow.pop %v3927
      %v3929 = vsel %vm1150, %v3926, 0.0
      %3930 = vadd.xlane.f32.xlu0 %v3929
      %v3931 = vpop.xlane.xlu0 %3930
      %v3932 = vsel %vm1150, %v3928, 0.0
      %3933 = vadd.xlane.f32.xlu0 %v3932
      %v3934 = vpop.xlane.xlu0 %3933
      %v3951 = vrot.slane %v3815, 7
      %v3952 = vsel %vm623, %v3951, %v3814
      %v3953 = vrot.slane %v3816, 6
      %v3954 = vsel %vm626, %v3953, %v3952
      %v3955 = vrot.slane %v3817, 5
      %v3956 = vsel %vm629, %v3955, %v3954
      %v3957 = vrot.slane %v3818, 4
      %v3958 = vsel %vm632, %v3957, %v3956
      %v3959 = vrot.slane %v3819, 3
      %v3960 = vsel %vm635, %v3959, %v3958
      %v3961 = vrot.slane %v3820, 2
      %v3962 = vsel %vm638, %v3961, %v3960
      %v3963 = vrot.slane %v3821, 1
      %v3964 = vsel %vm641, %v3963, %v3962
      %v3965 = vrot.slane %v3823, 7
      %v3966 = vsel %vm623, %v3965, %v3822
      %v3967 = vrot.slane %v3824, 6
      %v3968 = vsel %vm626, %v3967, %v3966
      %v3969 = vrot.slane %v3825, 5
      %v3970 = vsel %vm629, %v3969, %v3968
      %v3971 = vrot.slane %v3826, 4
      %v3972 = vsel %vm632, %v3971, %v3970
      %v3973 = vrot.slane %v3827, 3
      %v3974 = vsel %vm635, %v3973, %v3972
      %v3975 = vrot.slane %v3828, 2
      %v3976 = vsel %vm638, %v3975, %v3974
      %v3977 = vrot.slane %v3829, 1
      %v3978 = vsel %vm641, %v3977, %v3976
      %v3982 = vsel %vm1150, %v3926, 0
      %v3985 = vsel %vm1150, %v3928, 0
      %3987 = vmatprep.subr.mxu0 0.0
      %3988 = vmatpush1.msra.mxu0 %v3964
      %3989 = vmatprep.subr.mxu0 0.0
      %3990 = vmatpush1.msra.mxu0 %v3978
      %3991 = vmatprep.subr.mxu0 0.0
      %3992 = vmatpush1.msra.mxu0 0.0
      %3993 = vmatprep.subr.mxu0 0.0
      %3994 = vmatpush1.msra.mxu0 0.0
      %3995 = vmatprep.subr.mxu0 0.0
      %3996 = vmatpush1.msra.mxu0 0.0
      %3997 = vmatprep.subr.mxu0 0.0
      %3998 = vmatpush1.msra.mxu0 0.0
      %3999 = vmatprep.subr.mxu0 0.0
      %4000 = vmatpush1.msra.mxu0 0.0
      %4001 = vmatprep.subr.mxu0 0.0
      %4002 = vmatpush1.msra.mxu0 0.0
      %4003 = vmatprep.subr.mxu0 0.0
      %4004 = vmatpush1.msra.mxu0 0.0
      %4005 = vmatprep.subr.mxu0 0.0
      %4006 = vmatpush1.msra.mxu0 0.0
      %4007 = vmatprep.subr.mxu0 0.0
      %4008 = vmatpush1.msra.mxu0 0.0
      %4009 = vmatprep.subr.mxu0 0.0
      %4010 = vmatpush1.msra.mxu0 0.0
      %4011 = vmatprep.subr.mxu0 0.0
      %4012 = vmatpush1.msra.mxu0 0.0
      %4013 = vmatprep.subr.mxu0 0.0
      %4014 = vmatpush1.msra.mxu0 0.0
      %4015 = vmatprep.subr.mxu0 0.0
      %4016 = vmatpush1.msra.mxu0 0.0
      %4017 = vmatprep.subr.mxu0 0.0
      %4018 = vmatpush1.msra.mxu0 0.0
      %4019 = vmatprep.subr.mxu0 0.0
      %4020 = vmatpush1.msra.mxu0 0.0
      %4021 = vmatprep.subr.mxu0 0.0
      %4022 = vmatpush1.msra.mxu0 0.0
      %4023 = vmatprep.subr.mxu0 0.0
      %4024 = vmatpush1.msra.mxu0 0.0
      %4025 = vmatprep.subr.mxu0 0.0
      %4026 = vmatpush1.msra.mxu0 0.0
      %4027 = vmatprep.subr.mxu0 0.0
      %4028 = vmatpush1.msra.mxu0 0.0
      %4029 = vmatprep.subr.mxu0 0.0
      %4030 = vmatpush1.msra.mxu0 0.0
      %4031 = vmatprep.subr.mxu0 0.0
      %4032 = vmatpush1.msra.mxu0 0.0
      %4033 = vmatprep.subr.mxu0 0.0
      %4034 = vmatpush1.msra.mxu0 0.0
      %4035 = vmatprep.subr.mxu0 0.0
      %4036 = vmatpush1.msra.mxu0 0.0
      %4037 = vmatprep.subr.mxu0 0.0
      %4038 = vmatpush1.msra.mxu0 0.0
      %4039 = vmatprep.subr.mxu0 0.0
      %4040 = vmatpush1.msra.mxu0 0.0
      %4041 = vmatprep.subr.mxu0 0.0
      %4042 = vmatpush1.msra.mxu0 0.0
      %4043 = vmatprep.subr.mxu0 0.0
      %4044 = vmatpush1.msra.mxu0 0.0
      %4045 = vmatprep.subr.mxu0 0.0
      %4046 = vmatpush1.msra.mxu0 0.0
      %4047 = vmatprep.subr.mxu0 0.0
      %4048 = vmatpush1.msra.mxu0 0.0
      %4049 = vmatprep.subr.mxu0 0.0
      %4050 = vmatpush1.msra.mxu0 0.0
      %4051 = vmatprep.mubr.f32.mxu0 0.0
      %4052 = vmatmul.mubr.f32.gmra.mrb[0].mxu0 %v3982
      %v4053 = vpop.f32.mrb[0].mxu0
      %v4054 = vadd.f32 0.0, %v4053
      %v4055 = vpop.f32.mrb[0].mxu0
      %4056 = vmatprep.mubr.f32.mxu0 0.0
      %4057 = vmatmul.mubr.f32.gmra.mrb[0].mxu0 %v3985
      %v4058 = vpop.f32.mrb[0].mxu0
      %v4059 = vadd.f32 0.0, %v4058
      %v4060 = vpop.f32.mrb[0].mxu0
      %4061 = vdwg.mxu0
      %v4062 = vrcp.pop %v3931
      %v4063 = vrcp.pop %v3934
      %v4064 = vmul.f32 %v4054, %v4062
      %v4065 = vmul.f32 %v4059, %v4063
      %4068 = vrot.lane.b32.xlu0 %v2220, 8
      %v4069 = vpop.permute.xlu0 %4068
      %4070 = vrot.lane.b32.xlu0 %v2221, 8
      %v4071 = vpop.permute.xlu0 %4070
      %4076 = vrot.lane.b32.xlu0 %v3142, 16
      %v4077 = vpop.permute.xlu0 %4076
      %4078 = vrot.lane.b32.xlu0 %v3143, 16
      %v4079 = vpop.permute.xlu0 %4078
      %4084 = vrot.lane.b32.xlu0 %v4064, 24
      %v4085 = vpop.permute.xlu0 %4084
      %4086 = vrot.lane.b32.xlu0 %v4065, 24
      %v4087 = vpop.permute.xlu0 %4086
      %v4090 = vsel %vm1062, %v1298, %v4069
      %v4091 = vsel %vm1062, %v1299, %v4071
      %v4092 = vsel %vm1150, %v4090, %v4077
      %v4093 = vsel %vm1150, %v4091, %v4079
      %vm4094 = vcmask 195584
      %v4095 = vsel %vm4094, %v4092, %v4085
      %v4096 = vsel %vm4094, %v4093, %v4087
      %vm4097 = vcmask 261120
      %4098 = vst.msk [vmem:[%s201] sm:$0xff] %vm4097, %v4095
      %4099 = vst.msk [vmem:[%s201 + $0x8] sm:$0xff] %vm4097, %v4096
      %p4100 = scmp.lt.s32.totalorder %s18, 1
      %s4101 = scalar_select %p4100, %s18, 1
      %p4102 = scmp.lt.s32.totalorder %s19, 0
      %s4103 = scalar_select %p4102, %s19, 0
      %s4104 = smul.addr %s4101, 2
      %s4105 = sadd.s32 %s4103, %s4104
      %s4106 = smul.addr %s4105, 8
      %s4107 = scalar_lea.vmem %s3, %s4106
      // Predicated region
      $region33: #{mha_forward.4} parent=31 // pred_check
        %p4108 = pneg %p116
      $region34: #{mha_forward.4} parent=31 // pred_check_branch
        %4110 = sbr.rel (%p4108) target = $region36
      $region35: #{mha_forward.4} parent=31 // pred_region
        _
      $region36: #{mha_forward.4} parent=31 // pred_fallthru
        _
    $region32: #{mha_forward.4} parent=5 // pred_fallthru
      _
    %p4111 = scmp.le.s32.totalorder 2, %s9
    // Predicated region
    $region37: #{mha_forward.4} parent=5 // pred_check
      %p4112 = pneg %p4111
    $region38: #{mha_forward.4} parent=5 // pred_check_branch
      %4114 = sbr.rel (%p4112) target = $region40
    $region39: #{mha_forward.4} parent=5 // pred_region
      %s4115 = ssub.s32 %s9, 2
      // Predicated region
      $region41: #{mha_forward.4} parent=39 // pred_check
        %p4116 = pneg %p122
      $region42: #{mha_forward.4} parent=39 // pred_check_branch
        %4118 = sbr.rel (%p4116) target = $region44
      $region43: #{mha_forward.4} parent=39 // pred_region
        %p4119 = scmp.lt.s32.totalorder %s20, 1
        %s4120 = scalar_select %p4119, %s20, 1
        %p4121 = scmp.lt.s32.totalorder %s21, 0
        %s4122 = scalar_select %p4121, %s21, 0
        %s4123 = smul.addr %s4120, 2
        %s4124 = sadd.s32 %s4122, %s4123
        %s4125 = smul.addr %s4124, 8
        %s4126 = scalar_lea.vmem %s3, %s4125
      $region44: #{mha_forward.4} parent=39 // pred_fallthru
        _
    $region40: #{mha_forward.4} parent=5 // pred_fallthru
      _
  $region6: #{mha_forward.4} parent=0 // loop_footer
    %s13 = sadd.s32 1, %s9
  $region7: #{mha_forward.4} parent=0 // loop_footer_branch
    %8 = sbr.rel target = $region3
  $region8: #{mha_forward.4} parent=0 // loop_exit
    _

</llo_original>
